<compile_context>
chip_gen: v6e
topology: v6e:2x2x1
jax: 0.10.0
libtpu: 0.0.40
codegen_flags: <defaults>
</compile_context>

<pallas_src>
import jax
import jax.numpy as jnp
from jax.experimental import pallas as pl
from jax.experimental.pallas import tpu as pltpu

EPS = 1e-5


def _make_kernel(tile_co):
    def conv1x1_bn_kernel(w_ref, x_ref, gb_ref, o_ref):
        # w_ref:  (tile_co, Cin)  f32  -- one tile of the (Cout, Cin) weight
        # x_ref:  (Cin, NHW)      f32  -- full input, resident across the grid
        # gb_ref: (Cout, 2)       f32  -- [:, 0]=gamma, [:, 1]=beta, full-resident
        # o_ref:  (tile_co, NHW)  f32
        # Cast to bf16 at the MXU boundary only (DMA stays f32; no extra HBM pass).
        y = jnp.dot(
            w_ref[...].astype(jnp.bfloat16),
            x_ref[...].astype(jnp.bfloat16),
            preferred_element_type=jnp.float32,
        )

        # BatchNorm2d training-mode stats: per-output-channel (per row) biased
        # mean/var over the N*H*W axis. Two-pass form avoids cancellation.
        mean = jnp.mean(y, axis=-1, keepdims=True)                 # (tile_co, 1)
        centered = y - mean
        var = jnp.mean(centered * centered, axis=-1, keepdims=True)
        inv_std = jax.lax.rsqrt(jnp.maximum(var, 0.0) + EPS)

        # Slice this tile's gamma/beta rows out of the resident (Cout, 2) block.
        j = pl.program_id(0)
        off = pl.multiple_of(j * tile_co, tile_co)
        gb = gb_ref[pl.ds(off, tile_co), :]                        # (tile_co, 2)
        gamma = gb[:, 0:1]
        beta = gb[:, 1:2]

        o_ref[...] = centered * (gamma * inv_std) + beta

    return conv1x1_bn_kernel


def conv_bn_forward(x_nchw, w_oihw, gamma, beta, *, tile_co=256):
    N, Cin, H, W = x_nchw.shape
    Cout = w_oihw.shape[0]
    nhw = N * H * W

    # X(Cin, NHW): for N == 1 this is a pure reshape of NCHW (no transpose).
    if N == 1:
        x2d = x_nchw.reshape(Cin, nhw)
    else:
        x2d = jnp.transpose(x_nchw, (1, 0, 2, 3)).reshape(Cin, nhw)
    x2d = x2d.astype(jnp.float32)
    # W(Cout, Cin): pure reshape of the (Cout, Cin, 1, 1) conv weight. Stays f32;
    # cast to bf16 happens inside the kernel.
    w2d = w_oihw.reshape(Cout, Cin).astype(jnp.float32)
    # gamma/beta packed into one tiny (Cout, 2) array, fetched once.
    gb = jnp.stack(
        [gamma.astype(jnp.float32), beta.astype(jnp.float32)], axis=-1
    )  # (Cout, 2)

    tile_co = min(tile_co, Cout)
    if Cout % tile_co != 0:
        tile_co = Cout  # fall back to a single tile for odd channel counts
    grid = (Cout // tile_co,)

    cost = pl.CostEstimate(
        flops=2 * Cout * Cin * nhw,
        transcendentals=Cout,
        bytes_accessed=(Cin * nhw * 4) + (Cout * Cin * 4)
        + (Cout * 2 * 4) + (Cout * nhw * 4),
    )

    out2d = pl.pallas_call(
        _make_kernel(tile_co),
        out_shape=jax.ShapeDtypeStruct((Cout, nhw), jnp.float32),
        grid=grid,
        in_specs=[
            pl.BlockSpec((tile_co, Cin), lambda j: (j, 0)),  # weight tile (pipelined)
            pl.BlockSpec((Cin, nhw), lambda j: (0, 0)),      # full X, fetched once
            pl.BlockSpec((Cout, 2), lambda j: (0, 0)),       # gamma/beta, fetched once
        ],
        out_specs=pl.BlockSpec((tile_co, nhw), lambda j: (j, 0)),
        compiler_params=pltpu.CompilerParams(
            dimension_semantics=("parallel",),
        ),
        cost_estimate=cost,
    )(w2d, x2d, gb)

    # (Cout, N*H*W) -> (N, Cout, H, W). For N == 1 this is a pure reshape.
    if N == 1:
        return out2d.reshape(1, Cout, H, W)
    return jnp.transpose(out2d.reshape(Cout, N, H, W), (1, 0, 2, 3))


def reference(x_nchw, w_oihw, gamma, beta):
    # Pure-JAX reference: 1x1 conv (no bias) + training-mode BatchNorm2d.
    # Matmul operands are rounded to bf16 exactly like the kernel (f32 accumulation),
    # so the comparison isolates kernel correctness from the deliberate bf16 matmul.
    N, Cin, H, W = x_nchw.shape
    Cout = w_oihw.shape[0]
    x2d = jnp.transpose(x_nchw, (0, 2, 3, 1)).reshape(-1, Cin).astype(jnp.bfloat16)
    w2d = w_oihw.reshape(Cout, Cin).astype(jnp.bfloat16)
    y2d = jnp.dot(x2d, w2d.T, preferred_element_type=jnp.float32)
    y = jnp.transpose(y2d.reshape(N, H, W, Cout), (0, 3, 1, 2))
    mean = jnp.mean(y, axis=(0, 2, 3), keepdims=True)
    var = jnp.mean((y - mean) ** 2, axis=(0, 2, 3), keepdims=True)
    return (y - mean) * jax.lax.rsqrt(var + EPS) * gamma.reshape(1, -1, 1, 1) \
        + beta.reshape(1, -1, 1, 1)


if __name__ == "__main__":
    key = jax.random.PRNGKey(0)
    k_x, k_w, k_g, k_b = jax.random.split(key, 4)

    # Shapes straight from the PyTorch module: Conv2d(2048 -> 512, 1x1), input 1x2048x7x7.
    N, Cin, Cout, H, W = 1, 2048, 512, 7, 7
    x = jax.random.normal(k_x, (N, Cin, H, W), dtype=jnp.float32)
    w = jax.random.normal(k_w, (Cout, Cin, 1, 1), dtype=jnp.float32) * 0.02
    gamma = 1.0 + 0.1 * jax.random.normal(k_g, (Cout,), dtype=jnp.float32)
    beta = 0.1 * jax.random.normal(k_b, (Cout,), dtype=jnp.float32)

    # TODO(synk): BatchNorm2d running_mean/running_var buffer updates (momentum=0.1) are a
    # training-time side effect not reflected in the returned tensor, so they are not emitted.
    out = conv_bn_forward(x, w, gamma, beta)
    out = jax.block_until_ready(out)

    ref = jax.block_until_ready(reference(x, w, gamma, beta))
    assert out.shape == (N, Cout, H, W)
    assert jnp.allclose(out, ref, rtol=1e-3, atol=1e-3)

    print("KERNEL_OK")
</pallas_src>

<mosaic_0001>
module attributes {stable_mosaic.version = 11 : i64} {
  func.func @conv1x1_bn_kernel(%arg0: i32, %arg1: memref<256x2048xf32, #tpu.memory_space<vmem>>, %arg2: memref<2048x49xf32, #tpu.memory_space<vmem>>, %arg3: memref<512x2xf32, #tpu.memory_space<vmem>>, %arg4: memref<256x49xf32, #tpu.memory_space<vmem>>) attributes {dimension_semantics = [#tpu.dimension_semantics<parallel>], iteration_bounds = array<i64: 2>, scalar_prefetch = 0 : i64, scratch_operands = 0 : i64, tpu.core_type = #tpu.core_type<tc>, window_params = [{transform_indices = @transform_0, window_bounds = array<i64: 256, 2048>}, {pipeline_mode = #tpu.pipeline_mode<synchronous>, transform_indices = @transform_1, window_bounds = array<i64: 2048, 49>}, {pipeline_mode = #tpu.pipeline_mode<synchronous>, transform_indices = @transform_2, window_bounds = array<i64: 512, 2>}, {transform_indices = @transform_3, window_bounds = array<i64: 256, 49>}]} {
    %c0 = arith.constant 0 : index
    %c0_0 = arith.constant 0 : index
    %0 = vector.load %arg1[%c0, %c0_0] : memref<256x2048xf32, #tpu.memory_space<vmem>>, vector<256x2048xf32>
    %1 = arith.truncf %0 : vector<256x2048xf32> to vector<256x2048xbf16>
    %c0_1 = arith.constant 0 : index
    %c0_2 = arith.constant 0 : index
    %2 = vector.load %arg2[%c0_1, %c0_2] : memref<2048x49xf32, #tpu.memory_space<vmem>>, vector<2048x49xf32>
    %3 = arith.truncf %2 : vector<2048x49xf32> to vector<2048x49xbf16>
    %cst = arith.constant dense<0.000000e+00> : vector<256x49xf32>
    %4 = tpu.matmul %1, %3, %cst {dimension_numbers = #tpu.dot_dimension_numbers<[1], [0], [0], [1], [0, 0, 1, 1], [], []>} : vector<256x2048xbf16>, vector<2048x49xbf16>, vector<256x49xf32> -> vector<256x49xf32>
    %cst_3 = arith.constant dense<0.000000e+00> : vector<256xf32>
    %5 = vector.multi_reduction <add>, %4, %cst_3 [1] : vector<256x49xf32> to vector<256xf32>
    %6 = vector.shape_cast %5 : vector<256xf32> to vector<256x1xf32>
    %cst_4 = arith.constant 4.900000e+01 : f32
    %7 = vector.broadcast %cst_4 : f32 to vector<256x1xf32>
    %8 = arith.divf %6, %7 : vector<256x1xf32>
    %9 = vector.broadcast %8 : vector<256x1xf32> to vector<256x49xf32>
    %10 = arith.subf %4, %9 : vector<256x49xf32>
    %11 = arith.mulf %10, %10 : vector<256x49xf32>
    %cst_5 = arith.constant dense<0.000000e+00> : vector<256xf32>
    %12 = vector.multi_reduction <add>, %11, %cst_5 [1] : vector<256x49xf32> to vector<256xf32>
    %13 = vector.shape_cast %12 : vector<256xf32> to vector<256x1xf32>
    %cst_6 = arith.constant 4.900000e+01 : f32
    %14 = vector.broadcast %cst_6 : f32 to vector<256x1xf32>
    %15 = arith.divf %13, %14 : vector<256x1xf32>
    %cst_7 = arith.constant 0.000000e+00 : f32
    %16 = vector.broadcast %cst_7 : f32 to vector<256x1xf32>
    %17 = arith.maximumf %15, %16 : vector<256x1xf32>
    %cst_8 = arith.constant 9.99999974E-6 : f32
    %18 = vector.broadcast %cst_8 : f32 to vector<256x1xf32>
    %19 = arith.addf %17, %18 : vector<256x1xf32>
    %20 = math.rsqrt %19 : vector<256x1xf32>
    %c256_i32 = arith.constant 256 : i32
    %21 = arith.muli %arg0, %c256_i32 : i32
    %22 = tpu.assume_multiple %21, 256 : i32
    %23 = arith.index_cast %22 : i32 to index
    %c0_9 = arith.constant 0 : index
    %24 = vector.load %arg3[%23, %c0_9] : memref<512x2xf32, #tpu.memory_space<vmem>>, vector<256x2xf32>
    %25 = vector.extract_strided_slice %24 {offsets = [0, 0], sizes = [256, 1], strides = [1, 1]} : vector<256x2xf32> to vector<256x1xf32>
    %26 = vector.extract_strided_slice %24 {offsets = [0, 1], sizes = [256, 1], strides = [1, 1]} : vector<256x2xf32> to vector<256x1xf32>
    %27 = arith.mulf %25, %20 : vector<256x1xf32>
    %28 = vector.broadcast %27 : vector<256x1xf32> to vector<256x49xf32>
    %29 = arith.mulf %10, %28 : vector<256x49xf32>
    %30 = vector.broadcast %26 : vector<256x1xf32> to vector<256x49xf32>
    %31 = arith.addf %29, %30 : vector<256x49xf32>
    %c0_10 = arith.constant 0 : index
    %c0_11 = arith.constant 0 : index
    %32 = vector.load %arg4[%c0_10, %c0_11] : memref<256x49xf32, #tpu.memory_space<vmem>>, vector<256x49xf32>
    tpu.vector_store %arg4[%c0_10, %c0_11], %31 {strides = array<i32>} : memref<256x49xf32, #tpu.memory_space<vmem>>, vector<256x49xf32>,
    return
  }
  func.func @transform_0(%arg0: i32) -> (i32, i32) {
    %c0_i32 = arith.constant 0 : i32
    %c0_i32_0 = arith.constant 0 : i32
    return %arg0, %c0_i32 : i32, i32
  }
  func.func @transform_1(%arg0: i32) -> (i32, i32) {
    %c0_i32 = arith.constant 0 : i32
    %c0_i32_0 = arith.constant 0 : i32
    %c0_i32_1 = arith.constant 0 : i32
    return %c0_i32, %c0_i32_0 : i32, i32
  }
  func.func @transform_2(%arg0: i32) -> (i32, i32) {
    %c0_i32 = arith.constant 0 : i32
    %c0_i32_0 = arith.constant 0 : i32
    %c0_i32_1 = arith.constant 0 : i32
    return %c0_i32, %c0_i32_0 : i32, i32
  }
  func.func @transform_3(%arg0: i32) -> (i32, i32) {
    %c0_i32 = arith.constant 0 : i32
    %c0_i32_0 = arith.constant 0 : i32
    return %arg0, %c0_i32 : i32, i32
  }
}

</mosaic_0001>

<llo_original>
// kernel: tpu_custom_call.1
$region0: #{tpu_custom_call.1}
  #allocation0 [shape = 'u32[]', space=smem, size = 0x4, offset = 0x4, fixed_abs, tag = 'smem constant byte address 0x4 - core index']
  #allocation1 [shape = 'u32[144,128]{1,0:T(1,128)}', space=vmem, size = 0x12000, scoped, tag = 'internal scratch']
  %s0 = inlined_call_operand.hbm [shape: f32[512,2048], index: 0, kind: input, shape index: {}]
  %s1 = inlined_call_operand.vmem [shape: f32[2048,49], index: 1, kind: input, shape index: {}]
  %s2 = inlined_call_operand.vmem [shape: f32[512,2], index: 2, kind: input, shape index: {}]
  %s3 = inlined_call_operand.vmem [shape: f32[512,49], index: 3, kind: output, shape index: {}]
  %s4 = sld [smem:[#allocation0]]
  $region49: #{tpu_custom_call.1} parent=0
    _
  %s6 = ssub.s32 1, %s4
  %s7 = scalar_select 0, %s6, %s4
  $region1: #{tpu_custom_call.1} parent=0
    #allocation2 [shape = 'u8[4194304]{0}', space=vmem, size = 0x400000, scoped, tag = 'input window, operand 0']
    #allocation3 [shape = 's32[2]{0}', space=sflag, size = 0x8, scoped, tag = 'scoped memory for tpu_custom_call.1']
    %8 = vsyncpa [#allocation3], 0
    %s9 = scalar_lea.sflag [#allocation3], 1
    %10 = vsyncpa %s9, 0
    loop: start=0, step=1, limit=4
    $region2: #{tpu_custom_call.1} parent=1 // loop_pre_header
      _
    $region3: #{tpu_custom_call.1} parent=1 // loop_header
      %s12 = sphi 0, %s16
      %p13 = scmp.ge.s32.totalorder %s12, 4
      %s22 = sphi 0, %s24
      %s25 = sphi 0, %s22
      %s26 = sphi 0, %s25
      %s42 = sphi 0, %s26
      %s46 = sphi 0, %s46
      %s48 = sphi 0, %s46
      %s49 = sphi 0, %s48
      %s63 = sphi 0, %s49
      %s67 = sphi 0, %s67
      %s69 = sphi 0, %s67
      %s70 = sphi 0, %s69
      %s84 = sphi 0, %s70
      %s90 = sphi 0, %s92
      %s93 = sphi 0, %s90
      %s94 = sphi 0, %s93
      %s110 = sphi 0, %s94
    $region4: #{tpu_custom_call.1} parent=1 // loop_header_branch
      %15 = sbr.rel (%p13) target = $region8
    $region5: #{tpu_custom_call.1} parent=1 // loop_body
      %s17 = ssub.s32 %s12, 1
      %s18 = ssub.s32 %s12, 2
      %s19 = sadd.s32 %s12, 1
      %s20 = ssub.s32 %s12, %s19
      %p21 = scmp.eq.s32.totalorder %s20, 0
      %s23 = sadd.s32 %s22, 1
      %s24 = scalar_select %p21, %s22, %s23
      %p27 = pneg %p21
      %p28 = scmp.eq.s32.totalorder %s12, 1
      %p29 = por %p27, %p28
      %p30 = scmp.ne.s32.totalorder %s22, %s25
      %p31 = scmp.eq.s32.totalorder %s12, 0
      %p32 = por %p30, %p31
      %p33 = scmp.ne.s32.totalorder %s22, %s25
      %p34 = scmp.eq.s32.totalorder %s17, 1
      %p35 = por %p33, %p34
      %p36 = scmp.ne.s32.totalorder %s25, %s26
      %p37 = scmp.eq.s32.totalorder %s17, 0
      %p38 = por %p36, %p37
      %p39 = scmp.ne.s32.totalorder %s25, %s26
      %p40 = scmp.eq.s32.totalorder %s18, 1
      %p41 = por %p39, %p40
      %p43 = scmp.ne.s32.totalorder %s26, %s42
      %p44 = scmp.eq.s32.totalorder %s18, 0
      %p45 = por %p43, %p44
      %s47 = sadd.s32 %s46, 1
      %p50 = scmp.eq.s32.totalorder %s12, 1
      %p51 = scmp.ne.s32.totalorder %s46, %s48
      %p52 = scmp.eq.s32.totalorder %s12, 0
      %p53 = por %p51, %p52
      %p54 = scmp.ne.s32.totalorder %s46, %s48
      %p55 = scmp.eq.s32.totalorder %s17, 1
      %p56 = por %p54, %p55
      %p57 = scmp.ne.s32.totalorder %s48, %s49
      %p58 = scmp.eq.s32.totalorder %s17, 0
      %p59 = por %p57, %p58
      %p60 = scmp.ne.s32.totalorder %s48, %s49
      %p61 = scmp.eq.s32.totalorder %s18, 1
      %p62 = por %p60, %p61
      %p64 = scmp.ne.s32.totalorder %s49, %s63
      %p65 = scmp.eq.s32.totalorder %s18, 0
      %p66 = por %p64, %p65
      %s68 = sadd.s32 %s67, 1
      %p71 = scmp.eq.s32.totalorder %s12, 1
      %p72 = scmp.ne.s32.totalorder %s67, %s69
      %p73 = scmp.eq.s32.totalorder %s12, 0
      %p74 = por %p72, %p73
      %p75 = scmp.ne.s32.totalorder %s67, %s69
      %p76 = scmp.eq.s32.totalorder %s17, 1
      %p77 = por %p75, %p76
      %p78 = scmp.ne.s32.totalorder %s69, %s70
      %p79 = scmp.eq.s32.totalorder %s17, 0
      %p80 = por %p78, %p79
      %p81 = scmp.ne.s32.totalorder %s69, %s70
      %p82 = scmp.eq.s32.totalorder %s18, 1
      %p83 = por %p81, %p82
      %p85 = scmp.ne.s32.totalorder %s70, %s84
      %p86 = scmp.eq.s32.totalorder %s18, 0
      %p87 = por %p85, %p86
      %s88 = ssub.s32 %s12, %s19
      %p89 = scmp.eq.s32.totalorder %s88, 0
      %s91 = sadd.s32 %s90, 1
      %s92 = scalar_select %p89, %s90, %s91
      %p95 = pneg %p89
      %p96 = scmp.eq.s32.totalorder %s12, 1
      %p97 = por %p95, %p96
      %p98 = scmp.ne.s32.totalorder %s90, %s93
      %p99 = scmp.eq.s32.totalorder %s12, 0
      %p100 = por %p98, %p99
      %p101 = scmp.ne.s32.totalorder %s90, %s93
      %p102 = scmp.eq.s32.totalorder %s17, 1
      %p103 = por %p101, %p102
      %p104 = scmp.ne.s32.totalorder %s93, %s94
      %p105 = scmp.eq.s32.totalorder %s17, 0
      %p106 = por %p104, %p105
      %p107 = scmp.ne.s32.totalorder %s93, %s94
      %p108 = scmp.eq.s32.totalorder %s18, 1
      %p109 = por %p107, %p108
      %p111 = scmp.ne.s32.totalorder %s94, %s110
      %p112 = scmp.eq.s32.totalorder %s18, 0
      %p113 = por %p111, %p112
      %p114 = scmp.le.s32.totalorder 1, %s12
      %p115 = scmp.lt.s32.totalorder %s12, 3
      %p116 = pnand %p114, %p115
      %p117 = pneg %p116
      // Predicated region
      $region9: #{tpu_custom_call.1} parent=5 // pred_check
        _
      $region10: #{tpu_custom_call.1} parent=5 // pred_check_branch
        %119 = sbr.rel (%p116) target = $region12
      $region11: #{tpu_custom_call.1} parent=5 // pred_region
        %s120 = ssub.s32 %s12, 1
        // Predicated region
        $region13: #{tpu_custom_call.1} parent=11 // pred_check
          %p121 = pneg %p59
        $region14: #{tpu_custom_call.1} parent=11 // pred_check_branch
          %123 = sbr.rel (%p121) target = $region16
        $region15: #{tpu_custom_call.1} parent=11 // pred_region
          _
        $region16: #{tpu_custom_call.1} parent=11 // pred_fallthru
          _
        // Predicated region
        $region17: #{tpu_custom_call.1} parent=11 // pred_check
          %p124 = pneg %p80
        $region18: #{tpu_custom_call.1} parent=11 // pred_check_branch
          %126 = sbr.rel (%p124) target = $region20
        $region19: #{tpu_custom_call.1} parent=11 // pred_region
          _
        $region20: #{tpu_custom_call.1} parent=11 // pred_fallthru
          _
      $region12: #{tpu_custom_call.1} parent=5 // pred_fallthru
        _
      %p127 = scmp.lt.s32.totalorder %s12, 2
      // Predicated region
      $region21: #{tpu_custom_call.1} parent=5 // pred_check
        %p128 = pneg %p127
      $region22: #{tpu_custom_call.1} parent=5 // pred_check_branch
        %130 = sbr.rel (%p128) target = $region24
      $region23: #{tpu_custom_call.1} parent=5 // pred_region
        // Predicated region
        $region25: #{tpu_custom_call.1} parent=23 // pred_check
          %p131 = pneg %p32
        $region26: #{tpu_custom_call.1} parent=23 // pred_check_branch
          %133 = sbr.rel (%p131) target = $region28
        $region27: #{tpu_custom_call.1} parent=23 // pred_region
          %s134 = sand.u32 %s22, 1
          %s135 = scalar_lea.sflag [#allocation3], %s134
          %s136 = sand.u32 %s22, 1
          %s137 = smul.addr %s136, 4096
          %s138 = scalar_lea.vmem [#allocation2], %s137
          %s139 = smul.u32 32, %s12
          %s141 = ssub.s32 65536, 65536
          %142 = vsyncadd %s135, %s141
          %s143 = smul.addr %s139, 16
          %s144 = smul.addr %s143, 128
          %s145 = scalar_lea.hbm %s0, %s144
          %s146 = sshll.u32 %s138, 4
          %s147 = int_to_ptr.vmem [resolvable:$true] %s146
          %152 = dma.hbm_to_vmem [thread:$0]  %s145, 65536, %s147, %s135, 2048, 2048, 128
        $region28: #{tpu_custom_call.1} parent=23 // pred_fallthru
          _
      $region24: #{tpu_custom_call.1} parent=5 // pred_fallthru
        _
      %p153 = scmp.le.s32.totalorder 1, %s12
      %p154 = scmp.lt.s32.totalorder %s12, 3
      %p155 = pnand %p153, %p154
      %p156 = pneg %p155
      // Predicated region
      $region29: #{tpu_custom_call.1} parent=5 // pred_check
        _
      $region30: #{tpu_custom_call.1} parent=5 // pred_check_branch
        %158 = sbr.rel (%p155) target = $region32
      $region31: #{tpu_custom_call.1} parent=5 // pred_region
        %s159 = ssub.s32 %s12, 1
        %s160 = sand.u32 %s25, 1
        %s161 = scalar_lea.sflag [#allocation3], %s160
        %s162 = sand.u32 %s25, 1
        %s163 = smul.addr %s162, 4096
        %s164 = scalar_lea.vmem [#allocation2], %s163
        // Predicated region
        $region33: #{tpu_custom_call.1} parent=31 // pred_check
          %p165 = pneg %p38
        $region34: #{tpu_custom_call.1} parent=31 // pred_check_branch
          %167 = sbr.rel (%p165) target = $region36
        $region35: #{tpu_custom_call.1} parent=31 // pred_region
          %168 = dma.done %s161, 65536
        $region36: #{tpu_custom_call.1} parent=31 // pred_fallthru
          _
        %s169 = sand.u32 %s25, 1
        %s170 = scalar_lea.sflag [#allocation3], %s169
        %s171 = sand.u32 %s25, 1
        %s172 = smul.addr %s171, 4096
        %s173 = scalar_lea.vmem [#allocation2], %s172
        %p174 = pneg %p38
        %p175 = pneg %p35
        %p176 = pneg %p59
        %p177 = pneg %p56
        %p178 = pneg %p80
        %p179 = pneg %p77
        %p180 = pneg %p106
        %p181 = pneg %p103
        %s182 = smul.u32 32, %s17
        %p183 = scmp.lt.s32.totalorder %s182, 63
        %s184 = scalar_select %p183, %s182, 63
        %s185 = smul.addr %s184, 8
        %s186 = scalar_lea.vmem %s3, %s185
        %s187 = smul.u32 32, %s17
        %s188 = smul.u32 32, %s17
        %p189 = scmp.lt.s32.totalorder %s188, 63
        %s190 = scalar_select %p189, %s188, 63
        %s191 = smul.addr %s190, 8
        %s192 = scalar_lea.vmem %s3, %s191
        %s193 = smul.u32 32, %s17
        %v195 = vld [vmem:[%s164] sm:$0xff]
        %v196 = vld [vmem:[%s164 + $0x8] sm:$0xff]
        %v197 = vld [vmem:[%s164 + $0x10] sm:$0xff]
        %v198 = vld [vmem:[%s164 + $0x18] sm:$0xff]
        %v199 = vld [vmem:[%s164 + $0x20] sm:$0xff]
        %v200 = vld [vmem:[%s164 + $0x28] sm:$0xff]
        %v201 = vld [vmem:[%s164 + $0x30] sm:$0xff]
        %v202 = vld [vmem:[%s164 + $0x38] sm:$0xff]
        %v203 = vld [vmem:[%s164 + $0x40] sm:$0xff]
        %v204 = vld [vmem:[%s164 + $0x48] sm:$0xff]
        %v205 = vld [vmem:[%s164 + $0x50] sm:$0xff]
        %v206 = vld [vmem:[%s164 + $0x58] sm:$0xff]
        %v207 = vld [vmem:[%s164 + $0x60] sm:$0xff]
        %v208 = vld [vmem:[%s164 + $0x68] sm:$0xff]
        %v209 = vld [vmem:[%s164 + $0x70] sm:$0xff]
        %v210 = vld [vmem:[%s164 + $0x78] sm:$0xff]
        %v211 = vld [vmem:[%s164 + $0x80] sm:$0xff]
        %v212 = vld [vmem:[%s164 + $0x88] sm:$0xff]
        %v213 = vld [vmem:[%s164 + $0x90] sm:$0xff]
        %v214 = vld [vmem:[%s164 + $0x98] sm:$0xff]
        %v215 = vld [vmem:[%s164 + $0xa0] sm:$0xff]
        %v216 = vld [vmem:[%s164 + $0xa8] sm:$0xff]
        %v217 = vld [vmem:[%s164 + $0xb0] sm:$0xff]
        %v218 = vld [vmem:[%s164 + $0xb8] sm:$0xff]
        %v219 = vld [vmem:[%s164 + $0xc0] sm:$0xff]
        %v220 = vld [vmem:[%s164 + $0xc8] sm:$0xff]
        %v221 = vld [vmem:[%s164 + $0xd0] sm:$0xff]
        %v222 = vld [vmem:[%s164 + $0xd8] sm:$0xff]
        %v223 = vld [vmem:[%s164 + $0xe0] sm:$0xff]
        %v224 = vld [vmem:[%s164 + $0xe8] sm:$0xff]
        %v225 = vld [vmem:[%s164 + $0xf0] sm:$0xff]
        %v226 = vld [vmem:[%s164 + $0xf8] sm:$0xff]
        %v227 = vld [vmem:[%s164 + $0x100] sm:$0xff]
        %v228 = vld [vmem:[%s164 + $0x108] sm:$0xff]
        %v229 = vld [vmem:[%s164 + $0x110] sm:$0xff]
        %v230 = vld [vmem:[%s164 + $0x118] sm:$0xff]
        %v231 = vld [vmem:[%s164 + $0x120] sm:$0xff]
        %v232 = vld [vmem:[%s164 + $0x128] sm:$0xff]
        %v233 = vld [vmem:[%s164 + $0x130] sm:$0xff]
        %v234 = vld [vmem:[%s164 + $0x138] sm:$0xff]
        %v235 = vld [vmem:[%s164 + $0x140] sm:$0xff]
        %v236 = vld [vmem:[%s164 + $0x148] sm:$0xff]
        %v237 = vld [vmem:[%s164 + $0x150] sm:$0xff]
        %v238 = vld [vmem:[%s164 + $0x158] sm:$0xff]
        %v239 = vld [vmem:[%s164 + $0x160] sm:$0xff]
        %v240 = vld [vmem:[%s164 + $0x168] sm:$0xff]
        %v241 = vld [vmem:[%s164 + $0x170] sm:$0xff]
        %v242 = vld [vmem:[%s164 + $0x178] sm:$0xff]
        %v243 = vld [vmem:[%s164 + $0x180] sm:$0xff]
        %v244 = vld [vmem:[%s164 + $0x188] sm:$0xff]
        %v245 = vld [vmem:[%s164 + $0x190] sm:$0xff]
        %v246 = vld [vmem:[%s164 + $0x198] sm:$0xff]
        %v247 = vld [vmem:[%s164 + $0x1a0] sm:$0xff]
        %v248 = vld [vmem:[%s164 + $0x1a8] sm:$0xff]
        %v249 = vld [vmem:[%s164 + $0x1b0] sm:$0xff]
        %v250 = vld [vmem:[%s164 + $0x1b8] sm:$0xff]
        %v251 = vld [vmem:[%s164 + $0x1c0] sm:$0xff]
        %v252 = vld [vmem:[%s164 + $0x1c8] sm:$0xff]
        %v253 = vld [vmem:[%s164 + $0x1d0] sm:$0xff]
        %v254 = vld [vmem:[%s164 + $0x1d8] sm:$0xff]
        %v255 = vld [vmem:[%s164 + $0x1e0] sm:$0xff]
        %v256 = vld [vmem:[%s164 + $0x1e8] sm:$0xff]
        %v257 = vld [vmem:[%s164 + $0x1f0] sm:$0xff]
        %v258 = vld [vmem:[%s164 + $0x1f8] sm:$0xff]
        %v259 = vld [vmem:[%s164 + $0x200] sm:$0xff]
        %v260 = vld [vmem:[%s164 + $0x208] sm:$0xff]
        %v261 = vld [vmem:[%s164 + $0x210] sm:$0xff]
        %v262 = vld [vmem:[%s164 + $0x218] sm:$0xff]
        %v263 = vld [vmem:[%s164 + $0x220] sm:$0xff]
        %v264 = vld [vmem:[%s164 + $0x228] sm:$0xff]
        %v265 = vld [vmem:[%s164 + $0x230] sm:$0xff]
        %v266 = vld [vmem:[%s164 + $0x238] sm:$0xff]
        %v267 = vld [vmem:[%s164 + $0x240] sm:$0xff]
        %v268 = vld [vmem:[%s164 + $0x248] sm:$0xff]
        %v269 = vld [vmem:[%s164 + $0x250] sm:$0xff]
        %v270 = vld [vmem:[%s164 + $0x258] sm:$0xff]
        %v271 = vld [vmem:[%s164 + $0x260] sm:$0xff]
        %v272 = vld [vmem:[%s164 + $0x268] sm:$0xff]
        %v273 = vld [vmem:[%s164 + $0x270] sm:$0xff]
        %v274 = vld [vmem:[%s164 + $0x278] sm:$0xff]
        %v275 = vld [vmem:[%s164 + $0x280] sm:$0xff]
        %v276 = vld [vmem:[%s164 + $0x288] sm:$0xff]
        %v277 = vld [vmem:[%s164 + $0x290] sm:$0xff]
        %v278 = vld [vmem:[%s164 + $0x298] sm:$0xff]
        %v279 = vld [vmem:[%s164 + $0x2a0] sm:$0xff]
        %v280 = vld [vmem:[%s164 + $0x2a8] sm:$0xff]
        %v281 = vld [vmem:[%s164 + $0x2b0] sm:$0xff]
        %v282 = vld [vmem:[%s164 + $0x2b8] sm:$0xff]
        %v283 = vld [vmem:[%s164 + $0x2c0] sm:$0xff]
        %v284 = vld [vmem:[%s164 + $0x2c8] sm:$0xff]
        %v285 = vld [vmem:[%s164 + $0x2d0] sm:$0xff]
        %v286 = vld [vmem:[%s164 + $0x2d8] sm:$0xff]
        %v287 = vld [vmem:[%s164 + $0x2e0] sm:$0xff]
        %v288 = vld [vmem:[%s164 + $0x2e8] sm:$0xff]
        %v289 = vld [vmem:[%s164 + $0x2f0] sm:$0xff]
        %v290 = vld [vmem:[%s164 + $0x2f8] sm:$0xff]
        %v291 = vld [vmem:[%s164 + $0x300] sm:$0xff]
        %v292 = vld [vmem:[%s164 + $0x308] sm:$0xff]
        %v293 = vld [vmem:[%s164 + $0x310] sm:$0xff]
        %v294 = vld [vmem:[%s164 + $0x318] sm:$0xff]
        %v295 = vld [vmem:[%s164 + $0x320] sm:$0xff]
        %v296 = vld [vmem:[%s164 + $0x328] sm:$0xff]
        %v297 = vld [vmem:[%s164 + $0x330] sm:$0xff]
        %v298 = vld [vmem:[%s164 + $0x338] sm:$0xff]
        %v299 = vld [vmem:[%s164 + $0x340] sm:$0xff]
        %v300 = vld [vmem:[%s164 + $0x348] sm:$0xff]
        %v301 = vld [vmem:[%s164 + $0x350] sm:$0xff]
        %v302 = vld [vmem:[%s164 + $0x358] sm:$0xff]
        %v303 = vld [vmem:[%s164 + $0x360] sm:$0xff]
        %v304 = vld [vmem:[%s164 + $0x368] sm:$0xff]
        %v305 = vld [vmem:[%s164 + $0x370] sm:$0xff]
        %v306 = vld [vmem:[%s164 + $0x378] sm:$0xff]
        %v307 = vld [vmem:[%s164 + $0x380] sm:$0xff]
        %v308 = vld [vmem:[%s164 + $0x388] sm:$0xff]
        %v309 = vld [vmem:[%s164 + $0x390] sm:$0xff]
        %v310 = vld [vmem:[%s164 + $0x398] sm:$0xff]
        %v311 = vld [vmem:[%s164 + $0x3a0] sm:$0xff]
        %v312 = vld [vmem:[%s164 + $0x3a8] sm:$0xff]
        %v313 = vld [vmem:[%s164 + $0x3b0] sm:$0xff]
        %v314 = vld [vmem:[%s164 + $0x3b8] sm:$0xff]
        %v315 = vld [vmem:[%s164 + $0x3c0] sm:$0xff]
        %v316 = vld [vmem:[%s164 + $0x3c8] sm:$0xff]
        %v317 = vld [vmem:[%s164 + $0x3d0] sm:$0xff]
        %v318 = vld [vmem:[%s164 + $0x3d8] sm:$0xff]
        %v319 = vld [vmem:[%s164 + $0x3e0] sm:$0xff]
        %v320 = vld [vmem:[%s164 + $0x3e8] sm:$0xff]
        %v321 = vld [vmem:[%s164 + $0x3f0] sm:$0xff]
        %v322 = vld [vmem:[%s164 + $0x3f8] sm:$0xff]
        %v323 = vld [vmem:[%s164 + $0x400] sm:$0xff]
        %v324 = vld [vmem:[%s164 + $0x408] sm:$0xff]
        %v325 = vld [vmem:[%s164 + $0x410] sm:$0xff]
        %v326 = vld [vmem:[%s164 + $0x418] sm:$0xff]
        %v327 = vld [vmem:[%s164 + $0x420] sm:$0xff]
        %v328 = vld [vmem:[%s164 + $0x428] sm:$0xff]
        %v329 = vld [vmem:[%s164 + $0x430] sm:$0xff]
        %v330 = vld [vmem:[%s164 + $0x438] sm:$0xff]
        %v331 = vld [vmem:[%s164 + $0x440] sm:$0xff]
        %v332 = vld [vmem:[%s164 + $0x448] sm:$0xff]
        %v333 = vld [vmem:[%s164 + $0x450] sm:$0xff]
        %v334 = vld [vmem:[%s164 + $0x458] sm:$0xff]
        %v335 = vld [vmem:[%s164 + $0x460] sm:$0xff]
        %v336 = vld [vmem:[%s164 + $0x468] sm:$0xff]
        %v337 = vld [vmem:[%s164 + $0x470] sm:$0xff]
        %v338 = vld [vmem:[%s164 + $0x478] sm:$0xff]
        %v339 = vld [vmem:[%s164 + $0x480] sm:$0xff]
        %v340 = vld [vmem:[%s164 + $0x488] sm:$0xff]
        %v341 = vld [vmem:[%s164 + $0x490] sm:$0xff]
        %v342 = vld [vmem:[%s164 + $0x498] sm:$0xff]
        %v343 = vld [vmem:[%s164 + $0x4a0] sm:$0xff]
        %v344 = vld [vmem:[%s164 + $0x4a8] sm:$0xff]
        %v345 = vld [vmem:[%s164 + $0x4b0] sm:$0xff]
        %v346 = vld [vmem:[%s164 + $0x4b8] sm:$0xff]
        %v347 = vld [vmem:[%s164 + $0x4c0] sm:$0xff]
        %v348 = vld [vmem:[%s164 + $0x4c8] sm:$0xff]
        %v349 = vld [vmem:[%s164 + $0x4d0] sm:$0xff]
        %v350 = vld [vmem:[%s164 + $0x4d8] sm:$0xff]
        %v351 = vld [vmem:[%s164 + $0x4e0] sm:$0xff]
        %v352 = vld [vmem:[%s164 + $0x4e8] sm:$0xff]
        %v353 = vld [vmem:[%s164 + $0x4f0] sm:$0xff]
        %v354 = vld [vmem:[%s164 + $0x4f8] sm:$0xff]
        %v355 = vld [vmem:[%s164 + $0x500] sm:$0xff]
        %v356 = vld [vmem:[%s164 + $0x508] sm:$0xff]
        %v357 = vld [vmem:[%s164 + $0x510] sm:$0xff]
        %v358 = vld [vmem:[%s164 + $0x518] sm:$0xff]
        %v359 = vld [vmem:[%s164 + $0x520] sm:$0xff]
        %v360 = vld [vmem:[%s164 + $0x528] sm:$0xff]
        %v361 = vld [vmem:[%s164 + $0x530] sm:$0xff]
        %v362 = vld [vmem:[%s164 + $0x538] sm:$0xff]
        %v363 = vld [vmem:[%s164 + $0x540] sm:$0xff]
        %v364 = vld [vmem:[%s164 + $0x548] sm:$0xff]
        %v365 = vld [vmem:[%s164 + $0x550] sm:$0xff]
        %v366 = vld [vmem:[%s164 + $0x558] sm:$0xff]
        %v367 = vld [vmem:[%s164 + $0x560] sm:$0xff]
        %v368 = vld [vmem:[%s164 + $0x568] sm:$0xff]
        %v369 = vld [vmem:[%s164 + $0x570] sm:$0xff]
        %v370 = vld [vmem:[%s164 + $0x578] sm:$0xff]
        %v371 = vld [vmem:[%s164 + $0x580] sm:$0xff]
        %v372 = vld [vmem:[%s164 + $0x588] sm:$0xff]
        %v373 = vld [vmem:[%s164 + $0x590] sm:$0xff]
        %v374 = vld [vmem:[%s164 + $0x598] sm:$0xff]
        %v375 = vld [vmem:[%s164 + $0x5a0] sm:$0xff]
        %v376 = vld [vmem:[%s164 + $0x5a8] sm:$0xff]
        %v377 = vld [vmem:[%s164 + $0x5b0] sm:$0xff]
        %v378 = vld [vmem:[%s164 + $0x5b8] sm:$0xff]
        %v379 = vld [vmem:[%s164 + $0x5c0] sm:$0xff]
        %v380 = vld [vmem:[%s164 + $0x5c8] sm:$0xff]
        %v381 = vld [vmem:[%s164 + $0x5d0] sm:$0xff]
        %v382 = vld [vmem:[%s164 + $0x5d8] sm:$0xff]
        %v383 = vld [vmem:[%s164 + $0x5e0] sm:$0xff]
        %v384 = vld [vmem:[%s164 + $0x5e8] sm:$0xff]
        %v385 = vld [vmem:[%s164 + $0x5f0] sm:$0xff]
        %v386 = vld [vmem:[%s164 + $0x5f8] sm:$0xff]
        %v387 = vld [vmem:[%s164 + $0x600] sm:$0xff]
        %v388 = vld [vmem:[%s164 + $0x608] sm:$0xff]
        %v389 = vld [vmem:[%s164 + $0x610] sm:$0xff]
        %v390 = vld [vmem:[%s164 + $0x618] sm:$0xff]
        %v391 = vld [vmem:[%s164 + $0x620] sm:$0xff]
        %v392 = vld [vmem:[%s164 + $0x628] sm:$0xff]
        %v393 = vld [vmem:[%s164 + $0x630] sm:$0xff]
        %v394 = vld [vmem:[%s164 + $0x638] sm:$0xff]
        %v395 = vld [vmem:[%s164 + $0x640] sm:$0xff]
        %v396 = vld [vmem:[%s164 + $0x648] sm:$0xff]
        %v397 = vld [vmem:[%s164 + $0x650] sm:$0xff]
        %v398 = vld [vmem:[%s164 + $0x658] sm:$0xff]
        %v399 = vld [vmem:[%s164 + $0x660] sm:$0xff]
        %v400 = vld [vmem:[%s164 + $0x668] sm:$0xff]
        %v401 = vld [vmem:[%s164 + $0x670] sm:$0xff]
        %v402 = vld [vmem:[%s164 + $0x678] sm:$0xff]
        %v403 = vld [vmem:[%s164 + $0x680] sm:$0xff]
        %v404 = vld [vmem:[%s164 + $0x688] sm:$0xff]
        %v405 = vld [vmem:[%s164 + $0x690] sm:$0xff]
        %v406 = vld [vmem:[%s164 + $0x698] sm:$0xff]
        %v407 = vld [vmem:[%s164 + $0x6a0] sm:$0xff]
        %v408 = vld [vmem:[%s164 + $0x6a8] sm:$0xff]
        %v409 = vld [vmem:[%s164 + $0x6b0] sm:$0xff]
        %v410 = vld [vmem:[%s164 + $0x6b8] sm:$0xff]
        %v411 = vld [vmem:[%s164 + $0x6c0] sm:$0xff]
        %v412 = vld [vmem:[%s164 + $0x6c8] sm:$0xff]
        %v413 = vld [vmem:[%s164 + $0x6d0] sm:$0xff]
        %v414 = vld [vmem:[%s164 + $0x6d8] sm:$0xff]
        %v415 = vld [vmem:[%s164 + $0x6e0] sm:$0xff]
        %v416 = vld [vmem:[%s164 + $0x6e8] sm:$0xff]
        %v417 = vld [vmem:[%s164 + $0x6f0] sm:$0xff]
        %v418 = vld [vmem:[%s164 + $0x6f8] sm:$0xff]
        %v419 = vld [vmem:[%s164 + $0x700] sm:$0xff]
        %v420 = vld [vmem:[%s164 + $0x708] sm:$0xff]
        %v421 = vld [vmem:[%s164 + $0x710] sm:$0xff]
        %v422 = vld [vmem:[%s164 + $0x718] sm:$0xff]
        %v423 = vld [vmem:[%s164 + $0x720] sm:$0xff]
        %v424 = vld [vmem:[%s164 + $0x728] sm:$0xff]
        %v425 = vld [vmem:[%s164 + $0x730] sm:$0xff]
        %v426 = vld [vmem:[%s164 + $0x738] sm:$0xff]
        %v427 = vld [vmem:[%s164 + $0x740] sm:$0xff]
        %v428 = vld [vmem:[%s164 + $0x748] sm:$0xff]
        %v429 = vld [vmem:[%s164 + $0x750] sm:$0xff]
        %v430 = vld [vmem:[%s164 + $0x758] sm:$0xff]
        %v431 = vld [vmem:[%s164 + $0x760] sm:$0xff]
        %v432 = vld [vmem:[%s164 + $0x768] sm:$0xff]
        %v433 = vld [vmem:[%s164 + $0x770] sm:$0xff]
        %v434 = vld [vmem:[%s164 + $0x778] sm:$0xff]
        %v435 = vld [vmem:[%s164 + $0x780] sm:$0xff]
        %v436 = vld [vmem:[%s164 + $0x788] sm:$0xff]
        %v437 = vld [vmem:[%s164 + $0x790] sm:$0xff]
        %v438 = vld [vmem:[%s164 + $0x798] sm:$0xff]
        %v439 = vld [vmem:[%s164 + $0x7a0] sm:$0xff]
        %v440 = vld [vmem:[%s164 + $0x7a8] sm:$0xff]
        %v441 = vld [vmem:[%s164 + $0x7b0] sm:$0xff]
        %v442 = vld [vmem:[%s164 + $0x7b8] sm:$0xff]
        %v443 = vld [vmem:[%s164 + $0x7c0] sm:$0xff]
        %v444 = vld [vmem:[%s164 + $0x7c8] sm:$0xff]
        %v445 = vld [vmem:[%s164 + $0x7d0] sm:$0xff]
        %v446 = vld [vmem:[%s164 + $0x7d8] sm:$0xff]
        %v447 = vld [vmem:[%s164 + $0x7e0] sm:$0xff]
        %v448 = vld [vmem:[%s164 + $0x7e8] sm:$0xff]
        %v449 = vld [vmem:[%s164 + $0x7f0] sm:$0xff]
        %v450 = vld [vmem:[%s164 + $0x7f8] sm:$0xff]
        %v451 = vld [vmem:[%s164 + $0x800] sm:$0xff]
        %v452 = vld [vmem:[%s164 + $0x808] sm:$0xff]
        %v453 = vld [vmem:[%s164 + $0x810] sm:$0xff]
        %v454 = vld [vmem:[%s164 + $0x818] sm:$0xff]
        %v455 = vld [vmem:[%s164 + $0x820] sm:$0xff]
        %v456 = vld [vmem:[%s164 + $0x828] sm:$0xff]
        %v457 = vld [vmem:[%s164 + $0x830] sm:$0xff]
        %v458 = vld [vmem:[%s164 + $0x838] sm:$0xff]
        %v459 = vld [vmem:[%s164 + $0x840] sm:$0xff]
        %v460 = vld [vmem:[%s164 + $0x848] sm:$0xff]
        %v461 = vld [vmem:[%s164 + $0x850] sm:$0xff]
        %v462 = vld [vmem:[%s164 + $0x858] sm:$0xff]
        %v463 = vld [vmem:[%s164 + $0x860] sm:$0xff]
        %v464 = vld [vmem:[%s164 + $0x868] sm:$0xff]
        %v465 = vld [vmem:[%s164 + $0x870] sm:$0xff]
        %v466 = vld [vmem:[%s164 + $0x878] sm:$0xff]
        %v467 = vld [vmem:[%s164 + $0x880] sm:$0xff]
        %v468 = vld [vmem:[%s164 + $0x888] sm:$0xff]
        %v469 = vld [vmem:[%s164 + $0x890] sm:$0xff]
        %v470 = vld [vmem:[%s164 + $0x898] sm:$0xff]
        %v471 = vld [vmem:[%s164 + $0x8a0] sm:$0xff]
        %v472 = vld [vmem:[%s164 + $0x8a8] sm:$0xff]
        %v473 = vld [vmem:[%s164 + $0x8b0] sm:$0xff]
        %v474 = vld [vmem:[%s164 + $0x8b8] sm:$0xff]
        %v475 = vld [vmem:[%s164 + $0x8c0] sm:$0xff]
        %v476 = vld [vmem:[%s164 + $0x8c8] sm:$0xff]
        %v477 = vld [vmem:[%s164 + $0x8d0] sm:$0xff]
        %v478 = vld [vmem:[%s164 + $0x8d8] sm:$0xff]
        %v479 = vld [vmem:[%s164 + $0x8e0] sm:$0xff]
        %v480 = vld [vmem:[%s164 + $0x8e8] sm:$0xff]
        %v481 = vld [vmem:[%s164 + $0x8f0] sm:$0xff]
        %v482 = vld [vmem:[%s164 + $0x8f8] sm:$0xff]
        %v483 = vld [vmem:[%s164 + $0x900] sm:$0xff]
        %v484 = vld [vmem:[%s164 + $0x908] sm:$0xff]
        %v485 = vld [vmem:[%s164 + $0x910] sm:$0xff]
        %v486 = vld [vmem:[%s164 + $0x918] sm:$0xff]
        %v487 = vld [vmem:[%s164 + $0x920] sm:$0xff]
        %v488 = vld [vmem:[%s164 + $0x928] sm:$0xff]
        %v489 = vld [vmem:[%s164 + $0x930] sm:$0xff]
        %v490 = vld [vmem:[%s164 + $0x938] sm:$0xff]
        %v491 = vld [vmem:[%s164 + $0x940] sm:$0xff]
        %v492 = vld [vmem:[%s164 + $0x948] sm:$0xff]
        %v493 = vld [vmem:[%s164 + $0x950] sm:$0xff]
        %v494 = vld [vmem:[%s164 + $0x958] sm:$0xff]
        %v495 = vld [vmem:[%s164 + $0x960] sm:$0xff]
        %v496 = vld [vmem:[%s164 + $0x968] sm:$0xff]
        %v497 = vld [vmem:[%s164 + $0x970] sm:$0xff]
        %v498 = vld [vmem:[%s164 + $0x978] sm:$0xff]
        %v499 = vld [vmem:[%s164 + $0x980] sm:$0xff]
        %v500 = vld [vmem:[%s164 + $0x988] sm:$0xff]
        %v501 = vld [vmem:[%s164 + $0x990] sm:$0xff]
        %v502 = vld [vmem:[%s164 + $0x998] sm:$0xff]
        %v503 = vld [vmem:[%s164 + $0x9a0] sm:$0xff]
        %v504 = vld [vmem:[%s164 + $0x9a8] sm:$0xff]
        %v505 = vld [vmem:[%s164 + $0x9b0] sm:$0xff]
        %v506 = vld [vmem:[%s164 + $0x9b8] sm:$0xff]
        %v507 = vld [vmem:[%s164 + $0x9c0] sm:$0xff]
        %v508 = vld [vmem:[%s164 + $0x9c8] sm:$0xff]
        %v509 = vld [vmem:[%s164 + $0x9d0] sm:$0xff]
        %v510 = vld [vmem:[%s164 + $0x9d8] sm:$0xff]
        %v511 = vld [vmem:[%s164 + $0x9e0] sm:$0xff]
        %v512 = vld [vmem:[%s164 + $0x9e8] sm:$0xff]
        %v513 = vld [vmem:[%s164 + $0x9f0] sm:$0xff]
        %v514 = vld [vmem:[%s164 + $0x9f8] sm:$0xff]
        %v515 = vld [vmem:[%s164 + $0xa00] sm:$0xff]
        %v516 = vld [vmem:[%s164 + $0xa08] sm:$0xff]
        %v517 = vld [vmem:[%s164 + $0xa10] sm:$0xff]
        %v518 = vld [vmem:[%s164 + $0xa18] sm:$0xff]
        %v519 = vld [vmem:[%s164 + $0xa20] sm:$0xff]
        %v520 = vld [vmem:[%s164 + $0xa28] sm:$0xff]
        %v521 = vld [vmem:[%s164 + $0xa30] sm:$0xff]
        %v522 = vld [vmem:[%s164 + $0xa38] sm:$0xff]
        %v523 = vld [vmem:[%s164 + $0xa40] sm:$0xff]
        %v524 = vld [vmem:[%s164 + $0xa48] sm:$0xff]
        %v525 = vld [vmem:[%s164 + $0xa50] sm:$0xff]
        %v526 = vld [vmem:[%s164 + $0xa58] sm:$0xff]
        %v527 = vld [vmem:[%s164 + $0xa60] sm:$0xff]
        %v528 = vld [vmem:[%s164 + $0xa68] sm:$0xff]
        %v529 = vld [vmem:[%s164 + $0xa70] sm:$0xff]
        %v530 = vld [vmem:[%s164 + $0xa78] sm:$0xff]
        %v531 = vld [vmem:[%s164 + $0xa80] sm:$0xff]
        %v532 = vld [vmem:[%s164 + $0xa88] sm:$0xff]
        %v533 = vld [vmem:[%s164 + $0xa90] sm:$0xff]
        %v534 = vld [vmem:[%s164 + $0xa98] sm:$0xff]
        %v535 = vld [vmem:[%s164 + $0xaa0] sm:$0xff]
        %v536 = vld [vmem:[%s164 + $0xaa8] sm:$0xff]
        %v537 = vld [vmem:[%s164 + $0xab0] sm:$0xff]
        %v538 = vld [vmem:[%s164 + $0xab8] sm:$0xff]
        %v539 = vld [vmem:[%s164 + $0xac0] sm:$0xff]
        %v540 = vld [vmem:[%s164 + $0xac8] sm:$0xff]
        %v541 = vld [vmem:[%s164 + $0xad0] sm:$0xff]
        %v542 = vld [vmem:[%s164 + $0xad8] sm:$0xff]
        %v543 = vld [vmem:[%s164 + $0xae0] sm:$0xff]
        %v544 = vld [vmem:[%s164 + $0xae8] sm:$0xff]
        %v545 = vld [vmem:[%s164 + $0xaf0] sm:$0xff]
        %v546 = vld [vmem:[%s164 + $0xaf8] sm:$0xff]
        %v547 = vld [vmem:[%s164 + $0xb00] sm:$0xff]
        %v548 = vld [vmem:[%s164 + $0xb08] sm:$0xff]
        %v549 = vld [vmem:[%s164 + $0xb10] sm:$0xff]
        %v550 = vld [vmem:[%s164 + $0xb18] sm:$0xff]
        %v551 = vld [vmem:[%s164 + $0xb20] sm:$0xff]
        %v552 = vld [vmem:[%s164 + $0xb28] sm:$0xff]
        %v553 = vld [vmem:[%s164 + $0xb30] sm:$0xff]
        %v554 = vld [vmem:[%s164 + $0xb38] sm:$0xff]
        %v555 = vld [vmem:[%s164 + $0xb40] sm:$0xff]
        %v556 = vld [vmem:[%s164 + $0xb48] sm:$0xff]
        %v557 = vld [vmem:[%s164 + $0xb50] sm:$0xff]
        %v558 = vld [vmem:[%s164 + $0xb58] sm:$0xff]
        %v559 = vld [vmem:[%s164 + $0xb60] sm:$0xff]
        %v560 = vld [vmem:[%s164 + $0xb68] sm:$0xff]
        %v561 = vld [vmem:[%s164 + $0xb70] sm:$0xff]
        %v562 = vld [vmem:[%s164 + $0xb78] sm:$0xff]
        %v563 = vld [vmem:[%s164 + $0xb80] sm:$0xff]
        %v564 = vld [vmem:[%s164 + $0xb88] sm:$0xff]
        %v565 = vld [vmem:[%s164 + $0xb90] sm:$0xff]
        %v566 = vld [vmem:[%s164 + $0xb98] sm:$0xff]
        %v567 = vld [vmem:[%s164 + $0xba0] sm:$0xff]
        %v568 = vld [vmem:[%s164 + $0xba8] sm:$0xff]
        %v569 = vld [vmem:[%s164 + $0xbb0] sm:$0xff]
        %v570 = vld [vmem:[%s164 + $0xbb8] sm:$0xff]
        %v571 = vld [vmem:[%s164 + $0xbc0] sm:$0xff]
        %v572 = vld [vmem:[%s164 + $0xbc8] sm:$0xff]
        %v573 = vld [vmem:[%s164 + $0xbd0] sm:$0xff]
        %v574 = vld [vmem:[%s164 + $0xbd8] sm:$0xff]
        %v575 = vld [vmem:[%s164 + $0xbe0] sm:$0xff]
        %v576 = vld [vmem:[%s164 + $0xbe8] sm:$0xff]
        %v577 = vld [vmem:[%s164 + $0xbf0] sm:$0xff]
        %v578 = vld [vmem:[%s164 + $0xbf8] sm:$0xff]
        %v579 = vld [vmem:[%s164 + $0xc00] sm:$0xff]
        %v580 = vld [vmem:[%s164 + $0xc08] sm:$0xff]
        %v581 = vld [vmem:[%s164 + $0xc10] sm:$0xff]
        %v582 = vld [vmem:[%s164 + $0xc18] sm:$0xff]
        %v583 = vld [vmem:[%s164 + $0xc20] sm:$0xff]
        %v584 = vld [vmem:[%s164 + $0xc28] sm:$0xff]
        %v585 = vld [vmem:[%s164 + $0xc30] sm:$0xff]
        %v586 = vld [vmem:[%s164 + $0xc38] sm:$0xff]
        %v587 = vld [vmem:[%s164 + $0xc40] sm:$0xff]
        %v588 = vld [vmem:[%s164 + $0xc48] sm:$0xff]
        %v589 = vld [vmem:[%s164 + $0xc50] sm:$0xff]
        %v590 = vld [vmem:[%s164 + $0xc58] sm:$0xff]
        %v591 = vld [vmem:[%s164 + $0xc60] sm:$0xff]
        %v592 = vld [vmem:[%s164 + $0xc68] sm:$0xff]
        %v593 = vld [vmem:[%s164 + $0xc70] sm:$0xff]
        %v594 = vld [vmem:[%s164 + $0xc78] sm:$0xff]
        %v595 = vld [vmem:[%s164 + $0xc80] sm:$0xff]
        %v596 = vld [vmem:[%s164 + $0xc88] sm:$0xff]
        %v597 = vld [vmem:[%s164 + $0xc90] sm:$0xff]
        %v598 = vld [vmem:[%s164 + $0xc98] sm:$0xff]
        %v599 = vld [vmem:[%s164 + $0xca0] sm:$0xff]
        %v600 = vld [vmem:[%s164 + $0xca8] sm:$0xff]
        %v601 = vld [vmem:[%s164 + $0xcb0] sm:$0xff]
        %v602 = vld [vmem:[%s164 + $0xcb8] sm:$0xff]
        %v603 = vld [vmem:[%s164 + $0xcc0] sm:$0xff]
        %v604 = vld [vmem:[%s164 + $0xcc8] sm:$0xff]
        %v605 = vld [vmem:[%s164 + $0xcd0] sm:$0xff]
        %v606 = vld [vmem:[%s164 + $0xcd8] sm:$0xff]
        %v607 = vld [vmem:[%s164 + $0xce0] sm:$0xff]
        %v608 = vld [vmem:[%s164 + $0xce8] sm:$0xff]
        %v609 = vld [vmem:[%s164 + $0xcf0] sm:$0xff]
        %v610 = vld [vmem:[%s164 + $0xcf8] sm:$0xff]
        %v611 = vld [vmem:[%s164 + $0xd00] sm:$0xff]
        %v612 = vld [vmem:[%s164 + $0xd08] sm:$0xff]
        %v613 = vld [vmem:[%s164 + $0xd10] sm:$0xff]
        %v614 = vld [vmem:[%s164 + $0xd18] sm:$0xff]
        %v615 = vld [vmem:[%s164 + $0xd20] sm:$0xff]
        %v616 = vld [vmem:[%s164 + $0xd28] sm:$0xff]
        %v617 = vld [vmem:[%s164 + $0xd30] sm:$0xff]
        %v618 = vld [vmem:[%s164 + $0xd38] sm:$0xff]
        %v619 = vld [vmem:[%s164 + $0xd40] sm:$0xff]
        %v620 = vld [vmem:[%s164 + $0xd48] sm:$0xff]
        %v621 = vld [vmem:[%s164 + $0xd50] sm:$0xff]
        %v622 = vld [vmem:[%s164 + $0xd58] sm:$0xff]
        %v623 = vld [vmem:[%s164 + $0xd60] sm:$0xff]
        %v624 = vld [vmem:[%s164 + $0xd68] sm:$0xff]
        %v625 = vld [vmem:[%s164 + $0xd70] sm:$0xff]
        %v626 = vld [vmem:[%s164 + $0xd78] sm:$0xff]
        %v627 = vld [vmem:[%s164 + $0xd80] sm:$0xff]
        %v628 = vld [vmem:[%s164 + $0xd88] sm:$0xff]
        %v629 = vld [vmem:[%s164 + $0xd90] sm:$0xff]
        %v630 = vld [vmem:[%s164 + $0xd98] sm:$0xff]
        %v631 = vld [vmem:[%s164 + $0xda0] sm:$0xff]
        %v632 = vld [vmem:[%s164 + $0xda8] sm:$0xff]
        %v633 = vld [vmem:[%s164 + $0xdb0] sm:$0xff]
        %v634 = vld [vmem:[%s164 + $0xdb8] sm:$0xff]
        %v635 = vld [vmem:[%s164 + $0xdc0] sm:$0xff]
        %v636 = vld [vmem:[%s164 + $0xdc8] sm:$0xff]
        %v637 = vld [vmem:[%s164 + $0xdd0] sm:$0xff]
        %v638 = vld [vmem:[%s164 + $0xdd8] sm:$0xff]
        %v639 = vld [vmem:[%s164 + $0xde0] sm:$0xff]
        %v640 = vld [vmem:[%s164 + $0xde8] sm:$0xff]
        %v641 = vld [vmem:[%s164 + $0xdf0] sm:$0xff]
        %v642 = vld [vmem:[%s164 + $0xdf8] sm:$0xff]
        %v643 = vld [vmem:[%s164 + $0xe00] sm:$0xff]
        %v644 = vld [vmem:[%s164 + $0xe08] sm:$0xff]
        %v645 = vld [vmem:[%s164 + $0xe10] sm:$0xff]
        %v646 = vld [vmem:[%s164 + $0xe18] sm:$0xff]
        %v647 = vld [vmem:[%s164 + $0xe20] sm:$0xff]
        %v648 = vld [vmem:[%s164 + $0xe28] sm:$0xff]
        %v649 = vld [vmem:[%s164 + $0xe30] sm:$0xff]
        %v650 = vld [vmem:[%s164 + $0xe38] sm:$0xff]
        %v651 = vld [vmem:[%s164 + $0xe40] sm:$0xff]
        %v652 = vld [vmem:[%s164 + $0xe48] sm:$0xff]
        %v653 = vld [vmem:[%s164 + $0xe50] sm:$0xff]
        %v654 = vld [vmem:[%s164 + $0xe58] sm:$0xff]
        %v655 = vld [vmem:[%s164 + $0xe60] sm:$0xff]
        %v656 = vld [vmem:[%s164 + $0xe68] sm:$0xff]
        %v657 = vld [vmem:[%s164 + $0xe70] sm:$0xff]
        %v658 = vld [vmem:[%s164 + $0xe78] sm:$0xff]
        %v659 = vld [vmem:[%s164 + $0xe80] sm:$0xff]
        %v660 = vld [vmem:[%s164 + $0xe88] sm:$0xff]
        %v661 = vld [vmem:[%s164 + $0xe90] sm:$0xff]
        %v662 = vld [vmem:[%s164 + $0xe98] sm:$0xff]
        %v663 = vld [vmem:[%s164 + $0xea0] sm:$0xff]
        %v664 = vld [vmem:[%s164 + $0xea8] sm:$0xff]
        %v665 = vld [vmem:[%s164 + $0xeb0] sm:$0xff]
        %v666 = vld [vmem:[%s164 + $0xeb8] sm:$0xff]
        %v667 = vld [vmem:[%s164 + $0xec0] sm:$0xff]
        %v668 = vld [vmem:[%s164 + $0xec8] sm:$0xff]
        %v669 = vld [vmem:[%s164 + $0xed0] sm:$0xff]
        %v670 = vld [vmem:[%s164 + $0xed8] sm:$0xff]
        %v671 = vld [vmem:[%s164 + $0xee0] sm:$0xff]
        %v672 = vld [vmem:[%s164 + $0xee8] sm:$0xff]
        %v673 = vld [vmem:[%s164 + $0xef0] sm:$0xff]
        %v674 = vld [vmem:[%s164 + $0xef8] sm:$0xff]
        %v675 = vld [vmem:[%s164 + $0xf00] sm:$0xff]
        %v676 = vld [vmem:[%s164 + $0xf08] sm:$0xff]
        %v677 = vld [vmem:[%s164 + $0xf10] sm:$0xff]
        %v678 = vld [vmem:[%s164 + $0xf18] sm:$0xff]
        %v679 = vld [vmem:[%s164 + $0xf20] sm:$0xff]
        %v680 = vld [vmem:[%s164 + $0xf28] sm:$0xff]
        %v681 = vld [vmem:[%s164 + $0xf30] sm:$0xff]
        %v682 = vld [vmem:[%s164 + $0xf38] sm:$0xff]
        %v683 = vld [vmem:[%s164 + $0xf40] sm:$0xff]
        %v684 = vld [vmem:[%s164 + $0xf48] sm:$0xff]
        %v685 = vld [vmem:[%s164 + $0xf50] sm:$0xff]
        %v686 = vld [vmem:[%s164 + $0xf58] sm:$0xff]
        %v687 = vld [vmem:[%s164 + $0xf60] sm:$0xff]
        %v688 = vld [vmem:[%s164 + $0xf68] sm:$0xff]
        %v689 = vld [vmem:[%s164 + $0xf70] sm:$0xff]
        %v690 = vld [vmem:[%s164 + $0xf78] sm:$0xff]
        %v691 = vld [vmem:[%s164 + $0xf80] sm:$0xff]
        %v692 = vld [vmem:[%s164 + $0xf88] sm:$0xff]
        %v693 = vld [vmem:[%s164 + $0xf90] sm:$0xff]
        %v694 = vld [vmem:[%s164 + $0xf98] sm:$0xff]
        %v695 = vld [vmem:[%s164 + $0xfa0] sm:$0xff]
        %v696 = vld [vmem:[%s164 + $0xfa8] sm:$0xff]
        %v697 = vld [vmem:[%s164 + $0xfb0] sm:$0xff]
        %v698 = vld [vmem:[%s164 + $0xfb8] sm:$0xff]
        %v699 = vld [vmem:[%s164 + $0xfc0] sm:$0xff]
        %v700 = vld [vmem:[%s164 + $0xfc8] sm:$0xff]
        %v701 = vld [vmem:[%s164 + $0xfd0] sm:$0xff]
        %v702 = vld [vmem:[%s164 + $0xfd8] sm:$0xff]
        %v703 = vld [vmem:[%s164 + $0xfe0] sm:$0xff]
        %v704 = vld [vmem:[%s164 + $0xfe8] sm:$0xff]
        %v705 = vld [vmem:[%s164 + $0xff0] sm:$0xff]
        %v706 = vld [vmem:[%s164 + $0xff8] sm:$0xff]
        %v707 = vpack.c.bf16 %v211, %v195
        %v708 = vpack.c.bf16 %v212, %v196
        %v709 = vpack.c.bf16 %v213, %v197
        %v710 = vpack.c.bf16 %v214, %v198
        %v711 = vpack.c.bf16 %v215, %v199
        %v712 = vpack.c.bf16 %v216, %v200
        %v713 = vpack.c.bf16 %v217, %v201
        %v714 = vpack.c.bf16 %v218, %v202
        %v715 = vpack.c.bf16 %v219, %v203
        %v716 = vpack.c.bf16 %v220, %v204
        %v717 = vpack.c.bf16 %v221, %v205
        %v718 = vpack.c.bf16 %v222, %v206
        %v719 = vpack.c.bf16 %v223, %v207
        %v720 = vpack.c.bf16 %v224, %v208
        %v721 = vpack.c.bf16 %v225, %v209
        %v722 = vpack.c.bf16 %v226, %v210
        %v723 = vpack.c.bf16 %v243, %v227
        %v724 = vpack.c.bf16 %v244, %v228
        %v725 = vpack.c.bf16 %v245, %v229
        %v726 = vpack.c.bf16 %v246, %v230
        %v727 = vpack.c.bf16 %v247, %v231
        %v728 = vpack.c.bf16 %v248, %v232
        %v729 = vpack.c.bf16 %v249, %v233
        %v730 = vpack.c.bf16 %v250, %v234
        %v731 = vpack.c.bf16 %v251, %v235
        %v732 = vpack.c.bf16 %v252, %v236
        %v733 = vpack.c.bf16 %v253, %v237
        %v734 = vpack.c.bf16 %v254, %v238
        %v735 = vpack.c.bf16 %v255, %v239
        %v736 = vpack.c.bf16 %v256, %v240
        %v737 = vpack.c.bf16 %v257, %v241
        %v738 = vpack.c.bf16 %v258, %v242
        %v739 = vpack.c.bf16 %v275, %v259
        %v740 = vpack.c.bf16 %v276, %v260
        %v741 = vpack.c.bf16 %v277, %v261
        %v742 = vpack.c.bf16 %v278, %v262
        %v743 = vpack.c.bf16 %v279, %v263
        %v744 = vpack.c.bf16 %v280, %v264
        %v745 = vpack.c.bf16 %v281, %v265
        %v746 = vpack.c.bf16 %v282, %v266
        %v747 = vpack.c.bf16 %v283, %v267
        %v748 = vpack.c.bf16 %v284, %v268
        %v749 = vpack.c.bf16 %v285, %v269
        %v750 = vpack.c.bf16 %v286, %v270
        %v751 = vpack.c.bf16 %v287, %v271
        %v752 = vpack.c.bf16 %v288, %v272
        %v753 = vpack.c.bf16 %v289, %v273
        %v754 = vpack.c.bf16 %v290, %v274
        %v755 = vpack.c.bf16 %v307, %v291
        %v756 = vpack.c.bf16 %v308, %v292
        %v757 = vpack.c.bf16 %v309, %v293
        %v758 = vpack.c.bf16 %v310, %v294
        %v759 = vpack.c.bf16 %v311, %v295
        %v760 = vpack.c.bf16 %v312, %v296
        %v761 = vpack.c.bf16 %v313, %v297
        %v762 = vpack.c.bf16 %v314, %v298
        %v763 = vpack.c.bf16 %v315, %v299
        %v764 = vpack.c.bf16 %v316, %v300
        %v765 = vpack.c.bf16 %v317, %v301
        %v766 = vpack.c.bf16 %v318, %v302
        %v767 = vpack.c.bf16 %v319, %v303
        %v768 = vpack.c.bf16 %v320, %v304
        %v769 = vpack.c.bf16 %v321, %v305
        %v770 = vpack.c.bf16 %v322, %v306
        %v771 = vpack.c.bf16 %v339, %v323
        %v772 = vpack.c.bf16 %v340, %v324
        %v773 = vpack.c.bf16 %v341, %v325
        %v774 = vpack.c.bf16 %v342, %v326
        %v775 = vpack.c.bf16 %v343, %v327
        %v776 = vpack.c.bf16 %v344, %v328
        %v777 = vpack.c.bf16 %v345, %v329
        %v778 = vpack.c.bf16 %v346, %v330
        %v779 = vpack.c.bf16 %v347, %v331
        %v780 = vpack.c.bf16 %v348, %v332
        %v781 = vpack.c.bf16 %v349, %v333
        %v782 = vpack.c.bf16 %v350, %v334
        %v783 = vpack.c.bf16 %v351, %v335
        %v784 = vpack.c.bf16 %v352, %v336
        %v785 = vpack.c.bf16 %v353, %v337
        %v786 = vpack.c.bf16 %v354, %v338
        %v787 = vpack.c.bf16 %v371, %v355
        %v788 = vpack.c.bf16 %v372, %v356
        %v789 = vpack.c.bf16 %v373, %v357
        %v790 = vpack.c.bf16 %v374, %v358
        %v791 = vpack.c.bf16 %v375, %v359
        %v792 = vpack.c.bf16 %v376, %v360
        %v793 = vpack.c.bf16 %v377, %v361
        %v794 = vpack.c.bf16 %v378, %v362
        %v795 = vpack.c.bf16 %v379, %v363
        %v796 = vpack.c.bf16 %v380, %v364
        %v797 = vpack.c.bf16 %v381, %v365
        %v798 = vpack.c.bf16 %v382, %v366
        %v799 = vpack.c.bf16 %v383, %v367
        %v800 = vpack.c.bf16 %v384, %v368
        %v801 = vpack.c.bf16 %v385, %v369
        %v802 = vpack.c.bf16 %v386, %v370
        %v803 = vpack.c.bf16 %v403, %v387
        %v804 = vpack.c.bf16 %v404, %v388
        %v805 = vpack.c.bf16 %v405, %v389
        %v806 = vpack.c.bf16 %v406, %v390
        %v807 = vpack.c.bf16 %v407, %v391
        %v808 = vpack.c.bf16 %v408, %v392
        %v809 = vpack.c.bf16 %v409, %v393
        %v810 = vpack.c.bf16 %v410, %v394
        %v811 = vpack.c.bf16 %v411, %v395
        %v812 = vpack.c.bf16 %v412, %v396
        %v813 = vpack.c.bf16 %v413, %v397
        %v814 = vpack.c.bf16 %v414, %v398
        %v815 = vpack.c.bf16 %v415, %v399
        %v816 = vpack.c.bf16 %v416, %v400
        %v817 = vpack.c.bf16 %v417, %v401
        %v818 = vpack.c.bf16 %v418, %v402
        %v819 = vpack.c.bf16 %v435, %v419
        %v820 = vpack.c.bf16 %v436, %v420
        %v821 = vpack.c.bf16 %v437, %v421
        %v822 = vpack.c.bf16 %v438, %v422
        %v823 = vpack.c.bf16 %v439, %v423
        %v824 = vpack.c.bf16 %v440, %v424
        %v825 = vpack.c.bf16 %v441, %v425
        %v826 = vpack.c.bf16 %v442, %v426
        %v827 = vpack.c.bf16 %v443, %v427
        %v828 = vpack.c.bf16 %v444, %v428
        %v829 = vpack.c.bf16 %v445, %v429
        %v830 = vpack.c.bf16 %v446, %v430
        %v831 = vpack.c.bf16 %v447, %v431
        %v832 = vpack.c.bf16 %v448, %v432
        %v833 = vpack.c.bf16 %v449, %v433
        %v834 = vpack.c.bf16 %v450, %v434
        %v835 = vpack.c.bf16 %v467, %v451
        %v836 = vpack.c.bf16 %v468, %v452
        %v837 = vpack.c.bf16 %v469, %v453
        %v838 = vpack.c.bf16 %v470, %v454
        %v839 = vpack.c.bf16 %v471, %v455
        %v840 = vpack.c.bf16 %v472, %v456
        %v841 = vpack.c.bf16 %v473, %v457
        %v842 = vpack.c.bf16 %v474, %v458
        %v843 = vpack.c.bf16 %v475, %v459
        %v844 = vpack.c.bf16 %v476, %v460
        %v845 = vpack.c.bf16 %v477, %v461
        %v846 = vpack.c.bf16 %v478, %v462
        %v847 = vpack.c.bf16 %v479, %v463
        %v848 = vpack.c.bf16 %v480, %v464
        %v849 = vpack.c.bf16 %v481, %v465
        %v850 = vpack.c.bf16 %v482, %v466
        %v851 = vpack.c.bf16 %v499, %v483
        %v852 = vpack.c.bf16 %v500, %v484
        %v853 = vpack.c.bf16 %v501, %v485
        %v854 = vpack.c.bf16 %v502, %v486
        %v855 = vpack.c.bf16 %v503, %v487
        %v856 = vpack.c.bf16 %v504, %v488
        %v857 = vpack.c.bf16 %v505, %v489
        %v858 = vpack.c.bf16 %v506, %v490
        %v859 = vpack.c.bf16 %v507, %v491
        %v860 = vpack.c.bf16 %v508, %v492
        %v861 = vpack.c.bf16 %v509, %v493
        %v862 = vpack.c.bf16 %v510, %v494
        %v863 = vpack.c.bf16 %v511, %v495
        %v864 = vpack.c.bf16 %v512, %v496
        %v865 = vpack.c.bf16 %v513, %v497
        %v866 = vpack.c.bf16 %v514, %v498
        %v867 = vpack.c.bf16 %v531, %v515
        %v868 = vpack.c.bf16 %v532, %v516
        %v869 = vpack.c.bf16 %v533, %v517
        %v870 = vpack.c.bf16 %v534, %v518
        %v871 = vpack.c.bf16 %v535, %v519
        %v872 = vpack.c.bf16 %v536, %v520
        %v873 = vpack.c.bf16 %v537, %v521
        %v874 = vpack.c.bf16 %v538, %v522
        %v875 = vpack.c.bf16 %v539, %v523
        %v876 = vpack.c.bf16 %v540, %v524
        %v877 = vpack.c.bf16 %v541, %v525
        %v878 = vpack.c.bf16 %v542, %v526
        %v879 = vpack.c.bf16 %v543, %v527
        %v880 = vpack.c.bf16 %v544, %v528
        %v881 = vpack.c.bf16 %v545, %v529
        %v882 = vpack.c.bf16 %v546, %v530
        %v883 = vpack.c.bf16 %v563, %v547
        %v884 = vpack.c.bf16 %v564, %v548
        %v885 = vpack.c.bf16 %v565, %v549
        %v886 = vpack.c.bf16 %v566, %v550
        %v887 = vpack.c.bf16 %v567, %v551
        %v888 = vpack.c.bf16 %v568, %v552
        %v889 = vpack.c.bf16 %v569, %v553
        %v890 = vpack.c.bf16 %v570, %v554
        %v891 = vpack.c.bf16 %v571, %v555
        %v892 = vpack.c.bf16 %v572, %v556
        %v893 = vpack.c.bf16 %v573, %v557
        %v894 = vpack.c.bf16 %v574, %v558
        %v895 = vpack.c.bf16 %v575, %v559
        %v896 = vpack.c.bf16 %v576, %v560
        %v897 = vpack.c.bf16 %v577, %v561
        %v898 = vpack.c.bf16 %v578, %v562
        %v899 = vpack.c.bf16 %v595, %v579
        %v900 = vpack.c.bf16 %v596, %v580
        %v901 = vpack.c.bf16 %v597, %v581
        %v902 = vpack.c.bf16 %v598, %v582
        %v903 = vpack.c.bf16 %v599, %v583
        %v904 = vpack.c.bf16 %v600, %v584
        %v905 = vpack.c.bf16 %v601, %v585
        %v906 = vpack.c.bf16 %v602, %v586
        %v907 = vpack.c.bf16 %v603, %v587
        %v908 = vpack.c.bf16 %v604, %v588
        %v909 = vpack.c.bf16 %v605, %v589
        %v910 = vpack.c.bf16 %v606, %v590
        %v911 = vpack.c.bf16 %v607, %v591
        %v912 = vpack.c.bf16 %v608, %v592
        %v913 = vpack.c.bf16 %v609, %v593
        %v914 = vpack.c.bf16 %v610, %v594
        %v915 = vpack.c.bf16 %v627, %v611
        %v916 = vpack.c.bf16 %v628, %v612
        %v917 = vpack.c.bf16 %v629, %v613
        %v918 = vpack.c.bf16 %v630, %v614
        %v919 = vpack.c.bf16 %v631, %v615
        %v920 = vpack.c.bf16 %v632, %v616
        %v921 = vpack.c.bf16 %v633, %v617
        %v922 = vpack.c.bf16 %v634, %v618
        %v923 = vpack.c.bf16 %v635, %v619
        %v924 = vpack.c.bf16 %v636, %v620
        %v925 = vpack.c.bf16 %v637, %v621
        %v926 = vpack.c.bf16 %v638, %v622
        %v927 = vpack.c.bf16 %v639, %v623
        %v928 = vpack.c.bf16 %v640, %v624
        %v929 = vpack.c.bf16 %v641, %v625
        %v930 = vpack.c.bf16 %v642, %v626
        %v931 = vpack.c.bf16 %v659, %v643
        %v932 = vpack.c.bf16 %v660, %v644
        %v933 = vpack.c.bf16 %v661, %v645
        %v934 = vpack.c.bf16 %v662, %v646
        %v935 = vpack.c.bf16 %v663, %v647
        %v936 = vpack.c.bf16 %v664, %v648
        %v937 = vpack.c.bf16 %v665, %v649
        %v938 = vpack.c.bf16 %v666, %v650
        %v939 = vpack.c.bf16 %v667, %v651
        %v940 = vpack.c.bf16 %v668, %v652
        %v941 = vpack.c.bf16 %v669, %v653
        %v942 = vpack.c.bf16 %v670, %v654
        %v943 = vpack.c.bf16 %v671, %v655
        %v944 = vpack.c.bf16 %v672, %v656
        %v945 = vpack.c.bf16 %v673, %v657
        %v946 = vpack.c.bf16 %v674, %v658
        %v947 = vpack.c.bf16 %v691, %v675
        %v948 = vpack.c.bf16 %v692, %v676
        %v949 = vpack.c.bf16 %v693, %v677
        %v950 = vpack.c.bf16 %v694, %v678
        %v951 = vpack.c.bf16 %v695, %v679
        %v952 = vpack.c.bf16 %v696, %v680
        %v953 = vpack.c.bf16 %v697, %v681
        %v954 = vpack.c.bf16 %v698, %v682
        %v955 = vpack.c.bf16 %v699, %v683
        %v956 = vpack.c.bf16 %v700, %v684
        %v957 = vpack.c.bf16 %v701, %v685
        %v958 = vpack.c.bf16 %v702, %v686
        %v959 = vpack.c.bf16 %v703, %v687
        %v960 = vpack.c.bf16 %v704, %v688
        %v961 = vpack.c.bf16 %v705, %v689
        %v962 = vpack.c.bf16 %v706, %v690
        %v963 = vld [vmem:[%s1] sm:$0xff]
        %v964 = vld [vmem:[%s1 + $0x8] sm:$0xff]
        %v965 = vld [vmem:[%s1 + $0x10] sm:$0xff]
        %v966 = vld [vmem:[%s1 + $0x18] sm:$0xff]
        %v967 = vld [vmem:[%s1 + $0x20] sm:$0xff]
        %v968 = vld [vmem:[%s1 + $0x28] sm:$0xff]
        %v969 = vld [vmem:[%s1 + $0x30] sm:$0xff]
        %v970 = vld [vmem:[%s1 + $0x38] sm:$0xff]
        %v971 = vld [vmem:[%s1 + $0x40] sm:$0xff]
        %v972 = vld [vmem:[%s1 + $0x48] sm:$0xff]
        %v973 = vld [vmem:[%s1 + $0x50] sm:$0xff]
        %v974 = vld [vmem:[%s1 + $0x58] sm:$0xff]
        %v975 = vld [vmem:[%s1 + $0x60] sm:$0xff]
        %v976 = vld [vmem:[%s1 + $0x68] sm:$0xff]
        %v977 = vld [vmem:[%s1 + $0x70] sm:$0xff]
        %v978 = vld [vmem:[%s1 + $0x78] sm:$0xff]
        %v979 = vld [vmem:[%s1 + $0x80] sm:$0xff]
        %v980 = vld [vmem:[%s1 + $0x88] sm:$0xff]
        %v981 = vld [vmem:[%s1 + $0x90] sm:$0xff]
        %v982 = vld [vmem:[%s1 + $0x98] sm:$0xff]
        %v983 = vld [vmem:[%s1 + $0xa0] sm:$0xff]
        %v984 = vld [vmem:[%s1 + $0xa8] sm:$0xff]
        %v985 = vld [vmem:[%s1 + $0xb0] sm:$0xff]
        %v986 = vld [vmem:[%s1 + $0xb8] sm:$0xff]
        %v987 = vld [vmem:[%s1 + $0xc0] sm:$0xff]
        %v988 = vld [vmem:[%s1 + $0xc8] sm:$0xff]
        %v989 = vld [vmem:[%s1 + $0xd0] sm:$0xff]
        %v990 = vld [vmem:[%s1 + $0xd8] sm:$0xff]
        %v991 = vld [vmem:[%s1 + $0xe0] sm:$0xff]
        %v992 = vld [vmem:[%s1 + $0xe8] sm:$0xff]
        %v993 = vld [vmem:[%s1 + $0xf0] sm:$0xff]
        %v994 = vld [vmem:[%s1 + $0xf8] sm:$0xff]
        %v995 = vld [vmem:[%s1 + $0x100] sm:$0xff]
        %v996 = vld [vmem:[%s1 + $0x108] sm:$0xff]
        %v997 = vld [vmem:[%s1 + $0x110] sm:$0xff]
        %v998 = vld [vmem:[%s1 + $0x118] sm:$0xff]
        %v999 = vld [vmem:[%s1 + $0x120] sm:$0xff]
        %v1000 = vld [vmem:[%s1 + $0x128] sm:$0xff]
        %v1001 = vld [vmem:[%s1 + $0x130] sm:$0xff]
        %v1002 = vld [vmem:[%s1 + $0x138] sm:$0xff]
        %v1003 = vld [vmem:[%s1 + $0x140] sm:$0xff]
        %v1004 = vld [vmem:[%s1 + $0x148] sm:$0xff]
        %v1005 = vld [vmem:[%s1 + $0x150] sm:$0xff]
        %v1006 = vld [vmem:[%s1 + $0x158] sm:$0xff]
        %v1007 = vld [vmem:[%s1 + $0x160] sm:$0xff]
        %v1008 = vld [vmem:[%s1 + $0x168] sm:$0xff]
        %v1009 = vld [vmem:[%s1 + $0x170] sm:$0xff]
        %v1010 = vld [vmem:[%s1 + $0x178] sm:$0xff]
        %v1011 = vld [vmem:[%s1 + $0x180] sm:$0xff]
        %v1012 = vld [vmem:[%s1 + $0x188] sm:$0xff]
        %v1013 = vld [vmem:[%s1 + $0x190] sm:$0xff]
        %v1014 = vld [vmem:[%s1 + $0x198] sm:$0xff]
        %v1015 = vld [vmem:[%s1 + $0x1a0] sm:$0xff]
        %v1016 = vld [vmem:[%s1 + $0x1a8] sm:$0xff]
        %v1017 = vld [vmem:[%s1 + $0x1b0] sm:$0xff]
        %v1018 = vld [vmem:[%s1 + $0x1b8] sm:$0xff]
        %v1019 = vld [vmem:[%s1 + $0x1c0] sm:$0xff]
        %v1020 = vld [vmem:[%s1 + $0x1c8] sm:$0xff]
        %v1021 = vld [vmem:[%s1 + $0x1d0] sm:$0xff]
        %v1022 = vld [vmem:[%s1 + $0x1d8] sm:$0xff]
        %v1023 = vld [vmem:[%s1 + $0x1e0] sm:$0xff]
        %v1024 = vld [vmem:[%s1 + $0x1e8] sm:$0xff]
        %v1025 = vld [vmem:[%s1 + $0x1f0] sm:$0xff]
        %v1026 = vld [vmem:[%s1 + $0x1f8] sm:$0xff]
        %v1027 = vld [vmem:[%s1 + $0x200] sm:$0xff]
        %v1028 = vld [vmem:[%s1 + $0x208] sm:$0xff]
        %v1029 = vld [vmem:[%s1 + $0x210] sm:$0xff]
        %v1030 = vld [vmem:[%s1 + $0x218] sm:$0xff]
        %v1031 = vld [vmem:[%s1 + $0x220] sm:$0xff]
        %v1032 = vld [vmem:[%s1 + $0x228] sm:$0xff]
        %v1033 = vld [vmem:[%s1 + $0x230] sm:$0xff]
        %v1034 = vld [vmem:[%s1 + $0x238] sm:$0xff]
        %v1035 = vld [vmem:[%s1 + $0x240] sm:$0xff]
        %v1036 = vld [vmem:[%s1 + $0x248] sm:$0xff]
        %v1037 = vld [vmem:[%s1 + $0x250] sm:$0xff]
        %v1038 = vld [vmem:[%s1 + $0x258] sm:$0xff]
        %v1039 = vld [vmem:[%s1 + $0x260] sm:$0xff]
        %v1040 = vld [vmem:[%s1 + $0x268] sm:$0xff]
        %v1041 = vld [vmem:[%s1 + $0x270] sm:$0xff]
        %v1042 = vld [vmem:[%s1 + $0x278] sm:$0xff]
        %v1043 = vld [vmem:[%s1 + $0x280] sm:$0xff]
        %v1044 = vld [vmem:[%s1 + $0x288] sm:$0xff]
        %v1045 = vld [vmem:[%s1 + $0x290] sm:$0xff]
        %v1046 = vld [vmem:[%s1 + $0x298] sm:$0xff]
        %v1047 = vld [vmem:[%s1 + $0x2a0] sm:$0xff]
        %v1048 = vld [vmem:[%s1 + $0x2a8] sm:$0xff]
        %v1049 = vld [vmem:[%s1 + $0x2b0] sm:$0xff]
        %v1050 = vld [vmem:[%s1 + $0x2b8] sm:$0xff]
        %v1051 = vld [vmem:[%s1 + $0x2c0] sm:$0xff]
        %v1052 = vld [vmem:[%s1 + $0x2c8] sm:$0xff]
        %v1053 = vld [vmem:[%s1 + $0x2d0] sm:$0xff]
        %v1054 = vld [vmem:[%s1 + $0x2d8] sm:$0xff]
        %v1055 = vld [vmem:[%s1 + $0x2e0] sm:$0xff]
        %v1056 = vld [vmem:[%s1 + $0x2e8] sm:$0xff]
        %v1057 = vld [vmem:[%s1 + $0x2f0] sm:$0xff]
        %v1058 = vld [vmem:[%s1 + $0x2f8] sm:$0xff]
        %v1059 = vld [vmem:[%s1 + $0x300] sm:$0xff]
        %v1060 = vld [vmem:[%s1 + $0x308] sm:$0xff]
        %v1061 = vld [vmem:[%s1 + $0x310] sm:$0xff]
        %v1062 = vld [vmem:[%s1 + $0x318] sm:$0xff]
        %v1063 = vld [vmem:[%s1 + $0x320] sm:$0xff]
        %v1064 = vld [vmem:[%s1 + $0x328] sm:$0xff]
        %v1065 = vld [vmem:[%s1 + $0x330] sm:$0xff]
        %v1066 = vld [vmem:[%s1 + $0x338] sm:$0xff]
        %v1067 = vld [vmem:[%s1 + $0x340] sm:$0xff]
        %v1068 = vld [vmem:[%s1 + $0x348] sm:$0xff]
        %v1069 = vld [vmem:[%s1 + $0x350] sm:$0xff]
        %v1070 = vld [vmem:[%s1 + $0x358] sm:$0xff]
        %v1071 = vld [vmem:[%s1 + $0x360] sm:$0xff]
        %v1072 = vld [vmem:[%s1 + $0x368] sm:$0xff]
        %v1073 = vld [vmem:[%s1 + $0x370] sm:$0xff]
        %v1074 = vld [vmem:[%s1 + $0x378] sm:$0xff]
        %v1075 = vld [vmem:[%s1 + $0x380] sm:$0xff]
        %v1076 = vld [vmem:[%s1 + $0x388] sm:$0xff]
        %v1077 = vld [vmem:[%s1 + $0x390] sm:$0xff]
        %v1078 = vld [vmem:[%s1 + $0x398] sm:$0xff]
        %v1079 = vld [vmem:[%s1 + $0x3a0] sm:$0xff]
        %v1080 = vld [vmem:[%s1 + $0x3a8] sm:$0xff]
        %v1081 = vld [vmem:[%s1 + $0x3b0] sm:$0xff]
        %v1082 = vld [vmem:[%s1 + $0x3b8] sm:$0xff]
        %v1083 = vld [vmem:[%s1 + $0x3c0] sm:$0xff]
        %v1084 = vld [vmem:[%s1 + $0x3c8] sm:$0xff]
        %v1085 = vld [vmem:[%s1 + $0x3d0] sm:$0xff]
        %v1086 = vld [vmem:[%s1 + $0x3d8] sm:$0xff]
        %v1087 = vld [vmem:[%s1 + $0x3e0] sm:$0xff]
        %v1088 = vld [vmem:[%s1 + $0x3e8] sm:$0xff]
        %v1089 = vld [vmem:[%s1 + $0x3f0] sm:$0xff]
        %v1090 = vld [vmem:[%s1 + $0x3f8] sm:$0xff]
        %v1091 = vld [vmem:[%s1 + $0x400] sm:$0xff]
        %v1092 = vld [vmem:[%s1 + $0x408] sm:$0xff]
        %v1093 = vld [vmem:[%s1 + $0x410] sm:$0xff]
        %v1094 = vld [vmem:[%s1 + $0x418] sm:$0xff]
        %v1095 = vld [vmem:[%s1 + $0x420] sm:$0xff]
        %v1096 = vld [vmem:[%s1 + $0x428] sm:$0xff]
        %v1097 = vld [vmem:[%s1 + $0x430] sm:$0xff]
        %v1098 = vld [vmem:[%s1 + $0x438] sm:$0xff]
        %v1099 = vld [vmem:[%s1 + $0x440] sm:$0xff]
        %v1100 = vld [vmem:[%s1 + $0x448] sm:$0xff]
        %v1101 = vld [vmem:[%s1 + $0x450] sm:$0xff]
        %v1102 = vld [vmem:[%s1 + $0x458] sm:$0xff]
        %v1103 = vld [vmem:[%s1 + $0x460] sm:$0xff]
        %v1104 = vld [vmem:[%s1 + $0x468] sm:$0xff]
        %v1105 = vld [vmem:[%s1 + $0x470] sm:$0xff]
        %v1106 = vld [vmem:[%s1 + $0x478] sm:$0xff]
        %v1107 = vld [vmem:[%s1 + $0x480] sm:$0xff]
        %v1108 = vld [vmem:[%s1 + $0x488] sm:$0xff]
        %v1109 = vld [vmem:[%s1 + $0x490] sm:$0xff]
        %v1110 = vld [vmem:[%s1 + $0x498] sm:$0xff]
        %v1111 = vld [vmem:[%s1 + $0x4a0] sm:$0xff]
        %v1112 = vld [vmem:[%s1 + $0x4a8] sm:$0xff]
        %v1113 = vld [vmem:[%s1 + $0x4b0] sm:$0xff]
        %v1114 = vld [vmem:[%s1 + $0x4b8] sm:$0xff]
        %v1115 = vld [vmem:[%s1 + $0x4c0] sm:$0xff]
        %v1116 = vld [vmem:[%s1 + $0x4c8] sm:$0xff]
        %v1117 = vld [vmem:[%s1 + $0x4d0] sm:$0xff]
        %v1118 = vld [vmem:[%s1 + $0x4d8] sm:$0xff]
        %v1119 = vld [vmem:[%s1 + $0x4e0] sm:$0xff]
        %v1120 = vld [vmem:[%s1 + $0x4e8] sm:$0xff]
        %v1121 = vld [vmem:[%s1 + $0x4f0] sm:$0xff]
        %v1122 = vld [vmem:[%s1 + $0x4f8] sm:$0xff]
        %v1123 = vld [vmem:[%s1 + $0x500] sm:$0xff]
        %v1124 = vld [vmem:[%s1 + $0x508] sm:$0xff]
        %v1125 = vld [vmem:[%s1 + $0x510] sm:$0xff]
        %v1126 = vld [vmem:[%s1 + $0x518] sm:$0xff]
        %v1127 = vld [vmem:[%s1 + $0x520] sm:$0xff]
        %v1128 = vld [vmem:[%s1 + $0x528] sm:$0xff]
        %v1129 = vld [vmem:[%s1 + $0x530] sm:$0xff]
        %v1130 = vld [vmem:[%s1 + $0x538] sm:$0xff]
        %v1131 = vld [vmem:[%s1 + $0x540] sm:$0xff]
        %v1132 = vld [vmem:[%s1 + $0x548] sm:$0xff]
        %v1133 = vld [vmem:[%s1 + $0x550] sm:$0xff]
        %v1134 = vld [vmem:[%s1 + $0x558] sm:$0xff]
        %v1135 = vld [vmem:[%s1 + $0x560] sm:$0xff]
        %v1136 = vld [vmem:[%s1 + $0x568] sm:$0xff]
        %v1137 = vld [vmem:[%s1 + $0x570] sm:$0xff]
        %v1138 = vld [vmem:[%s1 + $0x578] sm:$0xff]
        %v1139 = vld [vmem:[%s1 + $0x580] sm:$0xff]
        %v1140 = vld [vmem:[%s1 + $0x588] sm:$0xff]
        %v1141 = vld [vmem:[%s1 + $0x590] sm:$0xff]
        %v1142 = vld [vmem:[%s1 + $0x598] sm:$0xff]
        %v1143 = vld [vmem:[%s1 + $0x5a0] sm:$0xff]
        %v1144 = vld [vmem:[%s1 + $0x5a8] sm:$0xff]
        %v1145 = vld [vmem:[%s1 + $0x5b0] sm:$0xff]
        %v1146 = vld [vmem:[%s1 + $0x5b8] sm:$0xff]
        %v1147 = vld [vmem:[%s1 + $0x5c0] sm:$0xff]
        %v1148 = vld [vmem:[%s1 + $0x5c8] sm:$0xff]
        %v1149 = vld [vmem:[%s1 + $0x5d0] sm:$0xff]
        %v1150 = vld [vmem:[%s1 + $0x5d8] sm:$0xff]
        %v1151 = vld [vmem:[%s1 + $0x5e0] sm:$0xff]
        %v1152 = vld [vmem:[%s1 + $0x5e8] sm:$0xff]
        %v1153 = vld [vmem:[%s1 + $0x5f0] sm:$0xff]
        %v1154 = vld [vmem:[%s1 + $0x5f8] sm:$0xff]
        %v1155 = vld [vmem:[%s1 + $0x600] sm:$0xff]
        %v1156 = vld [vmem:[%s1 + $0x608] sm:$0xff]
        %v1157 = vld [vmem:[%s1 + $0x610] sm:$0xff]
        %v1158 = vld [vmem:[%s1 + $0x618] sm:$0xff]
        %v1159 = vld [vmem:[%s1 + $0x620] sm:$0xff]
        %v1160 = vld [vmem:[%s1 + $0x628] sm:$0xff]
        %v1161 = vld [vmem:[%s1 + $0x630] sm:$0xff]
        %v1162 = vld [vmem:[%s1 + $0x638] sm:$0xff]
        %v1163 = vld [vmem:[%s1 + $0x640] sm:$0xff]
        %v1164 = vld [vmem:[%s1 + $0x648] sm:$0xff]
        %v1165 = vld [vmem:[%s1 + $0x650] sm:$0xff]
        %v1166 = vld [vmem:[%s1 + $0x658] sm:$0xff]
        %v1167 = vld [vmem:[%s1 + $0x660] sm:$0xff]
        %v1168 = vld [vmem:[%s1 + $0x668] sm:$0xff]
        %v1169 = vld [vmem:[%s1 + $0x670] sm:$0xff]
        %v1170 = vld [vmem:[%s1 + $0x678] sm:$0xff]
        %v1171 = vld [vmem:[%s1 + $0x680] sm:$0xff]
        %v1172 = vld [vmem:[%s1 + $0x688] sm:$0xff]
        %v1173 = vld [vmem:[%s1 + $0x690] sm:$0xff]
        %v1174 = vld [vmem:[%s1 + $0x698] sm:$0xff]
        %v1175 = vld [vmem:[%s1 + $0x6a0] sm:$0xff]
        %v1176 = vld [vmem:[%s1 + $0x6a8] sm:$0xff]
        %v1177 = vld [vmem:[%s1 + $0x6b0] sm:$0xff]
        %v1178 = vld [vmem:[%s1 + $0x6b8] sm:$0xff]
        %v1179 = vld [vmem:[%s1 + $0x6c0] sm:$0xff]
        %v1180 = vld [vmem:[%s1 + $0x6c8] sm:$0xff]
        %v1181 = vld [vmem:[%s1 + $0x6d0] sm:$0xff]
        %v1182 = vld [vmem:[%s1 + $0x6d8] sm:$0xff]
        %v1183 = vld [vmem:[%s1 + $0x6e0] sm:$0xff]
        %v1184 = vld [vmem:[%s1 + $0x6e8] sm:$0xff]
        %v1185 = vld [vmem:[%s1 + $0x6f0] sm:$0xff]
        %v1186 = vld [vmem:[%s1 + $0x6f8] sm:$0xff]
        %v1187 = vld [vmem:[%s1 + $0x700] sm:$0xff]
        %v1188 = vld [vmem:[%s1 + $0x708] sm:$0xff]
        %v1189 = vld [vmem:[%s1 + $0x710] sm:$0xff]
        %v1190 = vld [vmem:[%s1 + $0x718] sm:$0xff]
        %v1191 = vld [vmem:[%s1 + $0x720] sm:$0xff]
        %v1192 = vld [vmem:[%s1 + $0x728] sm:$0xff]
        %v1193 = vld [vmem:[%s1 + $0x730] sm:$0xff]
        %v1194 = vld [vmem:[%s1 + $0x738] sm:$0xff]
        %v1195 = vld [vmem:[%s1 + $0x740] sm:$0xff]
        %v1196 = vld [vmem:[%s1 + $0x748] sm:$0xff]
        %v1197 = vld [vmem:[%s1 + $0x750] sm:$0xff]
        %v1198 = vld [vmem:[%s1 + $0x758] sm:$0xff]
        %v1199 = vld [vmem:[%s1 + $0x760] sm:$0xff]
        %v1200 = vld [vmem:[%s1 + $0x768] sm:$0xff]
        %v1201 = vld [vmem:[%s1 + $0x770] sm:$0xff]
        %v1202 = vld [vmem:[%s1 + $0x778] sm:$0xff]
        %v1203 = vld [vmem:[%s1 + $0x780] sm:$0xff]
        %v1204 = vld [vmem:[%s1 + $0x788] sm:$0xff]
        %v1205 = vld [vmem:[%s1 + $0x790] sm:$0xff]
        %v1206 = vld [vmem:[%s1 + $0x798] sm:$0xff]
        %v1207 = vld [vmem:[%s1 + $0x7a0] sm:$0xff]
        %v1208 = vld [vmem:[%s1 + $0x7a8] sm:$0xff]
        %v1209 = vld [vmem:[%s1 + $0x7b0] sm:$0xff]
        %v1210 = vld [vmem:[%s1 + $0x7b8] sm:$0xff]
        %v1211 = vld [vmem:[%s1 + $0x7c0] sm:$0xff]
        %v1212 = vld [vmem:[%s1 + $0x7c8] sm:$0xff]
        %v1213 = vld [vmem:[%s1 + $0x7d0] sm:$0xff]
        %v1214 = vld [vmem:[%s1 + $0x7d8] sm:$0xff]
        %v1215 = vld [vmem:[%s1 + $0x7e0] sm:$0xff]
        %v1216 = vld [vmem:[%s1 + $0x7e8] sm:$0xff]
        %v1217 = vld [vmem:[%s1 + $0x7f0] sm:$0xff]
        %v1218 = vld [vmem:[%s1 + $0x7f8] sm:$0xff]
        %v1219 = vpack.c.bf16 %v964, %v963
        %v1220 = vpack.c.bf16 %v966, %v965
        %v1221 = vpack.c.bf16 %v968, %v967
        %v1222 = vpack.c.bf16 %v970, %v969
        %v1223 = vpack.c.bf16 %v972, %v971
        %v1224 = vpack.c.bf16 %v974, %v973
        %v1225 = vpack.c.bf16 %v976, %v975
        %v1226 = vpack.c.bf16 %v978, %v977
        %v1227 = vpack.c.bf16 %v980, %v979
        %v1228 = vpack.c.bf16 %v982, %v981
        %v1229 = vpack.c.bf16 %v984, %v983
        %v1230 = vpack.c.bf16 %v986, %v985
        %v1231 = vpack.c.bf16 %v988, %v987
        %v1232 = vpack.c.bf16 %v990, %v989
        %v1233 = vpack.c.bf16 %v992, %v991
        %v1234 = vpack.c.bf16 %v994, %v993
        %v1235 = vpack.c.bf16 %v996, %v995
        %v1236 = vpack.c.bf16 %v998, %v997
        %v1237 = vpack.c.bf16 %v1000, %v999
        %v1238 = vpack.c.bf16 %v1002, %v1001
        %v1239 = vpack.c.bf16 %v1004, %v1003
        %v1240 = vpack.c.bf16 %v1006, %v1005
        %v1241 = vpack.c.bf16 %v1008, %v1007
        %v1242 = vpack.c.bf16 %v1010, %v1009
        %v1243 = vpack.c.bf16 %v1012, %v1011
        %v1244 = vpack.c.bf16 %v1014, %v1013
        %v1245 = vpack.c.bf16 %v1016, %v1015
        %v1246 = vpack.c.bf16 %v1018, %v1017
        %v1247 = vpack.c.bf16 %v1020, %v1019
        %v1248 = vpack.c.bf16 %v1022, %v1021
        %v1249 = vpack.c.bf16 %v1024, %v1023
        %v1250 = vpack.c.bf16 %v1026, %v1025
        %v1251 = vpack.c.bf16 %v1028, %v1027
        %v1252 = vpack.c.bf16 %v1030, %v1029
        %v1253 = vpack.c.bf16 %v1032, %v1031
        %v1254 = vpack.c.bf16 %v1034, %v1033
        %v1255 = vpack.c.bf16 %v1036, %v1035
        %v1256 = vpack.c.bf16 %v1038, %v1037
        %v1257 = vpack.c.bf16 %v1040, %v1039
        %v1258 = vpack.c.bf16 %v1042, %v1041
        %v1259 = vpack.c.bf16 %v1044, %v1043
        %v1260 = vpack.c.bf16 %v1046, %v1045
        %v1261 = vpack.c.bf16 %v1048, %v1047
        %v1262 = vpack.c.bf16 %v1050, %v1049
        %v1263 = vpack.c.bf16 %v1052, %v1051
        %v1264 = vpack.c.bf16 %v1054, %v1053
        %v1265 = vpack.c.bf16 %v1056, %v1055
        %v1266 = vpack.c.bf16 %v1058, %v1057
        %v1267 = vpack.c.bf16 %v1060, %v1059
        %v1268 = vpack.c.bf16 %v1062, %v1061
        %v1269 = vpack.c.bf16 %v1064, %v1063
        %v1270 = vpack.c.bf16 %v1066, %v1065
        %v1271 = vpack.c.bf16 %v1068, %v1067
        %v1272 = vpack.c.bf16 %v1070, %v1069
        %v1273 = vpack.c.bf16 %v1072, %v1071
        %v1274 = vpack.c.bf16 %v1074, %v1073
        %v1275 = vpack.c.bf16 %v1076, %v1075
        %v1276 = vpack.c.bf16 %v1078, %v1077
        %v1277 = vpack.c.bf16 %v1080, %v1079
        %v1278 = vpack.c.bf16 %v1082, %v1081
        %v1279 = vpack.c.bf16 %v1084, %v1083
        %v1280 = vpack.c.bf16 %v1086, %v1085
        %v1281 = vpack.c.bf16 %v1088, %v1087
        %v1282 = vpack.c.bf16 %v1090, %v1089
        %v1283 = vpack.c.bf16 %v1092, %v1091
        %v1284 = vpack.c.bf16 %v1094, %v1093
        %v1285 = vpack.c.bf16 %v1096, %v1095
        %v1286 = vpack.c.bf16 %v1098, %v1097
        %v1287 = vpack.c.bf16 %v1100, %v1099
        %v1288 = vpack.c.bf16 %v1102, %v1101
        %v1289 = vpack.c.bf16 %v1104, %v1103
        %v1290 = vpack.c.bf16 %v1106, %v1105
        %v1291 = vpack.c.bf16 %v1108, %v1107
        %v1292 = vpack.c.bf16 %v1110, %v1109
        %v1293 = vpack.c.bf16 %v1112, %v1111
        %v1294 = vpack.c.bf16 %v1114, %v1113
        %v1295 = vpack.c.bf16 %v1116, %v1115
        %v1296 = vpack.c.bf16 %v1118, %v1117
        %v1297 = vpack.c.bf16 %v1120, %v1119
        %v1298 = vpack.c.bf16 %v1122, %v1121
        %v1299 = vpack.c.bf16 %v1124, %v1123
        %v1300 = vpack.c.bf16 %v1126, %v1125
        %v1301 = vpack.c.bf16 %v1128, %v1127
        %v1302 = vpack.c.bf16 %v1130, %v1129
        %v1303 = vpack.c.bf16 %v1132, %v1131
        %v1304 = vpack.c.bf16 %v1134, %v1133
        %v1305 = vpack.c.bf16 %v1136, %v1135
        %v1306 = vpack.c.bf16 %v1138, %v1137
        %v1307 = vpack.c.bf16 %v1140, %v1139
        %v1308 = vpack.c.bf16 %v1142, %v1141
        %v1309 = vpack.c.bf16 %v1144, %v1143
        %v1310 = vpack.c.bf16 %v1146, %v1145
        %v1311 = vpack.c.bf16 %v1148, %v1147
        %v1312 = vpack.c.bf16 %v1150, %v1149
        %v1313 = vpack.c.bf16 %v1152, %v1151
        %v1314 = vpack.c.bf16 %v1154, %v1153
        %v1315 = vpack.c.bf16 %v1156, %v1155
        %v1316 = vpack.c.bf16 %v1158, %v1157
        %v1317 = vpack.c.bf16 %v1160, %v1159
        %v1318 = vpack.c.bf16 %v1162, %v1161
        %v1319 = vpack.c.bf16 %v1164, %v1163
        %v1320 = vpack.c.bf16 %v1166, %v1165
        %v1321 = vpack.c.bf16 %v1168, %v1167
        %v1322 = vpack.c.bf16 %v1170, %v1169
        %v1323 = vpack.c.bf16 %v1172, %v1171
        %v1324 = vpack.c.bf16 %v1174, %v1173
        %v1325 = vpack.c.bf16 %v1176, %v1175
        %v1326 = vpack.c.bf16 %v1178, %v1177
        %v1327 = vpack.c.bf16 %v1180, %v1179
        %v1328 = vpack.c.bf16 %v1182, %v1181
        %v1329 = vpack.c.bf16 %v1184, %v1183
        %v1330 = vpack.c.bf16 %v1186, %v1185
        %v1331 = vpack.c.bf16 %v1188, %v1187
        %v1332 = vpack.c.bf16 %v1190, %v1189
        %v1333 = vpack.c.bf16 %v1192, %v1191
        %v1334 = vpack.c.bf16 %v1194, %v1193
        %v1335 = vpack.c.bf16 %v1196, %v1195
        %v1336 = vpack.c.bf16 %v1198, %v1197
        %v1337 = vpack.c.bf16 %v1200, %v1199
        %v1338 = vpack.c.bf16 %v1202, %v1201
        %v1339 = vpack.c.bf16 %v1204, %v1203
        %v1340 = vpack.c.bf16 %v1206, %v1205
        %v1341 = vpack.c.bf16 %v1208, %v1207
        %v1342 = vpack.c.bf16 %v1210, %v1209
        %v1343 = vpack.c.bf16 %v1212, %v1211
        %v1344 = vpack.c.bf16 %v1214, %v1213
        %v1345 = vpack.c.bf16 %v1216, %v1215
        %v1346 = vpack.c.bf16 %v1218, %v1217
        %1347 = vmatprep.subr.bf16.mxu0 0
        %1348 = vmatpush1.bf16.msra.mxu0 %v1226
        %1349 = vmatprep.subr.bf16.mxu0 0
        %1350 = vmatpush1.bf16.msra.mxu0 %v1225
        %1351 = vmatprep.subr.bf16.mxu0 0
        %1352 = vmatpush1.bf16.msra.mxu0 %v1224
        %1353 = vmatprep.subr.bf16.mxu0 0
        %1354 = vmatpush1.bf16.msra.mxu0 %v1223
        %1355 = vmatprep.subr.bf16.mxu0 0
        %1356 = vmatpush1.bf16.msra.mxu0 %v1222
        %1357 = vmatprep.subr.bf16.mxu0 0
        %1358 = vmatpush1.bf16.msra.mxu0 %v1221
        %1359 = vmatprep.subr.bf16.mxu0 0
        %1360 = vmatpush1.bf16.msra.mxu0 %v1220
        %1361 = vmatprep.subr.bf16.mxu0 0
        %1362 = vmatpush1.bf16.msra.mxu0 %v1219
        %1363 = vmatprep.subr.bf16.mxu0 0
        %1364 = vmatpush2.bf16.msra.mxu0 %v1234
        %1365 = vmatprep.subr.bf16.mxu0 0
        %1366 = vmatpush2.bf16.msra.mxu0 %v1233
        %1367 = vmatprep.subr.bf16.mxu0 0
        %1368 = vmatpush2.bf16.msra.mxu0 %v1232
        %1369 = vmatprep.subr.bf16.mxu0 0
        %1370 = vmatpush2.bf16.msra.mxu0 %v1231
        %1371 = vmatprep.subr.bf16.mxu0 0
        %1372 = vmatpush2.bf16.msra.mxu0 %v1230
        %1373 = vmatprep.subr.bf16.mxu0 0
        %1374 = vmatpush2.bf16.msra.mxu0 %v1229
        %1375 = vmatprep.subr.bf16.mxu0 0
        %1376 = vmatpush2.bf16.msra.mxu0 %v1228
        %1377 = vmatprep.subr.bf16.mxu0 0
        %1378 = vmatpush2.bf16.msra.mxu0 %v1227
        %1379 = vmatprep.mubr.bf16.mxu0 %v708
        %1380 = vmatmul.mubr.bf16.gmra.mxu0 %v707
        %v1381 = vpop.f32.mrf.mxu0
        %v1382 = vadd.f32 0.0, %v1381
        %v1383 = vpop.f32.mrf.mxu0
        %v1384 = vpop.f32.mrf.mxu0
        %v1385 = vadd.f32 0.0, %v1384
        %v1386 = vpop.f32.mrf.mxu0
        %1387 = vmatprep.mubr.bf16.mxu0 %v724
        %1388 = vmatmul.mubr.bf16.gmra.mxu0 %v723
        %v1389 = vpop.f32.mrf.mxu0
        %v1390 = vadd.f32 0.0, %v1389
        %v1391 = vpop.f32.mrf.mxu0
        %v1392 = vpop.f32.mrf.mxu0
        %v1393 = vadd.f32 0.0, %v1392
        %v1394 = vpop.f32.mrf.mxu0
        %1395 = vmatprep.mubr.bf16.mxu0 %v740
        %1396 = vmatmul.mubr.bf16.gmra.mxu0 %v739
        %v1397 = vpop.f32.mrf.mxu0
        %v1398 = vadd.f32 0.0, %v1397
        %v1399 = vpop.f32.mrf.mxu0
        %v1400 = vpop.f32.mrf.mxu0
        %v1401 = vadd.f32 0.0, %v1400
        %v1402 = vpop.f32.mrf.mxu0
        %1403 = vmatprep.mubr.bf16.mxu0 %v756
        %1404 = vmatmul.mubr.bf16.gmra.mxu0 %v755
        %v1405 = vpop.f32.mrf.mxu0
        %v1406 = vadd.f32 0.0, %v1405
        %v1407 = vpop.f32.mrf.mxu0
        %v1408 = vpop.f32.mrf.mxu0
        %v1409 = vadd.f32 0.0, %v1408
        %v1410 = vpop.f32.mrf.mxu0
        %1411 = vmatprep.mubr.bf16.mxu0 %v772
        %1412 = vmatmul.mubr.bf16.gmra.mxu0 %v771
        %v1413 = vpop.f32.mrf.mxu0
        %v1414 = vadd.f32 0.0, %v1413
        %v1415 = vpop.f32.mrf.mxu0
        %v1416 = vpop.f32.mrf.mxu0
        %v1417 = vadd.f32 0.0, %v1416
        %v1418 = vpop.f32.mrf.mxu0
        %1419 = vmatprep.mubr.bf16.mxu0 %v788
        %1420 = vmatmul.mubr.bf16.gmra.mxu0 %v787
        %v1421 = vpop.f32.mrf.mxu0
        %v1422 = vadd.f32 0.0, %v1421
        %v1423 = vpop.f32.mrf.mxu0
        %v1424 = vpop.f32.mrf.mxu0
        %v1425 = vadd.f32 0.0, %v1424
        %v1426 = vpop.f32.mrf.mxu0
        %1427 = vmatprep.mubr.bf16.mxu0 %v804
        %1428 = vmatmul.mubr.bf16.gmra.mxu0 %v803
        %v1429 = vpop.f32.mrf.mxu0
        %v1430 = vadd.f32 0.0, %v1429
        %v1431 = vpop.f32.mrf.mxu0
        %v1432 = vpop.f32.mrf.mxu0
        %v1433 = vadd.f32 0.0, %v1432
        %v1434 = vpop.f32.mrf.mxu0
        %1435 = vmatprep.mubr.bf16.mxu0 %v820
        %1436 = vmatmul.mubr.bf16.gmra.mxu0 %v819
        %v1437 = vpop.f32.mrf.mxu0
        %v1438 = vadd.f32 0.0, %v1437
        %v1439 = vpop.f32.mrf.mxu0
        %v1440 = vpop.f32.mrf.mxu0
        %v1441 = vadd.f32 0.0, %v1440
        %v1442 = vpop.f32.mrf.mxu0
        %1443 = vmatprep.mubr.bf16.mxu0 %v836
        %1444 = vmatmul.mubr.bf16.gmra.mxu0 %v835
        %v1445 = vpop.f32.mrf.mxu0
        %v1446 = vadd.f32 0.0, %v1445
        %v1447 = vpop.f32.mrf.mxu0
        %v1448 = vpop.f32.mrf.mxu0
        %v1449 = vadd.f32 0.0, %v1448
        %v1450 = vpop.f32.mrf.mxu0
        %1451 = vmatprep.mubr.bf16.mxu0 %v852
        %1452 = vmatmul.mubr.bf16.gmra.mxu0 %v851
        %v1453 = vpop.f32.mrf.mxu0
        %v1454 = vadd.f32 0.0, %v1453
        %v1455 = vpop.f32.mrf.mxu0
        %v1456 = vpop.f32.mrf.mxu0
        %v1457 = vadd.f32 0.0, %v1456
        %v1458 = vpop.f32.mrf.mxu0
        %1459 = vmatprep.mubr.bf16.mxu0 %v868
        %1460 = vmatmul.mubr.bf16.gmra.mxu0 %v867
        %v1461 = vpop.f32.mrf.mxu0
        %v1462 = vadd.f32 0.0, %v1461
        %v1463 = vpop.f32.mrf.mxu0
        %v1464 = vpop.f32.mrf.mxu0
        %v1465 = vadd.f32 0.0, %v1464
        %v1466 = vpop.f32.mrf.mxu0
        %1467 = vmatprep.mubr.bf16.mxu0 %v884
        %1468 = vmatmul.mubr.bf16.gmra.mxu0 %v883
        %v1469 = vpop.f32.mrf.mxu0
        %v1470 = vadd.f32 0.0, %v1469
        %v1471 = vpop.f32.mrf.mxu0
        %v1472 = vpop.f32.mrf.mxu0
        %v1473 = vadd.f32 0.0, %v1472
        %v1474 = vpop.f32.mrf.mxu0
        %1475 = vmatprep.mubr.bf16.mxu0 %v900
        %1476 = vmatmul.mubr.bf16.gmra.mxu0 %v899
        %v1477 = vpop.f32.mrf.mxu0
        %v1478 = vadd.f32 0.0, %v1477
        %v1479 = vpop.f32.mrf.mxu0
        %v1480 = vpop.f32.mrf.mxu0
        %v1481 = vadd.f32 0.0, %v1480
        %v1482 = vpop.f32.mrf.mxu0
        %1483 = vmatprep.mubr.bf16.mxu0 %v916
        %1484 = vmatmul.mubr.bf16.gmra.mxu0 %v915
        %v1485 = vpop.f32.mrf.mxu0
        %v1486 = vadd.f32 0.0, %v1485
        %v1487 = vpop.f32.mrf.mxu0
        %v1488 = vpop.f32.mrf.mxu0
        %v1489 = vadd.f32 0.0, %v1488
        %v1490 = vpop.f32.mrf.mxu0
        %1491 = vmatprep.mubr.bf16.mxu0 %v932
        %1492 = vmatmul.mubr.bf16.gmra.mxu0 %v931
        %v1493 = vpop.f32.mrf.mxu0
        %v1494 = vadd.f32 0.0, %v1493
        %v1495 = vpop.f32.mrf.mxu0
        %v1496 = vpop.f32.mrf.mxu0
        %v1497 = vadd.f32 0.0, %v1496
        %v1498 = vpop.f32.mrf.mxu0
        %1499 = vmatprep.mubr.bf16.mxu0 %v948
        %1500 = vmatmul.mubr.bf16.gmra.mxu0 %v947
        %v1501 = vpop.f32.mrf.mxu0
        %v1502 = vadd.f32 0.0, %v1501
        %v1503 = vpop.f32.mrf.mxu0
        %v1504 = vpop.f32.mrf.mxu0
        %v1505 = vadd.f32 0.0, %v1504
        %v1506 = vpop.f32.mrf.mxu0
        %1507 = vdwg.mxu0
        %1508 = vmatprep.subr.bf16.mxu0 0
        %1509 = vmatpush1.bf16.msra.mxu0 %v1242
        %1510 = vmatprep.subr.bf16.mxu0 0
        %1511 = vmatpush1.bf16.msra.mxu0 %v1241
        %1512 = vmatprep.subr.bf16.mxu0 0
        %1513 = vmatpush1.bf16.msra.mxu0 %v1240
        %1514 = vmatprep.subr.bf16.mxu0 0
        %1515 = vmatpush1.bf16.msra.mxu0 %v1239
        %1516 = vmatprep.subr.bf16.mxu0 0
        %1517 = vmatpush1.bf16.msra.mxu0 %v1238
        %1518 = vmatprep.subr.bf16.mxu0 0
        %1519 = vmatpush1.bf16.msra.mxu0 %v1237
        %1520 = vmatprep.subr.bf16.mxu0 0
        %1521 = vmatpush1.bf16.msra.mxu0 %v1236
        %1522 = vmatprep.subr.bf16.mxu0 0
        %1523 = vmatpush1.bf16.msra.mxu0 %v1235
        %1524 = vmatprep.subr.bf16.mxu0 0
        %1525 = vmatpush2.bf16.msra.mxu0 %v1250
        %1526 = vmatprep.subr.bf16.mxu0 0
        %1527 = vmatpush2.bf16.msra.mxu0 %v1249
        %1528 = vmatprep.subr.bf16.mxu0 0
        %1529 = vmatpush2.bf16.msra.mxu0 %v1248
        %1530 = vmatprep.subr.bf16.mxu0 0
        %1531 = vmatpush2.bf16.msra.mxu0 %v1247
        %1532 = vmatprep.subr.bf16.mxu0 0
        %1533 = vmatpush2.bf16.msra.mxu0 %v1246
        %1534 = vmatprep.subr.bf16.mxu0 0
        %1535 = vmatpush2.bf16.msra.mxu0 %v1245
        %1536 = vmatprep.subr.bf16.mxu0 0
        %1537 = vmatpush2.bf16.msra.mxu0 %v1244
        %1538 = vmatprep.subr.bf16.mxu0 0
        %1539 = vmatpush2.bf16.msra.mxu0 %v1243
        %1540 = vmatprep.mubr.bf16.mxu0 %v710
        %1541 = vmatmul.mubr.bf16.gmra.mxu0 %v709
        %v1542 = vpop.f32.mrf.mxu0
        %v1543 = vadd.f32 %v1382, %v1542
        %v1544 = vpop.f32.mrf.mxu0
        %v1545 = vpop.f32.mrf.mxu0
        %v1546 = vadd.f32 %v1385, %v1545
        %v1547 = vpop.f32.mrf.mxu0
        %1548 = vmatprep.mubr.bf16.mxu0 %v726
        %1549 = vmatmul.mubr.bf16.gmra.mxu0 %v725
        %v1550 = vpop.f32.mrf.mxu0
        %v1551 = vadd.f32 %v1390, %v1550
        %v1552 = vpop.f32.mrf.mxu0
        %v1553 = vpop.f32.mrf.mxu0
        %v1554 = vadd.f32 %v1393, %v1553
        %v1555 = vpop.f32.mrf.mxu0
        %1556 = vmatprep.mubr.bf16.mxu0 %v742
        %1557 = vmatmul.mubr.bf16.gmra.mxu0 %v741
        %v1558 = vpop.f32.mrf.mxu0
        %v1559 = vadd.f32 %v1398, %v1558
        %v1560 = vpop.f32.mrf.mxu0
        %v1561 = vpop.f32.mrf.mxu0
        %v1562 = vadd.f32 %v1401, %v1561
        %v1563 = vpop.f32.mrf.mxu0
        %1564 = vmatprep.mubr.bf16.mxu0 %v758
        %1565 = vmatmul.mubr.bf16.gmra.mxu0 %v757
        %v1566 = vpop.f32.mrf.mxu0
        %v1567 = vadd.f32 %v1406, %v1566
        %v1568 = vpop.f32.mrf.mxu0
        %v1569 = vpop.f32.mrf.mxu0
        %v1570 = vadd.f32 %v1409, %v1569
        %v1571 = vpop.f32.mrf.mxu0
        %1572 = vmatprep.mubr.bf16.mxu0 %v774
        %1573 = vmatmul.mubr.bf16.gmra.mxu0 %v773
        %v1574 = vpop.f32.mrf.mxu0
        %v1575 = vadd.f32 %v1414, %v1574
        %v1576 = vpop.f32.mrf.mxu0
        %v1577 = vpop.f32.mrf.mxu0
        %v1578 = vadd.f32 %v1417, %v1577
        %v1579 = vpop.f32.mrf.mxu0
        %1580 = vmatprep.mubr.bf16.mxu0 %v790
        %1581 = vmatmul.mubr.bf16.gmra.mxu0 %v789
        %v1582 = vpop.f32.mrf.mxu0
        %v1583 = vadd.f32 %v1422, %v1582
        %v1584 = vpop.f32.mrf.mxu0
        %v1585 = vpop.f32.mrf.mxu0
        %v1586 = vadd.f32 %v1425, %v1585
        %v1587 = vpop.f32.mrf.mxu0
        %1588 = vmatprep.mubr.bf16.mxu0 %v806
        %1589 = vmatmul.mubr.bf16.gmra.mxu0 %v805
        %v1590 = vpop.f32.mrf.mxu0
        %v1591 = vadd.f32 %v1430, %v1590
        %v1592 = vpop.f32.mrf.mxu0
        %v1593 = vpop.f32.mrf.mxu0
        %v1594 = vadd.f32 %v1433, %v1593
        %v1595 = vpop.f32.mrf.mxu0
        %1596 = vmatprep.mubr.bf16.mxu0 %v822
        %1597 = vmatmul.mubr.bf16.gmra.mxu0 %v821
        %v1598 = vpop.f32.mrf.mxu0
        %v1599 = vadd.f32 %v1438, %v1598
        %v1600 = vpop.f32.mrf.mxu0
        %v1601 = vpop.f32.mrf.mxu0
        %v1602 = vadd.f32 %v1441, %v1601
        %v1603 = vpop.f32.mrf.mxu0
        %1604 = vmatprep.mubr.bf16.mxu0 %v838
        %1605 = vmatmul.mubr.bf16.gmra.mxu0 %v837
        %v1606 = vpop.f32.mrf.mxu0
        %v1607 = vadd.f32 %v1446, %v1606
        %v1608 = vpop.f32.mrf.mxu0
        %v1609 = vpop.f32.mrf.mxu0
        %v1610 = vadd.f32 %v1449, %v1609
        %v1611 = vpop.f32.mrf.mxu0
        %1612 = vmatprep.mubr.bf16.mxu0 %v854
        %1613 = vmatmul.mubr.bf16.gmra.mxu0 %v853
        %v1614 = vpop.f32.mrf.mxu0
        %v1615 = vadd.f32 %v1454, %v1614
        %v1616 = vpop.f32.mrf.mxu0
        %v1617 = vpop.f32.mrf.mxu0
        %v1618 = vadd.f32 %v1457, %v1617
        %v1619 = vpop.f32.mrf.mxu0
        %1620 = vmatprep.mubr.bf16.mxu0 %v870
        %1621 = vmatmul.mubr.bf16.gmra.mxu0 %v869
        %v1622 = vpop.f32.mrf.mxu0
        %v1623 = vadd.f32 %v1462, %v1622
        %v1624 = vpop.f32.mrf.mxu0
        %v1625 = vpop.f32.mrf.mxu0
        %v1626 = vadd.f32 %v1465, %v1625
        %v1627 = vpop.f32.mrf.mxu0
        %1628 = vmatprep.mubr.bf16.mxu0 %v886
        %1629 = vmatmul.mubr.bf16.gmra.mxu0 %v885
        %v1630 = vpop.f32.mrf.mxu0
        %v1631 = vadd.f32 %v1470, %v1630
        %v1632 = vpop.f32.mrf.mxu0
        %v1633 = vpop.f32.mrf.mxu0
        %v1634 = vadd.f32 %v1473, %v1633
        %v1635 = vpop.f32.mrf.mxu0
        %1636 = vmatprep.mubr.bf16.mxu0 %v902
        %1637 = vmatmul.mubr.bf16.gmra.mxu0 %v901
        %v1638 = vpop.f32.mrf.mxu0
        %v1639 = vadd.f32 %v1478, %v1638
        %v1640 = vpop.f32.mrf.mxu0
        %v1641 = vpop.f32.mrf.mxu0
        %v1642 = vadd.f32 %v1481, %v1641
        %v1643 = vpop.f32.mrf.mxu0
        %1644 = vmatprep.mubr.bf16.mxu0 %v918
        %1645 = vmatmul.mubr.bf16.gmra.mxu0 %v917
        %v1646 = vpop.f32.mrf.mxu0
        %v1647 = vadd.f32 %v1486, %v1646
        %v1648 = vpop.f32.mrf.mxu0
        %v1649 = vpop.f32.mrf.mxu0
        %v1650 = vadd.f32 %v1489, %v1649
        %v1651 = vpop.f32.mrf.mxu0
        %1652 = vmatprep.mubr.bf16.mxu0 %v934
        %1653 = vmatmul.mubr.bf16.gmra.mxu0 %v933
        %v1654 = vpop.f32.mrf.mxu0
        %v1655 = vadd.f32 %v1494, %v1654
        %v1656 = vpop.f32.mrf.mxu0
        %v1657 = vpop.f32.mrf.mxu0
        %v1658 = vadd.f32 %v1497, %v1657
        %v1659 = vpop.f32.mrf.mxu0
        %1660 = vmatprep.mubr.bf16.mxu0 %v950
        %1661 = vmatmul.mubr.bf16.gmra.mxu0 %v949
        %v1662 = vpop.f32.mrf.mxu0
        %v1663 = vadd.f32 %v1502, %v1662
        %v1664 = vpop.f32.mrf.mxu0
        %v1665 = vpop.f32.mrf.mxu0
        %v1666 = vadd.f32 %v1505, %v1665
        %v1667 = vpop.f32.mrf.mxu0
        %1668 = vdwg.mxu0
        %1669 = vmatprep.subr.bf16.mxu0 0
        %1670 = vmatpush1.bf16.msra.mxu0 %v1258
        %1671 = vmatprep.subr.bf16.mxu0 0
        %1672 = vmatpush1.bf16.msra.mxu0 %v1257
        %1673 = vmatprep.subr.bf16.mxu0 0
        %1674 = vmatpush1.bf16.msra.mxu0 %v1256
        %1675 = vmatprep.subr.bf16.mxu0 0
        %1676 = vmatpush1.bf16.msra.mxu0 %v1255
        %1677 = vmatprep.subr.bf16.mxu0 0
        %1678 = vmatpush1.bf16.msra.mxu0 %v1254
        %1679 = vmatprep.subr.bf16.mxu0 0
        %1680 = vmatpush1.bf16.msra.mxu0 %v1253
        %1681 = vmatprep.subr.bf16.mxu0 0
        %1682 = vmatpush1.bf16.msra.mxu0 %v1252
        %1683 = vmatprep.subr.bf16.mxu0 0
        %1684 = vmatpush1.bf16.msra.mxu0 %v1251
        %1685 = vmatprep.subr.bf16.mxu0 0
        %1686 = vmatpush2.bf16.msra.mxu0 %v1266
        %1687 = vmatprep.subr.bf16.mxu0 0
        %1688 = vmatpush2.bf16.msra.mxu0 %v1265
        %1689 = vmatprep.subr.bf16.mxu0 0
        %1690 = vmatpush2.bf16.msra.mxu0 %v1264
        %1691 = vmatprep.subr.bf16.mxu0 0
        %1692 = vmatpush2.bf16.msra.mxu0 %v1263
        %1693 = vmatprep.subr.bf16.mxu0 0
        %1694 = vmatpush2.bf16.msra.mxu0 %v1262
        %1695 = vmatprep.subr.bf16.mxu0 0
        %1696 = vmatpush2.bf16.msra.mxu0 %v1261
        %1697 = vmatprep.subr.bf16.mxu0 0
        %1698 = vmatpush2.bf16.msra.mxu0 %v1260
        %1699 = vmatprep.subr.bf16.mxu0 0
        %1700 = vmatpush2.bf16.msra.mxu0 %v1259
        %1701 = vmatprep.mubr.bf16.mxu0 %v712
        %1702 = vmatmul.mubr.bf16.gmra.mxu0 %v711
        %v1703 = vpop.f32.mrf.mxu0
        %v1704 = vadd.f32 %v1543, %v1703
        %v1705 = vpop.f32.mrf.mxu0
        %v1706 = vpop.f32.mrf.mxu0
        %v1707 = vadd.f32 %v1546, %v1706
        %v1708 = vpop.f32.mrf.mxu0
        %1709 = vmatprep.mubr.bf16.mxu0 %v728
        %1710 = vmatmul.mubr.bf16.gmra.mxu0 %v727
        %v1711 = vpop.f32.mrf.mxu0
        %v1712 = vadd.f32 %v1551, %v1711
        %v1713 = vpop.f32.mrf.mxu0
        %v1714 = vpop.f32.mrf.mxu0
        %v1715 = vadd.f32 %v1554, %v1714
        %v1716 = vpop.f32.mrf.mxu0
        %1717 = vmatprep.mubr.bf16.mxu0 %v744
        %1718 = vmatmul.mubr.bf16.gmra.mxu0 %v743
        %v1719 = vpop.f32.mrf.mxu0
        %v1720 = vadd.f32 %v1559, %v1719
        %v1721 = vpop.f32.mrf.mxu0
        %v1722 = vpop.f32.mrf.mxu0
        %v1723 = vadd.f32 %v1562, %v1722
        %v1724 = vpop.f32.mrf.mxu0
        %1725 = vmatprep.mubr.bf16.mxu0 %v760
        %1726 = vmatmul.mubr.bf16.gmra.mxu0 %v759
        %v1727 = vpop.f32.mrf.mxu0
        %v1728 = vadd.f32 %v1567, %v1727
        %v1729 = vpop.f32.mrf.mxu0
        %v1730 = vpop.f32.mrf.mxu0
        %v1731 = vadd.f32 %v1570, %v1730
        %v1732 = vpop.f32.mrf.mxu0
        %1733 = vmatprep.mubr.bf16.mxu0 %v776
        %1734 = vmatmul.mubr.bf16.gmra.mxu0 %v775
        %v1735 = vpop.f32.mrf.mxu0
        %v1736 = vadd.f32 %v1575, %v1735
        %v1737 = vpop.f32.mrf.mxu0
        %v1738 = vpop.f32.mrf.mxu0
        %v1739 = vadd.f32 %v1578, %v1738
        %v1740 = vpop.f32.mrf.mxu0
        %1741 = vmatprep.mubr.bf16.mxu0 %v792
        %1742 = vmatmul.mubr.bf16.gmra.mxu0 %v791
        %v1743 = vpop.f32.mrf.mxu0
        %v1744 = vadd.f32 %v1583, %v1743
        %v1745 = vpop.f32.mrf.mxu0
        %v1746 = vpop.f32.mrf.mxu0
        %v1747 = vadd.f32 %v1586, %v1746
        %v1748 = vpop.f32.mrf.mxu0
        %1749 = vmatprep.mubr.bf16.mxu0 %v808
        %1750 = vmatmul.mubr.bf16.gmra.mxu0 %v807
        %v1751 = vpop.f32.mrf.mxu0
        %v1752 = vadd.f32 %v1591, %v1751
        %v1753 = vpop.f32.mrf.mxu0
        %v1754 = vpop.f32.mrf.mxu0
        %v1755 = vadd.f32 %v1594, %v1754
        %v1756 = vpop.f32.mrf.mxu0
        %1757 = vmatprep.mubr.bf16.mxu0 %v824
        %1758 = vmatmul.mubr.bf16.gmra.mxu0 %v823
        %v1759 = vpop.f32.mrf.mxu0
        %v1760 = vadd.f32 %v1599, %v1759
        %v1761 = vpop.f32.mrf.mxu0
        %v1762 = vpop.f32.mrf.mxu0
        %v1763 = vadd.f32 %v1602, %v1762
        %v1764 = vpop.f32.mrf.mxu0
        %1765 = vmatprep.mubr.bf16.mxu0 %v840
        %1766 = vmatmul.mubr.bf16.gmra.mxu0 %v839
        %v1767 = vpop.f32.mrf.mxu0
        %v1768 = vadd.f32 %v1607, %v1767
        %v1769 = vpop.f32.mrf.mxu0
        %v1770 = vpop.f32.mrf.mxu0
        %v1771 = vadd.f32 %v1610, %v1770
        %v1772 = vpop.f32.mrf.mxu0
        %1773 = vmatprep.mubr.bf16.mxu0 %v856
        %1774 = vmatmul.mubr.bf16.gmra.mxu0 %v855
        %v1775 = vpop.f32.mrf.mxu0
        %v1776 = vadd.f32 %v1615, %v1775
        %v1777 = vpop.f32.mrf.mxu0
        %v1778 = vpop.f32.mrf.mxu0
        %v1779 = vadd.f32 %v1618, %v1778
        %v1780 = vpop.f32.mrf.mxu0
        %1781 = vmatprep.mubr.bf16.mxu0 %v872
        %1782 = vmatmul.mubr.bf16.gmra.mxu0 %v871
        %v1783 = vpop.f32.mrf.mxu0
        %v1784 = vadd.f32 %v1623, %v1783
        %v1785 = vpop.f32.mrf.mxu0
        %v1786 = vpop.f32.mrf.mxu0
        %v1787 = vadd.f32 %v1626, %v1786
        %v1788 = vpop.f32.mrf.mxu0
        %1789 = vmatprep.mubr.bf16.mxu0 %v888
        %1790 = vmatmul.mubr.bf16.gmra.mxu0 %v887
        %v1791 = vpop.f32.mrf.mxu0
        %v1792 = vadd.f32 %v1631, %v1791
        %v1793 = vpop.f32.mrf.mxu0
        %v1794 = vpop.f32.mrf.mxu0
        %v1795 = vadd.f32 %v1634, %v1794
        %v1796 = vpop.f32.mrf.mxu0
        %1797 = vmatprep.mubr.bf16.mxu0 %v904
        %1798 = vmatmul.mubr.bf16.gmra.mxu0 %v903
        %v1799 = vpop.f32.mrf.mxu0
        %v1800 = vadd.f32 %v1639, %v1799
        %v1801 = vpop.f32.mrf.mxu0
        %v1802 = vpop.f32.mrf.mxu0
        %v1803 = vadd.f32 %v1642, %v1802
        %v1804 = vpop.f32.mrf.mxu0
        %1805 = vmatprep.mubr.bf16.mxu0 %v920
        %1806 = vmatmul.mubr.bf16.gmra.mxu0 %v919
        %v1807 = vpop.f32.mrf.mxu0
        %v1808 = vadd.f32 %v1647, %v1807
        %v1809 = vpop.f32.mrf.mxu0
        %v1810 = vpop.f32.mrf.mxu0
        %v1811 = vadd.f32 %v1650, %v1810
        %v1812 = vpop.f32.mrf.mxu0
        %1813 = vmatprep.mubr.bf16.mxu0 %v936
        %1814 = vmatmul.mubr.bf16.gmra.mxu0 %v935
        %v1815 = vpop.f32.mrf.mxu0
        %v1816 = vadd.f32 %v1655, %v1815
        %v1817 = vpop.f32.mrf.mxu0
        %v1818 = vpop.f32.mrf.mxu0
        %v1819 = vadd.f32 %v1658, %v1818
        %v1820 = vpop.f32.mrf.mxu0
        %1821 = vmatprep.mubr.bf16.mxu0 %v952
        %1822 = vmatmul.mubr.bf16.gmra.mxu0 %v951
        %v1823 = vpop.f32.mrf.mxu0
        %v1824 = vadd.f32 %v1663, %v1823
        %v1825 = vpop.f32.mrf.mxu0
        %v1826 = vpop.f32.mrf.mxu0
        %v1827 = vadd.f32 %v1666, %v1826
        %v1828 = vpop.f32.mrf.mxu0
        %1829 = vdwg.mxu0
        %1830 = vmatprep.subr.bf16.mxu0 0
        %1831 = vmatpush1.bf16.msra.mxu0 %v1274
        %1832 = vmatprep.subr.bf16.mxu0 0
        %1833 = vmatpush1.bf16.msra.mxu0 %v1273
        %1834 = vmatprep.subr.bf16.mxu0 0
        %1835 = vmatpush1.bf16.msra.mxu0 %v1272
        %1836 = vmatprep.subr.bf16.mxu0 0
        %1837 = vmatpush1.bf16.msra.mxu0 %v1271
        %1838 = vmatprep.subr.bf16.mxu0 0
        %1839 = vmatpush1.bf16.msra.mxu0 %v1270
        %1840 = vmatprep.subr.bf16.mxu0 0
        %1841 = vmatpush1.bf16.msra.mxu0 %v1269
        %1842 = vmatprep.subr.bf16.mxu0 0
        %1843 = vmatpush1.bf16.msra.mxu0 %v1268
        %1844 = vmatprep.subr.bf16.mxu0 0
        %1845 = vmatpush1.bf16.msra.mxu0 %v1267
        %1846 = vmatprep.subr.bf16.mxu0 0
        %1847 = vmatpush2.bf16.msra.mxu0 %v1282
        %1848 = vmatprep.subr.bf16.mxu0 0
        %1849 = vmatpush2.bf16.msra.mxu0 %v1281
        %1850 = vmatprep.subr.bf16.mxu0 0
        %1851 = vmatpush2.bf16.msra.mxu0 %v1280
        %1852 = vmatprep.subr.bf16.mxu0 0
        %1853 = vmatpush2.bf16.msra.mxu0 %v1279
        %1854 = vmatprep.subr.bf16.mxu0 0
        %1855 = vmatpush2.bf16.msra.mxu0 %v1278
        %1856 = vmatprep.subr.bf16.mxu0 0
        %1857 = vmatpush2.bf16.msra.mxu0 %v1277
        %1858 = vmatprep.subr.bf16.mxu0 0
        %1859 = vmatpush2.bf16.msra.mxu0 %v1276
        %1860 = vmatprep.subr.bf16.mxu0 0
        %1861 = vmatpush2.bf16.msra.mxu0 %v1275
        %1862 = vmatprep.mubr.bf16.mxu0 %v714
        %1863 = vmatmul.mubr.bf16.gmra.mxu0 %v713
        %v1864 = vpop.f32.mrf.mxu0
        %v1865 = vadd.f32 %v1704, %v1864
        %v1866 = vpop.f32.mrf.mxu0
        %v1867 = vpop.f32.mrf.mxu0
        %v1868 = vadd.f32 %v1707, %v1867
        %v1869 = vpop.f32.mrf.mxu0
        %1870 = vmatprep.mubr.bf16.mxu0 %v730
        %1871 = vmatmul.mubr.bf16.gmra.mxu0 %v729
        %v1872 = vpop.f32.mrf.mxu0
        %v1873 = vadd.f32 %v1712, %v1872
        %v1874 = vpop.f32.mrf.mxu0
        %v1875 = vpop.f32.mrf.mxu0
        %v1876 = vadd.f32 %v1715, %v1875
        %v1877 = vpop.f32.mrf.mxu0
        %1878 = vmatprep.mubr.bf16.mxu0 %v746
        %1879 = vmatmul.mubr.bf16.gmra.mxu0 %v745
        %v1880 = vpop.f32.mrf.mxu0
        %v1881 = vadd.f32 %v1720, %v1880
        %v1882 = vpop.f32.mrf.mxu0
        %v1883 = vpop.f32.mrf.mxu0
        %v1884 = vadd.f32 %v1723, %v1883
        %v1885 = vpop.f32.mrf.mxu0
        %1886 = vmatprep.mubr.bf16.mxu0 %v762
        %1887 = vmatmul.mubr.bf16.gmra.mxu0 %v761
        %v1888 = vpop.f32.mrf.mxu0
        %v1889 = vadd.f32 %v1728, %v1888
        %v1890 = vpop.f32.mrf.mxu0
        %v1891 = vpop.f32.mrf.mxu0
        %v1892 = vadd.f32 %v1731, %v1891
        %v1893 = vpop.f32.mrf.mxu0
        %1894 = vmatprep.mubr.bf16.mxu0 %v778
        %1895 = vmatmul.mubr.bf16.gmra.mxu0 %v777
        %v1896 = vpop.f32.mrf.mxu0
        %v1897 = vadd.f32 %v1736, %v1896
        %v1898 = vpop.f32.mrf.mxu0
        %v1899 = vpop.f32.mrf.mxu0
        %v1900 = vadd.f32 %v1739, %v1899
        %v1901 = vpop.f32.mrf.mxu0
        %1902 = vmatprep.mubr.bf16.mxu0 %v794
        %1903 = vmatmul.mubr.bf16.gmra.mxu0 %v793
        %v1904 = vpop.f32.mrf.mxu0
        %v1905 = vadd.f32 %v1744, %v1904
        %v1906 = vpop.f32.mrf.mxu0
        %v1907 = vpop.f32.mrf.mxu0
        %v1908 = vadd.f32 %v1747, %v1907
        %v1909 = vpop.f32.mrf.mxu0
        %1910 = vmatprep.mubr.bf16.mxu0 %v810
        %1911 = vmatmul.mubr.bf16.gmra.mxu0 %v809
        %v1912 = vpop.f32.mrf.mxu0
        %v1913 = vadd.f32 %v1752, %v1912
        %v1914 = vpop.f32.mrf.mxu0
        %v1915 = vpop.f32.mrf.mxu0
        %v1916 = vadd.f32 %v1755, %v1915
        %v1917 = vpop.f32.mrf.mxu0
        %1918 = vmatprep.mubr.bf16.mxu0 %v826
        %1919 = vmatmul.mubr.bf16.gmra.mxu0 %v825
        %v1920 = vpop.f32.mrf.mxu0
        %v1921 = vadd.f32 %v1760, %v1920
        %v1922 = vpop.f32.mrf.mxu0
        %v1923 = vpop.f32.mrf.mxu0
        %v1924 = vadd.f32 %v1763, %v1923
        %v1925 = vpop.f32.mrf.mxu0
        %1926 = vmatprep.mubr.bf16.mxu0 %v842
        %1927 = vmatmul.mubr.bf16.gmra.mxu0 %v841
        %v1928 = vpop.f32.mrf.mxu0
        %v1929 = vadd.f32 %v1768, %v1928
        %v1930 = vpop.f32.mrf.mxu0
        %v1931 = vpop.f32.mrf.mxu0
        %v1932 = vadd.f32 %v1771, %v1931
        %v1933 = vpop.f32.mrf.mxu0
        %1934 = vmatprep.mubr.bf16.mxu0 %v858
        %1935 = vmatmul.mubr.bf16.gmra.mxu0 %v857
        %v1936 = vpop.f32.mrf.mxu0
        %v1937 = vadd.f32 %v1776, %v1936
        %v1938 = vpop.f32.mrf.mxu0
        %v1939 = vpop.f32.mrf.mxu0
        %v1940 = vadd.f32 %v1779, %v1939
        %v1941 = vpop.f32.mrf.mxu0
        %1942 = vmatprep.mubr.bf16.mxu0 %v874
        %1943 = vmatmul.mubr.bf16.gmra.mxu0 %v873
        %v1944 = vpop.f32.mrf.mxu0
        %v1945 = vadd.f32 %v1784, %v1944
        %v1946 = vpop.f32.mrf.mxu0
        %v1947 = vpop.f32.mrf.mxu0
        %v1948 = vadd.f32 %v1787, %v1947
        %v1949 = vpop.f32.mrf.mxu0
        %1950 = vmatprep.mubr.bf16.mxu0 %v890
        %1951 = vmatmul.mubr.bf16.gmra.mxu0 %v889
        %v1952 = vpop.f32.mrf.mxu0
        %v1953 = vadd.f32 %v1792, %v1952
        %v1954 = vpop.f32.mrf.mxu0
        %v1955 = vpop.f32.mrf.mxu0
        %v1956 = vadd.f32 %v1795, %v1955
        %v1957 = vpop.f32.mrf.mxu0
        %1958 = vmatprep.mubr.bf16.mxu0 %v906
        %1959 = vmatmul.mubr.bf16.gmra.mxu0 %v905
        %v1960 = vpop.f32.mrf.mxu0
        %v1961 = vadd.f32 %v1800, %v1960
        %v1962 = vpop.f32.mrf.mxu0
        %v1963 = vpop.f32.mrf.mxu0
        %v1964 = vadd.f32 %v1803, %v1963
        %v1965 = vpop.f32.mrf.mxu0
        %1966 = vmatprep.mubr.bf16.mxu0 %v922
        %1967 = vmatmul.mubr.bf16.gmra.mxu0 %v921
        %v1968 = vpop.f32.mrf.mxu0
        %v1969 = vadd.f32 %v1808, %v1968
        %v1970 = vpop.f32.mrf.mxu0
        %v1971 = vpop.f32.mrf.mxu0
        %v1972 = vadd.f32 %v1811, %v1971
        %v1973 = vpop.f32.mrf.mxu0
        %1974 = vmatprep.mubr.bf16.mxu0 %v938
        %1975 = vmatmul.mubr.bf16.gmra.mxu0 %v937
        %v1976 = vpop.f32.mrf.mxu0
        %v1977 = vadd.f32 %v1816, %v1976
        %v1978 = vpop.f32.mrf.mxu0
        %v1979 = vpop.f32.mrf.mxu0
        %v1980 = vadd.f32 %v1819, %v1979
        %v1981 = vpop.f32.mrf.mxu0
        %1982 = vmatprep.mubr.bf16.mxu0 %v954
        %1983 = vmatmul.mubr.bf16.gmra.mxu0 %v953
        %v1984 = vpop.f32.mrf.mxu0
        %v1985 = vadd.f32 %v1824, %v1984
        %v1986 = vpop.f32.mrf.mxu0
        %v1987 = vpop.f32.mrf.mxu0
        %v1988 = vadd.f32 %v1827, %v1987
        %v1989 = vpop.f32.mrf.mxu0
        %1990 = vdwg.mxu0
        %1991 = vmatprep.subr.bf16.mxu0 0
        %1992 = vmatpush1.bf16.msra.mxu0 %v1290
        %1993 = vmatprep.subr.bf16.mxu0 0
        %1994 = vmatpush1.bf16.msra.mxu0 %v1289
        %1995 = vmatprep.subr.bf16.mxu0 0
        %1996 = vmatpush1.bf16.msra.mxu0 %v1288
        %1997 = vmatprep.subr.bf16.mxu0 0
        %1998 = vmatpush1.bf16.msra.mxu0 %v1287
        %1999 = vmatprep.subr.bf16.mxu0 0
        %2000 = vmatpush1.bf16.msra.mxu0 %v1286
        %2001 = vmatprep.subr.bf16.mxu0 0
        %2002 = vmatpush1.bf16.msra.mxu0 %v1285
        %2003 = vmatprep.subr.bf16.mxu0 0
        %2004 = vmatpush1.bf16.msra.mxu0 %v1284
        %2005 = vmatprep.subr.bf16.mxu0 0
        %2006 = vmatpush1.bf16.msra.mxu0 %v1283
        %2007 = vmatprep.subr.bf16.mxu0 0
        %2008 = vmatpush2.bf16.msra.mxu0 %v1298
        %2009 = vmatprep.subr.bf16.mxu0 0
        %2010 = vmatpush2.bf16.msra.mxu0 %v1297
        %2011 = vmatprep.subr.bf16.mxu0 0
        %2012 = vmatpush2.bf16.msra.mxu0 %v1296
        %2013 = vmatprep.subr.bf16.mxu0 0
        %2014 = vmatpush2.bf16.msra.mxu0 %v1295
        %2015 = vmatprep.subr.bf16.mxu0 0
        %2016 = vmatpush2.bf16.msra.mxu0 %v1294
        %2017 = vmatprep.subr.bf16.mxu0 0
        %2018 = vmatpush2.bf16.msra.mxu0 %v1293
        %2019 = vmatprep.subr.bf16.mxu0 0
        %2020 = vmatpush2.bf16.msra.mxu0 %v1292
        %2021 = vmatprep.subr.bf16.mxu0 0
        %2022 = vmatpush2.bf16.msra.mxu0 %v1291
        %2023 = vmatprep.mubr.bf16.mxu0 %v716
        %2024 = vmatmul.mubr.bf16.gmra.mxu0 %v715
        %v2025 = vpop.f32.mrf.mxu0
        %v2026 = vadd.f32 %v1865, %v2025
        %v2027 = vpop.f32.mrf.mxu0
        %v2028 = vpop.f32.mrf.mxu0
        %v2029 = vadd.f32 %v1868, %v2028
        %v2030 = vpop.f32.mrf.mxu0
        %2031 = vmatprep.mubr.bf16.mxu0 %v732
        %2032 = vmatmul.mubr.bf16.gmra.mxu0 %v731
        %v2033 = vpop.f32.mrf.mxu0
        %v2034 = vadd.f32 %v1873, %v2033
        %v2035 = vpop.f32.mrf.mxu0
        %v2036 = vpop.f32.mrf.mxu0
        %v2037 = vadd.f32 %v1876, %v2036
        %v2038 = vpop.f32.mrf.mxu0
        %2039 = vmatprep.mubr.bf16.mxu0 %v748
        %2040 = vmatmul.mubr.bf16.gmra.mxu0 %v747
        %v2041 = vpop.f32.mrf.mxu0
        %v2042 = vadd.f32 %v1881, %v2041
        %v2043 = vpop.f32.mrf.mxu0
        %v2044 = vpop.f32.mrf.mxu0
        %v2045 = vadd.f32 %v1884, %v2044
        %v2046 = vpop.f32.mrf.mxu0
        %2047 = vmatprep.mubr.bf16.mxu0 %v764
        %2048 = vmatmul.mubr.bf16.gmra.mxu0 %v763
        %v2049 = vpop.f32.mrf.mxu0
        %v2050 = vadd.f32 %v1889, %v2049
        %v2051 = vpop.f32.mrf.mxu0
        %v2052 = vpop.f32.mrf.mxu0
        %v2053 = vadd.f32 %v1892, %v2052
        %v2054 = vpop.f32.mrf.mxu0
        %2055 = vmatprep.mubr.bf16.mxu0 %v780
        %2056 = vmatmul.mubr.bf16.gmra.mxu0 %v779
        %v2057 = vpop.f32.mrf.mxu0
        %v2058 = vadd.f32 %v1897, %v2057
        %v2059 = vpop.f32.mrf.mxu0
        %v2060 = vpop.f32.mrf.mxu0
        %v2061 = vadd.f32 %v1900, %v2060
        %v2062 = vpop.f32.mrf.mxu0
        %2063 = vmatprep.mubr.bf16.mxu0 %v796
        %2064 = vmatmul.mubr.bf16.gmra.mxu0 %v795
        %v2065 = vpop.f32.mrf.mxu0
        %v2066 = vadd.f32 %v1905, %v2065
        %v2067 = vpop.f32.mrf.mxu0
        %v2068 = vpop.f32.mrf.mxu0
        %v2069 = vadd.f32 %v1908, %v2068
        %v2070 = vpop.f32.mrf.mxu0
        %2071 = vmatprep.mubr.bf16.mxu0 %v812
        %2072 = vmatmul.mubr.bf16.gmra.mxu0 %v811
        %v2073 = vpop.f32.mrf.mxu0
        %v2074 = vadd.f32 %v1913, %v2073
        %v2075 = vpop.f32.mrf.mxu0
        %v2076 = vpop.f32.mrf.mxu0
        %v2077 = vadd.f32 %v1916, %v2076
        %v2078 = vpop.f32.mrf.mxu0
        %2079 = vmatprep.mubr.bf16.mxu0 %v828
        %2080 = vmatmul.mubr.bf16.gmra.mxu0 %v827
        %v2081 = vpop.f32.mrf.mxu0
        %v2082 = vadd.f32 %v1921, %v2081
        %v2083 = vpop.f32.mrf.mxu0
        %v2084 = vpop.f32.mrf.mxu0
        %v2085 = vadd.f32 %v1924, %v2084
        %v2086 = vpop.f32.mrf.mxu0
        %2087 = vmatprep.mubr.bf16.mxu0 %v844
        %2088 = vmatmul.mubr.bf16.gmra.mxu0 %v843
        %v2089 = vpop.f32.mrf.mxu0
        %v2090 = vadd.f32 %v1929, %v2089
        %v2091 = vpop.f32.mrf.mxu0
        %v2092 = vpop.f32.mrf.mxu0
        %v2093 = vadd.f32 %v1932, %v2092
        %v2094 = vpop.f32.mrf.mxu0
        %2095 = vmatprep.mubr.bf16.mxu0 %v860
        %2096 = vmatmul.mubr.bf16.gmra.mxu0 %v859
        %v2097 = vpop.f32.mrf.mxu0
        %v2098 = vadd.f32 %v1937, %v2097
        %v2099 = vpop.f32.mrf.mxu0
        %v2100 = vpop.f32.mrf.mxu0
        %v2101 = vadd.f32 %v1940, %v2100
        %v2102 = vpop.f32.mrf.mxu0
        %2103 = vmatprep.mubr.bf16.mxu0 %v876
        %2104 = vmatmul.mubr.bf16.gmra.mxu0 %v875
        %v2105 = vpop.f32.mrf.mxu0
        %v2106 = vadd.f32 %v1945, %v2105
        %v2107 = vpop.f32.mrf.mxu0
        %v2108 = vpop.f32.mrf.mxu0
        %v2109 = vadd.f32 %v1948, %v2108
        %v2110 = vpop.f32.mrf.mxu0
        %2111 = vmatprep.mubr.bf16.mxu0 %v892
        %2112 = vmatmul.mubr.bf16.gmra.mxu0 %v891
        %v2113 = vpop.f32.mrf.mxu0
        %v2114 = vadd.f32 %v1953, %v2113
        %v2115 = vpop.f32.mrf.mxu0
        %v2116 = vpop.f32.mrf.mxu0
        %v2117 = vadd.f32 %v1956, %v2116
        %v2118 = vpop.f32.mrf.mxu0
        %2119 = vmatprep.mubr.bf16.mxu0 %v908
        %2120 = vmatmul.mubr.bf16.gmra.mxu0 %v907
        %v2121 = vpop.f32.mrf.mxu0
        %v2122 = vadd.f32 %v1961, %v2121
        %v2123 = vpop.f32.mrf.mxu0
        %v2124 = vpop.f32.mrf.mxu0
        %v2125 = vadd.f32 %v1964, %v2124
        %v2126 = vpop.f32.mrf.mxu0
        %2127 = vmatprep.mubr.bf16.mxu0 %v924
        %2128 = vmatmul.mubr.bf16.gmra.mxu0 %v923
        %v2129 = vpop.f32.mrf.mxu0
        %v2130 = vadd.f32 %v1969, %v2129
        %v2131 = vpop.f32.mrf.mxu0
        %v2132 = vpop.f32.mrf.mxu0
        %v2133 = vadd.f32 %v1972, %v2132
        %v2134 = vpop.f32.mrf.mxu0
        %2135 = vmatprep.mubr.bf16.mxu0 %v940
        %2136 = vmatmul.mubr.bf16.gmra.mxu0 %v939
        %v2137 = vpop.f32.mrf.mxu0
        %v2138 = vadd.f32 %v1977, %v2137
        %v2139 = vpop.f32.mrf.mxu0
        %v2140 = vpop.f32.mrf.mxu0
        %v2141 = vadd.f32 %v1980, %v2140
        %v2142 = vpop.f32.mrf.mxu0
        %2143 = vmatprep.mubr.bf16.mxu0 %v956
        %2144 = vmatmul.mubr.bf16.gmra.mxu0 %v955
        %v2145 = vpop.f32.mrf.mxu0
        %v2146 = vadd.f32 %v1985, %v2145
        %v2147 = vpop.f32.mrf.mxu0
        %v2148 = vpop.f32.mrf.mxu0
        %v2149 = vadd.f32 %v1988, %v2148
        %v2150 = vpop.f32.mrf.mxu0
        %2151 = vdwg.mxu0
        %2152 = vmatprep.subr.bf16.mxu0 0
        %2153 = vmatpush1.bf16.msra.mxu0 %v1306
        %2154 = vmatprep.subr.bf16.mxu0 0
        %2155 = vmatpush1.bf16.msra.mxu0 %v1305
        %2156 = vmatprep.subr.bf16.mxu0 0
        %2157 = vmatpush1.bf16.msra.mxu0 %v1304
        %2158 = vmatprep.subr.bf16.mxu0 0
        %2159 = vmatpush1.bf16.msra.mxu0 %v1303
        %2160 = vmatprep.subr.bf16.mxu0 0
        %2161 = vmatpush1.bf16.msra.mxu0 %v1302
        %2162 = vmatprep.subr.bf16.mxu0 0
        %2163 = vmatpush1.bf16.msra.mxu0 %v1301
        %2164 = vmatprep.subr.bf16.mxu0 0
        %2165 = vmatpush1.bf16.msra.mxu0 %v1300
        %2166 = vmatprep.subr.bf16.mxu0 0
        %2167 = vmatpush1.bf16.msra.mxu0 %v1299
        %2168 = vmatprep.subr.bf16.mxu0 0
        %2169 = vmatpush2.bf16.msra.mxu0 %v1314
        %2170 = vmatprep.subr.bf16.mxu0 0
        %2171 = vmatpush2.bf16.msra.mxu0 %v1313
        %2172 = vmatprep.subr.bf16.mxu0 0
        %2173 = vmatpush2.bf16.msra.mxu0 %v1312
        %2174 = vmatprep.subr.bf16.mxu0 0
        %2175 = vmatpush2.bf16.msra.mxu0 %v1311
        %2176 = vmatprep.subr.bf16.mxu0 0
        %2177 = vmatpush2.bf16.msra.mxu0 %v1310
        %2178 = vmatprep.subr.bf16.mxu0 0
        %2179 = vmatpush2.bf16.msra.mxu0 %v1309
        %2180 = vmatprep.subr.bf16.mxu0 0
        %2181 = vmatpush2.bf16.msra.mxu0 %v1308
        %2182 = vmatprep.subr.bf16.mxu0 0
        %2183 = vmatpush2.bf16.msra.mxu0 %v1307
        %2184 = vmatprep.mubr.bf16.mxu0 %v718
        %2185 = vmatmul.mubr.bf16.gmra.mxu0 %v717
        %v2186 = vpop.f32.mrf.mxu0
        %v2187 = vadd.f32 %v2026, %v2186
        %v2188 = vpop.f32.mrf.mxu0
        %v2189 = vpop.f32.mrf.mxu0
        %v2190 = vadd.f32 %v2029, %v2189
        %v2191 = vpop.f32.mrf.mxu0
        %2192 = vmatprep.mubr.bf16.mxu0 %v734
        %2193 = vmatmul.mubr.bf16.gmra.mxu0 %v733
        %v2194 = vpop.f32.mrf.mxu0
        %v2195 = vadd.f32 %v2034, %v2194
        %v2196 = vpop.f32.mrf.mxu0
        %v2197 = vpop.f32.mrf.mxu0
        %v2198 = vadd.f32 %v2037, %v2197
        %v2199 = vpop.f32.mrf.mxu0
        %2200 = vmatprep.mubr.bf16.mxu0 %v750
        %2201 = vmatmul.mubr.bf16.gmra.mxu0 %v749
        %v2202 = vpop.f32.mrf.mxu0
        %v2203 = vadd.f32 %v2042, %v2202
        %v2204 = vpop.f32.mrf.mxu0
        %v2205 = vpop.f32.mrf.mxu0
        %v2206 = vadd.f32 %v2045, %v2205
        %v2207 = vpop.f32.mrf.mxu0
        %2208 = vmatprep.mubr.bf16.mxu0 %v766
        %2209 = vmatmul.mubr.bf16.gmra.mxu0 %v765
        %v2210 = vpop.f32.mrf.mxu0
        %v2211 = vadd.f32 %v2050, %v2210
        %v2212 = vpop.f32.mrf.mxu0
        %v2213 = vpop.f32.mrf.mxu0
        %v2214 = vadd.f32 %v2053, %v2213
        %v2215 = vpop.f32.mrf.mxu0
        %2216 = vmatprep.mubr.bf16.mxu0 %v782
        %2217 = vmatmul.mubr.bf16.gmra.mxu0 %v781
        %v2218 = vpop.f32.mrf.mxu0
        %v2219 = vadd.f32 %v2058, %v2218
        %v2220 = vpop.f32.mrf.mxu0
        %v2221 = vpop.f32.mrf.mxu0
        %v2222 = vadd.f32 %v2061, %v2221
        %v2223 = vpop.f32.mrf.mxu0
        %2224 = vmatprep.mubr.bf16.mxu0 %v798
        %2225 = vmatmul.mubr.bf16.gmra.mxu0 %v797
        %v2226 = vpop.f32.mrf.mxu0
        %v2227 = vadd.f32 %v2066, %v2226
        %v2228 = vpop.f32.mrf.mxu0
        %v2229 = vpop.f32.mrf.mxu0
        %v2230 = vadd.f32 %v2069, %v2229
        %v2231 = vpop.f32.mrf.mxu0
        %2232 = vmatprep.mubr.bf16.mxu0 %v814
        %2233 = vmatmul.mubr.bf16.gmra.mxu0 %v813
        %v2234 = vpop.f32.mrf.mxu0
        %v2235 = vadd.f32 %v2074, %v2234
        %v2236 = vpop.f32.mrf.mxu0
        %v2237 = vpop.f32.mrf.mxu0
        %v2238 = vadd.f32 %v2077, %v2237
        %v2239 = vpop.f32.mrf.mxu0
        %2240 = vmatprep.mubr.bf16.mxu0 %v830
        %2241 = vmatmul.mubr.bf16.gmra.mxu0 %v829
        %v2242 = vpop.f32.mrf.mxu0
        %v2243 = vadd.f32 %v2082, %v2242
        %v2244 = vpop.f32.mrf.mxu0
        %v2245 = vpop.f32.mrf.mxu0
        %v2246 = vadd.f32 %v2085, %v2245
        %v2247 = vpop.f32.mrf.mxu0
        %2248 = vmatprep.mubr.bf16.mxu0 %v846
        %2249 = vmatmul.mubr.bf16.gmra.mxu0 %v845
        %v2250 = vpop.f32.mrf.mxu0
        %v2251 = vadd.f32 %v2090, %v2250
        %v2252 = vpop.f32.mrf.mxu0
        %v2253 = vpop.f32.mrf.mxu0
        %v2254 = vadd.f32 %v2093, %v2253
        %v2255 = vpop.f32.mrf.mxu0
        %2256 = vmatprep.mubr.bf16.mxu0 %v862
        %2257 = vmatmul.mubr.bf16.gmra.mxu0 %v861
        %v2258 = vpop.f32.mrf.mxu0
        %v2259 = vadd.f32 %v2098, %v2258
        %v2260 = vpop.f32.mrf.mxu0
        %v2261 = vpop.f32.mrf.mxu0
        %v2262 = vadd.f32 %v2101, %v2261
        %v2263 = vpop.f32.mrf.mxu0
        %2264 = vmatprep.mubr.bf16.mxu0 %v878
        %2265 = vmatmul.mubr.bf16.gmra.mxu0 %v877
        %v2266 = vpop.f32.mrf.mxu0
        %v2267 = vadd.f32 %v2106, %v2266
        %v2268 = vpop.f32.mrf.mxu0
        %v2269 = vpop.f32.mrf.mxu0
        %v2270 = vadd.f32 %v2109, %v2269
        %v2271 = vpop.f32.mrf.mxu0
        %2272 = vmatprep.mubr.bf16.mxu0 %v894
        %2273 = vmatmul.mubr.bf16.gmra.mxu0 %v893
        %v2274 = vpop.f32.mrf.mxu0
        %v2275 = vadd.f32 %v2114, %v2274
        %v2276 = vpop.f32.mrf.mxu0
        %v2277 = vpop.f32.mrf.mxu0
        %v2278 = vadd.f32 %v2117, %v2277
        %v2279 = vpop.f32.mrf.mxu0
        %2280 = vmatprep.mubr.bf16.mxu0 %v910
        %2281 = vmatmul.mubr.bf16.gmra.mxu0 %v909
        %v2282 = vpop.f32.mrf.mxu0
        %v2283 = vadd.f32 %v2122, %v2282
        %v2284 = vpop.f32.mrf.mxu0
        %v2285 = vpop.f32.mrf.mxu0
        %v2286 = vadd.f32 %v2125, %v2285
        %v2287 = vpop.f32.mrf.mxu0
        %2288 = vmatprep.mubr.bf16.mxu0 %v926
        %2289 = vmatmul.mubr.bf16.gmra.mxu0 %v925
        %v2290 = vpop.f32.mrf.mxu0
        %v2291 = vadd.f32 %v2130, %v2290
        %v2292 = vpop.f32.mrf.mxu0
        %v2293 = vpop.f32.mrf.mxu0
        %v2294 = vadd.f32 %v2133, %v2293
        %v2295 = vpop.f32.mrf.mxu0
        %2296 = vmatprep.mubr.bf16.mxu0 %v942
        %2297 = vmatmul.mubr.bf16.gmra.mxu0 %v941
        %v2298 = vpop.f32.mrf.mxu0
        %v2299 = vadd.f32 %v2138, %v2298
        %v2300 = vpop.f32.mrf.mxu0
        %v2301 = vpop.f32.mrf.mxu0
        %v2302 = vadd.f32 %v2141, %v2301
        %v2303 = vpop.f32.mrf.mxu0
        %2304 = vmatprep.mubr.bf16.mxu0 %v958
        %2305 = vmatmul.mubr.bf16.gmra.mxu0 %v957
        %v2306 = vpop.f32.mrf.mxu0
        %v2307 = vadd.f32 %v2146, %v2306
        %v2308 = vpop.f32.mrf.mxu0
        %v2309 = vpop.f32.mrf.mxu0
        %v2310 = vadd.f32 %v2149, %v2309
        %v2311 = vpop.f32.mrf.mxu0
        %2312 = vdwg.mxu0
        %2313 = vmatprep.subr.bf16.mxu0 0
        %2314 = vmatpush1.bf16.msra.mxu0 %v1322
        %2315 = vmatprep.subr.bf16.mxu0 0
        %2316 = vmatpush1.bf16.msra.mxu0 %v1321
        %2317 = vmatprep.subr.bf16.mxu0 0
        %2318 = vmatpush1.bf16.msra.mxu0 %v1320
        %2319 = vmatprep.subr.bf16.mxu0 0
        %2320 = vmatpush1.bf16.msra.mxu0 %v1319
        %2321 = vmatprep.subr.bf16.mxu0 0
        %2322 = vmatpush1.bf16.msra.mxu0 %v1318
        %2323 = vmatprep.subr.bf16.mxu0 0
        %2324 = vmatpush1.bf16.msra.mxu0 %v1317
        %2325 = vmatprep.subr.bf16.mxu0 0
        %2326 = vmatpush1.bf16.msra.mxu0 %v1316
        %2327 = vmatprep.subr.bf16.mxu0 0
        %2328 = vmatpush1.bf16.msra.mxu0 %v1315
        %2329 = vmatprep.subr.bf16.mxu0 0
        %2330 = vmatpush2.bf16.msra.mxu0 %v1330
        %2331 = vmatprep.subr.bf16.mxu0 0
        %2332 = vmatpush2.bf16.msra.mxu0 %v1329
        %2333 = vmatprep.subr.bf16.mxu0 0
        %2334 = vmatpush2.bf16.msra.mxu0 %v1328
        %2335 = vmatprep.subr.bf16.mxu0 0
        %2336 = vmatpush2.bf16.msra.mxu0 %v1327
        %2337 = vmatprep.subr.bf16.mxu0 0
        %2338 = vmatpush2.bf16.msra.mxu0 %v1326
        %2339 = vmatprep.subr.bf16.mxu0 0
        %2340 = vmatpush2.bf16.msra.mxu0 %v1325
        %2341 = vmatprep.subr.bf16.mxu0 0
        %2342 = vmatpush2.bf16.msra.mxu0 %v1324
        %2343 = vmatprep.subr.bf16.mxu0 0
        %2344 = vmatpush2.bf16.msra.mxu0 %v1323
        %2345 = vmatprep.mubr.bf16.mxu0 %v720
        %2346 = vmatmul.mubr.bf16.gmra.mxu0 %v719
        %v2347 = vpop.f32.mrf.mxu0
        %v2348 = vadd.f32 %v2187, %v2347
        %v2349 = vpop.f32.mrf.mxu0
        %v2350 = vpop.f32.mrf.mxu0
        %v2351 = vadd.f32 %v2190, %v2350
        %v2352 = vpop.f32.mrf.mxu0
        %2353 = vmatprep.mubr.bf16.mxu0 %v736
        %2354 = vmatmul.mubr.bf16.gmra.mxu0 %v735
        %v2355 = vpop.f32.mrf.mxu0
        %v2356 = vadd.f32 %v2195, %v2355
        %v2357 = vpop.f32.mrf.mxu0
        %v2358 = vpop.f32.mrf.mxu0
        %v2359 = vadd.f32 %v2198, %v2358
        %v2360 = vpop.f32.mrf.mxu0
        %2361 = vmatprep.mubr.bf16.mxu0 %v752
        %2362 = vmatmul.mubr.bf16.gmra.mxu0 %v751
        %v2363 = vpop.f32.mrf.mxu0
        %v2364 = vadd.f32 %v2203, %v2363
        %v2365 = vpop.f32.mrf.mxu0
        %v2366 = vpop.f32.mrf.mxu0
        %v2367 = vadd.f32 %v2206, %v2366
        %v2368 = vpop.f32.mrf.mxu0
        %2369 = vmatprep.mubr.bf16.mxu0 %v768
        %2370 = vmatmul.mubr.bf16.gmra.mxu0 %v767
        %v2371 = vpop.f32.mrf.mxu0
        %v2372 = vadd.f32 %v2211, %v2371
        %v2373 = vpop.f32.mrf.mxu0
        %v2374 = vpop.f32.mrf.mxu0
        %v2375 = vadd.f32 %v2214, %v2374
        %v2376 = vpop.f32.mrf.mxu0
        %2377 = vmatprep.mubr.bf16.mxu0 %v784
        %2378 = vmatmul.mubr.bf16.gmra.mxu0 %v783
        %v2379 = vpop.f32.mrf.mxu0
        %v2380 = vadd.f32 %v2219, %v2379
        %v2381 = vpop.f32.mrf.mxu0
        %v2382 = vpop.f32.mrf.mxu0
        %v2383 = vadd.f32 %v2222, %v2382
        %v2384 = vpop.f32.mrf.mxu0
        %2385 = vmatprep.mubr.bf16.mxu0 %v800
        %2386 = vmatmul.mubr.bf16.gmra.mxu0 %v799
        %v2387 = vpop.f32.mrf.mxu0
        %v2388 = vadd.f32 %v2227, %v2387
        %v2389 = vpop.f32.mrf.mxu0
        %v2390 = vpop.f32.mrf.mxu0
        %v2391 = vadd.f32 %v2230, %v2390
        %v2392 = vpop.f32.mrf.mxu0
        %2393 = vmatprep.mubr.bf16.mxu0 %v816
        %2394 = vmatmul.mubr.bf16.gmra.mxu0 %v815
        %v2395 = vpop.f32.mrf.mxu0
        %v2396 = vadd.f32 %v2235, %v2395
        %v2397 = vpop.f32.mrf.mxu0
        %v2398 = vpop.f32.mrf.mxu0
        %v2399 = vadd.f32 %v2238, %v2398
        %v2400 = vpop.f32.mrf.mxu0
        %2401 = vmatprep.mubr.bf16.mxu0 %v832
        %2402 = vmatmul.mubr.bf16.gmra.mxu0 %v831
        %v2403 = vpop.f32.mrf.mxu0
        %v2404 = vadd.f32 %v2243, %v2403
        %v2405 = vpop.f32.mrf.mxu0
        %v2406 = vpop.f32.mrf.mxu0
        %v2407 = vadd.f32 %v2246, %v2406
        %v2408 = vpop.f32.mrf.mxu0
        %2409 = vmatprep.mubr.bf16.mxu0 %v848
        %2410 = vmatmul.mubr.bf16.gmra.mxu0 %v847
        %v2411 = vpop.f32.mrf.mxu0
        %v2412 = vadd.f32 %v2251, %v2411
        %v2413 = vpop.f32.mrf.mxu0
        %v2414 = vpop.f32.mrf.mxu0
        %v2415 = vadd.f32 %v2254, %v2414
        %v2416 = vpop.f32.mrf.mxu0
        %2417 = vmatprep.mubr.bf16.mxu0 %v864
        %2418 = vmatmul.mubr.bf16.gmra.mxu0 %v863
        %v2419 = vpop.f32.mrf.mxu0
        %v2420 = vadd.f32 %v2259, %v2419
        %v2421 = vpop.f32.mrf.mxu0
        %v2422 = vpop.f32.mrf.mxu0
        %v2423 = vadd.f32 %v2262, %v2422
        %v2424 = vpop.f32.mrf.mxu0
        %2425 = vmatprep.mubr.bf16.mxu0 %v880
        %2426 = vmatmul.mubr.bf16.gmra.mxu0 %v879
        %v2427 = vpop.f32.mrf.mxu0
        %v2428 = vadd.f32 %v2267, %v2427
        %v2429 = vpop.f32.mrf.mxu0
        %v2430 = vpop.f32.mrf.mxu0
        %v2431 = vadd.f32 %v2270, %v2430
        %v2432 = vpop.f32.mrf.mxu0
        %2433 = vmatprep.mubr.bf16.mxu0 %v896
        %2434 = vmatmul.mubr.bf16.gmra.mxu0 %v895
        %v2435 = vpop.f32.mrf.mxu0
        %v2436 = vadd.f32 %v2275, %v2435
        %v2437 = vpop.f32.mrf.mxu0
        %v2438 = vpop.f32.mrf.mxu0
        %v2439 = vadd.f32 %v2278, %v2438
        %v2440 = vpop.f32.mrf.mxu0
        %2441 = vmatprep.mubr.bf16.mxu0 %v912
        %2442 = vmatmul.mubr.bf16.gmra.mxu0 %v911
        %v2443 = vpop.f32.mrf.mxu0
        %v2444 = vadd.f32 %v2283, %v2443
        %v2445 = vpop.f32.mrf.mxu0
        %v2446 = vpop.f32.mrf.mxu0
        %v2447 = vadd.f32 %v2286, %v2446
        %v2448 = vpop.f32.mrf.mxu0
        %2449 = vmatprep.mubr.bf16.mxu0 %v928
        %2450 = vmatmul.mubr.bf16.gmra.mxu0 %v927
        %v2451 = vpop.f32.mrf.mxu0
        %v2452 = vadd.f32 %v2291, %v2451
        %v2453 = vpop.f32.mrf.mxu0
        %v2454 = vpop.f32.mrf.mxu0
        %v2455 = vadd.f32 %v2294, %v2454
        %v2456 = vpop.f32.mrf.mxu0
        %2457 = vmatprep.mubr.bf16.mxu0 %v944
        %2458 = vmatmul.mubr.bf16.gmra.mxu0 %v943
        %v2459 = vpop.f32.mrf.mxu0
        %v2460 = vadd.f32 %v2299, %v2459
        %v2461 = vpop.f32.mrf.mxu0
        %v2462 = vpop.f32.mrf.mxu0
        %v2463 = vadd.f32 %v2302, %v2462
        %v2464 = vpop.f32.mrf.mxu0
        %2465 = vmatprep.mubr.bf16.mxu0 %v960
        %2466 = vmatmul.mubr.bf16.gmra.mxu0 %v959
        %v2467 = vpop.f32.mrf.mxu0
        %v2468 = vadd.f32 %v2307, %v2467
        %v2469 = vpop.f32.mrf.mxu0
        %v2470 = vpop.f32.mrf.mxu0
        %v2471 = vadd.f32 %v2310, %v2470
        %v2472 = vpop.f32.mrf.mxu0
        %2473 = vdwg.mxu0
        %2474 = vmatprep.subr.bf16.mxu0 0
        %2475 = vmatpush1.bf16.msra.mxu0 %v1338
        %2476 = vmatprep.subr.bf16.mxu0 0
        %2477 = vmatpush1.bf16.msra.mxu0 %v1337
        %2478 = vmatprep.subr.bf16.mxu0 0
        %2479 = vmatpush1.bf16.msra.mxu0 %v1336
        %2480 = vmatprep.subr.bf16.mxu0 0
        %2481 = vmatpush1.bf16.msra.mxu0 %v1335
        %2482 = vmatprep.subr.bf16.mxu0 0
        %2483 = vmatpush1.bf16.msra.mxu0 %v1334
        %2484 = vmatprep.subr.bf16.mxu0 0
        %2485 = vmatpush1.bf16.msra.mxu0 %v1333
        %2486 = vmatprep.subr.bf16.mxu0 0
        %2487 = vmatpush1.bf16.msra.mxu0 %v1332
        %2488 = vmatprep.subr.bf16.mxu0 0
        %2489 = vmatpush1.bf16.msra.mxu0 %v1331
        %2490 = vmatprep.subr.bf16.mxu0 0
        %2491 = vmatpush2.bf16.msra.mxu0 %v1346
        %2492 = vmatprep.subr.bf16.mxu0 0
        %2493 = vmatpush2.bf16.msra.mxu0 %v1345
        %2494 = vmatprep.subr.bf16.mxu0 0
        %2495 = vmatpush2.bf16.msra.mxu0 %v1344
        %2496 = vmatprep.subr.bf16.mxu0 0
        %2497 = vmatpush2.bf16.msra.mxu0 %v1343
        %2498 = vmatprep.subr.bf16.mxu0 0
        %2499 = vmatpush2.bf16.msra.mxu0 %v1342
        %2500 = vmatprep.subr.bf16.mxu0 0
        %2501 = vmatpush2.bf16.msra.mxu0 %v1341
        %2502 = vmatprep.subr.bf16.mxu0 0
        %2503 = vmatpush2.bf16.msra.mxu0 %v1340
        %2504 = vmatprep.subr.bf16.mxu0 0
        %2505 = vmatpush2.bf16.msra.mxu0 %v1339
        %2506 = vmatprep.mubr.bf16.mxu0 %v722
        %2507 = vmatmul.mubr.bf16.gmra.mxu0 %v721
        %v2508 = vpop.f32.mrf.mxu0
        %v2509 = vadd.f32 %v2348, %v2508
        %v2510 = vpop.f32.mrf.mxu0
        %v2511 = vpop.f32.mrf.mxu0
        %v2512 = vadd.f32 %v2351, %v2511
        %v2513 = vpop.f32.mrf.mxu0
        %2514 = vmatprep.mubr.bf16.mxu0 %v738
        %2515 = vmatmul.mubr.bf16.gmra.mxu0 %v737
        %v2516 = vpop.f32.mrf.mxu0
        %v2517 = vadd.f32 %v2356, %v2516
        %v2518 = vpop.f32.mrf.mxu0
        %v2519 = vpop.f32.mrf.mxu0
        %v2520 = vadd.f32 %v2359, %v2519
        %v2521 = vpop.f32.mrf.mxu0
        %2522 = vmatprep.mubr.bf16.mxu0 %v754
        %2523 = vmatmul.mubr.bf16.gmra.mxu0 %v753
        %v2524 = vpop.f32.mrf.mxu0
        %v2525 = vadd.f32 %v2364, %v2524
        %v2526 = vpop.f32.mrf.mxu0
        %v2527 = vpop.f32.mrf.mxu0
        %v2528 = vadd.f32 %v2367, %v2527
        %v2529 = vpop.f32.mrf.mxu0
        %2530 = vmatprep.mubr.bf16.mxu0 %v770
        %2531 = vmatmul.mubr.bf16.gmra.mxu0 %v769
        %v2532 = vpop.f32.mrf.mxu0
        %v2533 = vadd.f32 %v2372, %v2532
        %v2534 = vpop.f32.mrf.mxu0
        %v2535 = vpop.f32.mrf.mxu0
        %v2536 = vadd.f32 %v2375, %v2535
        %v2537 = vpop.f32.mrf.mxu0
        %2538 = vmatprep.mubr.bf16.mxu0 %v786
        %2539 = vmatmul.mubr.bf16.gmra.mxu0 %v785
        %v2540 = vpop.f32.mrf.mxu0
        %v2541 = vadd.f32 %v2380, %v2540
        %v2542 = vpop.f32.mrf.mxu0
        %v2543 = vpop.f32.mrf.mxu0
        %v2544 = vadd.f32 %v2383, %v2543
        %v2545 = vpop.f32.mrf.mxu0
        %2546 = vmatprep.mubr.bf16.mxu0 %v802
        %2547 = vmatmul.mubr.bf16.gmra.mxu0 %v801
        %v2548 = vpop.f32.mrf.mxu0
        %v2549 = vadd.f32 %v2388, %v2548
        %v2550 = vpop.f32.mrf.mxu0
        %v2551 = vpop.f32.mrf.mxu0
        %v2552 = vadd.f32 %v2391, %v2551
        %v2553 = vpop.f32.mrf.mxu0
        %2554 = vmatprep.mubr.bf16.mxu0 %v818
        %2555 = vmatmul.mubr.bf16.gmra.mxu0 %v817
        %v2556 = vpop.f32.mrf.mxu0
        %v2557 = vadd.f32 %v2396, %v2556
        %v2558 = vpop.f32.mrf.mxu0
        %v2559 = vpop.f32.mrf.mxu0
        %v2560 = vadd.f32 %v2399, %v2559
        %v2561 = vpop.f32.mrf.mxu0
        %2562 = vmatprep.mubr.bf16.mxu0 %v834
        %2563 = vmatmul.mubr.bf16.gmra.mxu0 %v833
        %v2564 = vpop.f32.mrf.mxu0
        %v2565 = vadd.f32 %v2404, %v2564
        %v2566 = vpop.f32.mrf.mxu0
        %v2567 = vpop.f32.mrf.mxu0
        %v2568 = vadd.f32 %v2407, %v2567
        %v2569 = vpop.f32.mrf.mxu0
        %2570 = vmatprep.mubr.bf16.mxu0 %v850
        %2571 = vmatmul.mubr.bf16.gmra.mxu0 %v849
        %v2572 = vpop.f32.mrf.mxu0
        %v2573 = vadd.f32 %v2412, %v2572
        %v2574 = vpop.f32.mrf.mxu0
        %v2575 = vpop.f32.mrf.mxu0
        %v2576 = vadd.f32 %v2415, %v2575
        %v2577 = vpop.f32.mrf.mxu0
        %2578 = vmatprep.mubr.bf16.mxu0 %v866
        %2579 = vmatmul.mubr.bf16.gmra.mxu0 %v865
        %v2580 = vpop.f32.mrf.mxu0
        %v2581 = vadd.f32 %v2420, %v2580
        %v2582 = vpop.f32.mrf.mxu0
        %v2583 = vpop.f32.mrf.mxu0
        %v2584 = vadd.f32 %v2423, %v2583
        %v2585 = vpop.f32.mrf.mxu0
        %2586 = vmatprep.mubr.bf16.mxu0 %v882
        %2587 = vmatmul.mubr.bf16.gmra.mxu0 %v881
        %v2588 = vpop.f32.mrf.mxu0
        %v2589 = vadd.f32 %v2428, %v2588
        %v2590 = vpop.f32.mrf.mxu0
        %v2591 = vpop.f32.mrf.mxu0
        %v2592 = vadd.f32 %v2431, %v2591
        %v2593 = vpop.f32.mrf.mxu0
        %2594 = vmatprep.mubr.bf16.mxu0 %v898
        %2595 = vmatmul.mubr.bf16.gmra.mxu0 %v897
        %v2596 = vpop.f32.mrf.mxu0
        %v2597 = vadd.f32 %v2436, %v2596
        %v2598 = vpop.f32.mrf.mxu0
        %v2599 = vpop.f32.mrf.mxu0
        %v2600 = vadd.f32 %v2439, %v2599
        %v2601 = vpop.f32.mrf.mxu0
        %2602 = vmatprep.mubr.bf16.mxu0 %v914
        %2603 = vmatmul.mubr.bf16.gmra.mxu0 %v913
        %v2604 = vpop.f32.mrf.mxu0
        %v2605 = vadd.f32 %v2444, %v2604
        %v2606 = vpop.f32.mrf.mxu0
        %v2607 = vpop.f32.mrf.mxu0
        %v2608 = vadd.f32 %v2447, %v2607
        %v2609 = vpop.f32.mrf.mxu0
        %2610 = vmatprep.mubr.bf16.mxu0 %v930
        %2611 = vmatmul.mubr.bf16.gmra.mxu0 %v929
        %v2612 = vpop.f32.mrf.mxu0
        %v2613 = vadd.f32 %v2452, %v2612
        %v2614 = vpop.f32.mrf.mxu0
        %v2615 = vpop.f32.mrf.mxu0
        %v2616 = vadd.f32 %v2455, %v2615
        %v2617 = vpop.f32.mrf.mxu0
        %2618 = vmatprep.mubr.bf16.mxu0 %v946
        %2619 = vmatmul.mubr.bf16.gmra.mxu0 %v945
        %v2620 = vpop.f32.mrf.mxu0
        %v2621 = vadd.f32 %v2460, %v2620
        %v2622 = vpop.f32.mrf.mxu0
        %v2623 = vpop.f32.mrf.mxu0
        %v2624 = vadd.f32 %v2463, %v2623
        %v2625 = vpop.f32.mrf.mxu0
        %2626 = vmatprep.mubr.bf16.mxu0 %v962
        %2627 = vmatmul.mubr.bf16.gmra.mxu0 %v961
        %v2628 = vpop.f32.mrf.mxu0
        %v2629 = vadd.f32 %v2468, %v2628
        %v2630 = vpop.f32.mrf.mxu0
        %v2631 = vpop.f32.mrf.mxu0
        %v2632 = vadd.f32 %v2471, %v2631
        %v2633 = vpop.f32.mrf.mxu0
        %2634 = vdwg.mxu0
        %vm2635 = vcmask 400384
        %v2636 = vsel %vm2635, %v2509, 0.0
        %2637 = vadd.xlane.f32.xlu0 %v2636
        %v2638 = vpop.xlane.xlu0 %2637
        %v2639 = vsel %vm2635, %v2512, 0.0
        %2640 = vadd.xlane.f32.xlu0 %v2639
        %v2641 = vpop.xlane.xlu0 %2640
        %v2642 = vsel %vm2635, %v2517, 0.0
        %2643 = vadd.xlane.f32.xlu0 %v2642
        %v2644 = vpop.xlane.xlu0 %2643
        %v2645 = vsel %vm2635, %v2520, 0.0
        %2646 = vadd.xlane.f32.xlu0 %v2645
        %v2647 = vpop.xlane.xlu0 %2646
        %v2648 = vsel %vm2635, %v2525, 0.0
        %2649 = vadd.xlane.f32.xlu0 %v2648
        %v2650 = vpop.xlane.xlu0 %2649
        %v2651 = vsel %vm2635, %v2528, 0.0
        %2652 = vadd.xlane.f32.xlu0 %v2651
        %v2653 = vpop.xlane.xlu0 %2652
        %v2654 = vsel %vm2635, %v2533, 0.0
        %2655 = vadd.xlane.f32.xlu0 %v2654
        %v2656 = vpop.xlane.xlu0 %2655
        %v2657 = vsel %vm2635, %v2536, 0.0
        %2658 = vadd.xlane.f32.xlu0 %v2657
        %v2659 = vpop.xlane.xlu0 %2658
        %v2660 = vsel %vm2635, %v2541, 0.0
        %2661 = vadd.xlane.f32.xlu0 %v2660
        %v2662 = vpop.xlane.xlu0 %2661
        %v2663 = vsel %vm2635, %v2544, 0.0
        %2664 = vadd.xlane.f32.xlu0 %v2663
        %v2665 = vpop.xlane.xlu0 %2664
        %v2666 = vsel %vm2635, %v2549, 0.0
        %2667 = vadd.xlane.f32.xlu0 %v2666
        %v2668 = vpop.xlane.xlu0 %2667
        %v2669 = vsel %vm2635, %v2552, 0.0
        %2670 = vadd.xlane.f32.xlu0 %v2669
        %v2671 = vpop.xlane.xlu0 %2670
        %v2672 = vsel %vm2635, %v2557, 0.0
        %2673 = vadd.xlane.f32.xlu0 %v2672
        %v2674 = vpop.xlane.xlu0 %2673
        %v2675 = vsel %vm2635, %v2560, 0.0
        %2676 = vadd.xlane.f32.xlu0 %v2675
        %v2677 = vpop.xlane.xlu0 %2676
        %v2678 = vsel %vm2635, %v2565, 0.0
        %2679 = vadd.xlane.f32.xlu0 %v2678
        %v2680 = vpop.xlane.xlu0 %2679
        %v2681 = vsel %vm2635, %v2568, 0.0
        %2682 = vadd.xlane.f32.xlu0 %v2681
        %v2683 = vpop.xlane.xlu0 %2682
        %v2684 = vsel %vm2635, %v2573, 0.0
        %2685 = vadd.xlane.f32.xlu0 %v2684
        %v2686 = vpop.xlane.xlu0 %2685
        %v2687 = vsel %vm2635, %v2576, 0.0
        %2688 = vadd.xlane.f32.xlu0 %v2687
        %v2689 = vpop.xlane.xlu0 %2688
        %v2690 = vsel %vm2635, %v2581, 0.0
        %2691 = vadd.xlane.f32.xlu0 %v2690
        %v2692 = vpop.xlane.xlu0 %2691
        %v2693 = vsel %vm2635, %v2584, 0.0
        %2694 = vadd.xlane.f32.xlu0 %v2693
        %v2695 = vpop.xlane.xlu0 %2694
        %v2696 = vsel %vm2635, %v2589, 0.0
        %2697 = vadd.xlane.f32.xlu0 %v2696
        %v2698 = vpop.xlane.xlu0 %2697
        %v2699 = vsel %vm2635, %v2592, 0.0
        %2700 = vadd.xlane.f32.xlu0 %v2699
        %v2701 = vpop.xlane.xlu0 %2700
        %v2702 = vsel %vm2635, %v2597, 0.0
        %2703 = vadd.xlane.f32.xlu0 %v2702
        %v2704 = vpop.xlane.xlu0 %2703
        %v2705 = vsel %vm2635, %v2600, 0.0
        %2706 = vadd.xlane.f32.xlu0 %v2705
        %v2707 = vpop.xlane.xlu0 %2706
        %v2708 = vsel %vm2635, %v2605, 0.0
        %2709 = vadd.xlane.f32.xlu0 %v2708
        %v2710 = vpop.xlane.xlu0 %2709
        %v2711 = vsel %vm2635, %v2608, 0.0
        %2712 = vadd.xlane.f32.xlu0 %v2711
        %v2713 = vpop.xlane.xlu0 %2712
        %v2714 = vsel %vm2635, %v2613, 0.0
        %2715 = vadd.xlane.f32.xlu0 %v2714
        %v2716 = vpop.xlane.xlu0 %2715
        %v2717 = vsel %vm2635, %v2616, 0.0
        %2718 = vadd.xlane.f32.xlu0 %v2717
        %v2719 = vpop.xlane.xlu0 %2718
        %v2720 = vsel %vm2635, %v2621, 0.0
        %2721 = vadd.xlane.f32.xlu0 %v2720
        %v2722 = vpop.xlane.xlu0 %2721
        %v2723 = vsel %vm2635, %v2624, 0.0
        %2724 = vadd.xlane.f32.xlu0 %v2723
        %v2725 = vpop.xlane.xlu0 %2724
        %v2726 = vsel %vm2635, %v2629, 0.0
        %2727 = vadd.xlane.f32.xlu0 %v2726
        %v2728 = vpop.xlane.xlu0 %2727
        %v2729 = vsel %vm2635, %v2632, 0.0
        %2730 = vadd.xlane.f32.xlu0 %v2729
        %v2731 = vpop.xlane.xlu0 %2730
        %v2732 = vrcp.pop 49.0
        %v2733 = vmul.f32 %v2638, %v2732
        %v2734 = vmul.f32 %v2641, %v2732
        %v2735 = vmul.f32 %v2644, %v2732
        %v2736 = vmul.f32 %v2647, %v2732
        %v2737 = vmul.f32 %v2650, %v2732
        %v2738 = vmul.f32 %v2653, %v2732
        %v2739 = vmul.f32 %v2656, %v2732
        %v2740 = vmul.f32 %v2659, %v2732
        %v2741 = vmul.f32 %v2662, %v2732
        %v2742 = vmul.f32 %v2665, %v2732
        %v2743 = vmul.f32 %v2668, %v2732
        %v2744 = vmul.f32 %v2671, %v2732
        %v2745 = vmul.f32 %v2674, %v2732
        %v2746 = vmul.f32 %v2677, %v2732
        %v2747 = vmul.f32 %v2680, %v2732
        %v2748 = vmul.f32 %v2683, %v2732
        %v2749 = vmul.f32 %v2686, %v2732
        %v2750 = vmul.f32 %v2689, %v2732
        %v2751 = vmul.f32 %v2692, %v2732
        %v2752 = vmul.f32 %v2695, %v2732
        %v2753 = vmul.f32 %v2698, %v2732
        %v2754 = vmul.f32 %v2701, %v2732
        %v2755 = vmul.f32 %v2704, %v2732
        %v2756 = vmul.f32 %v2707, %v2732
        %v2757 = vmul.f32 %v2710, %v2732
        %v2758 = vmul.f32 %v2713, %v2732
        %v2759 = vmul.f32 %v2716, %v2732
        %v2760 = vmul.f32 %v2719, %v2732
        %v2761 = vmul.f32 %v2722, %v2732
        %v2762 = vmul.f32 %v2725, %v2732
        %v2763 = vmul.f32 %v2728, %v2732
        %v2764 = vmul.f32 %v2731, %v2732
        %v2765 = vsub.f32 %v2509, %v2733
        %v2766 = vsub.f32 %v2512, %v2734
        %v2767 = vsub.f32 %v2517, %v2735
        %v2768 = vsub.f32 %v2520, %v2736
        %v2769 = vsub.f32 %v2525, %v2737
        %v2770 = vsub.f32 %v2528, %v2738
        %v2771 = vsub.f32 %v2533, %v2739
        %v2772 = vsub.f32 %v2536, %v2740
        %v2773 = vsub.f32 %v2541, %v2741
        %v2774 = vsub.f32 %v2544, %v2742
        %v2775 = vsub.f32 %v2549, %v2743
        %v2776 = vsub.f32 %v2552, %v2744
        %v2777 = vsub.f32 %v2557, %v2745
        %v2778 = vsub.f32 %v2560, %v2746
        %v2779 = vsub.f32 %v2565, %v2747
        %v2780 = vsub.f32 %v2568, %v2748
        %v2781 = vsub.f32 %v2573, %v2749
        %v2782 = vsub.f32 %v2576, %v2750
        %v2783 = vsub.f32 %v2581, %v2751
        %v2784 = vsub.f32 %v2584, %v2752
        %v2785 = vsub.f32 %v2589, %v2753
        %v2786 = vsub.f32 %v2592, %v2754
        %v2787 = vsub.f32 %v2597, %v2755
        %v2788 = vsub.f32 %v2600, %v2756
        %v2789 = vsub.f32 %v2605, %v2757
        %v2790 = vsub.f32 %v2608, %v2758
        %v2791 = vsub.f32 %v2613, %v2759
        %v2792 = vsub.f32 %v2616, %v2760
        %v2793 = vsub.f32 %v2621, %v2761
        %v2794 = vsub.f32 %v2624, %v2762
        %v2795 = vsub.f32 %v2629, %v2763
        %v2796 = vsub.f32 %v2632, %v2764
        %v2797 = vmul.f32 %v2765, %v2765
        %v2798 = vmul.f32 %v2766, %v2766
        %v2799 = vmul.f32 %v2767, %v2767
        %v2800 = vmul.f32 %v2768, %v2768
        %v2801 = vmul.f32 %v2769, %v2769
        %v2802 = vmul.f32 %v2770, %v2770
        %v2803 = vmul.f32 %v2771, %v2771
        %v2804 = vmul.f32 %v2772, %v2772
        %v2805 = vmul.f32 %v2773, %v2773
        %v2806 = vmul.f32 %v2774, %v2774
        %v2807 = vmul.f32 %v2775, %v2775
        %v2808 = vmul.f32 %v2776, %v2776
        %v2809 = vmul.f32 %v2777, %v2777
        %v2810 = vmul.f32 %v2778, %v2778
        %v2811 = vmul.f32 %v2779, %v2779
        %v2812 = vmul.f32 %v2780, %v2780
        %v2813 = vmul.f32 %v2781, %v2781
        %v2814 = vmul.f32 %v2782, %v2782
        %v2815 = vmul.f32 %v2783, %v2783
        %v2816 = vmul.f32 %v2784, %v2784
        %v2817 = vmul.f32 %v2785, %v2785
        %v2818 = vmul.f32 %v2786, %v2786
        %v2819 = vmul.f32 %v2787, %v2787
        %v2820 = vmul.f32 %v2788, %v2788
        %v2821 = vmul.f32 %v2789, %v2789
        %v2822 = vmul.f32 %v2790, %v2790
        %v2823 = vmul.f32 %v2791, %v2791
        %v2824 = vmul.f32 %v2792, %v2792
        %v2825 = vmul.f32 %v2793, %v2793
        %v2826 = vmul.f32 %v2794, %v2794
        %v2827 = vmul.f32 %v2795, %v2795
        %v2828 = vmul.f32 %v2796, %v2796
        %v2829 = vsel %vm2635, %v2797, 0.0
        %2830 = vadd.xlane.f32.xlu0 %v2829
        %v2831 = vpop.xlane.xlu0 %2830
        %v2832 = vsel %vm2635, %v2798, 0.0
        %2833 = vadd.xlane.f32.xlu0 %v2832
        %v2834 = vpop.xlane.xlu0 %2833
        %v2835 = vsel %vm2635, %v2799, 0.0
        %2836 = vadd.xlane.f32.xlu0 %v2835
        %v2837 = vpop.xlane.xlu0 %2836
        %v2838 = vsel %vm2635, %v2800, 0.0
        %2839 = vadd.xlane.f32.xlu0 %v2838
        %v2840 = vpop.xlane.xlu0 %2839
        %v2841 = vsel %vm2635, %v2801, 0.0
        %2842 = vadd.xlane.f32.xlu0 %v2841
        %v2843 = vpop.xlane.xlu0 %2842
        %v2844 = vsel %vm2635, %v2802, 0.0
        %2845 = vadd.xlane.f32.xlu0 %v2844
        %v2846 = vpop.xlane.xlu0 %2845
        %v2847 = vsel %vm2635, %v2803, 0.0
        %2848 = vadd.xlane.f32.xlu0 %v2847
        %v2849 = vpop.xlane.xlu0 %2848
        %v2850 = vsel %vm2635, %v2804, 0.0
        %2851 = vadd.xlane.f32.xlu0 %v2850
        %v2852 = vpop.xlane.xlu0 %2851
        %v2853 = vsel %vm2635, %v2805, 0.0
        %2854 = vadd.xlane.f32.xlu0 %v2853
        %v2855 = vpop.xlane.xlu0 %2854
        %v2856 = vsel %vm2635, %v2806, 0.0
        %2857 = vadd.xlane.f32.xlu0 %v2856
        %v2858 = vpop.xlane.xlu0 %2857
        %v2859 = vsel %vm2635, %v2807, 0.0
        %2860 = vadd.xlane.f32.xlu0 %v2859
        %v2861 = vpop.xlane.xlu0 %2860
        %v2862 = vsel %vm2635, %v2808, 0.0
        %2863 = vadd.xlane.f32.xlu0 %v2862
        %v2864 = vpop.xlane.xlu0 %2863
        %v2865 = vsel %vm2635, %v2809, 0.0
        %2866 = vadd.xlane.f32.xlu0 %v2865
        %v2867 = vpop.xlane.xlu0 %2866
        %v2868 = vsel %vm2635, %v2810, 0.0
        %2869 = vadd.xlane.f32.xlu0 %v2868
        %v2870 = vpop.xlane.xlu0 %2869
        %v2871 = vsel %vm2635, %v2811, 0.0
        %2872 = vadd.xlane.f32.xlu0 %v2871
        %v2873 = vpop.xlane.xlu0 %2872
        %v2874 = vsel %vm2635, %v2812, 0.0
        %2875 = vadd.xlane.f32.xlu0 %v2874
        %v2876 = vpop.xlane.xlu0 %2875
        %v2877 = vsel %vm2635, %v2813, 0.0
        %2878 = vadd.xlane.f32.xlu0 %v2877
        %v2879 = vpop.xlane.xlu0 %2878
        %v2880 = vsel %vm2635, %v2814, 0.0
        %2881 = vadd.xlane.f32.xlu0 %v2880
        %v2882 = vpop.xlane.xlu0 %2881
        %v2883 = vsel %vm2635, %v2815, 0.0
        %2884 = vadd.xlane.f32.xlu0 %v2883
        %v2885 = vpop.xlane.xlu0 %2884
        %v2886 = vsel %vm2635, %v2816, 0.0
        %2887 = vadd.xlane.f32.xlu0 %v2886
        %v2888 = vpop.xlane.xlu0 %2887
        %v2889 = vsel %vm2635, %v2817, 0.0
        %2890 = vadd.xlane.f32.xlu0 %v2889
        %v2891 = vpop.xlane.xlu0 %2890
        %v2892 = vsel %vm2635, %v2818, 0.0
        %2893 = vadd.xlane.f32.xlu0 %v2892
        %v2894 = vpop.xlane.xlu0 %2893
        %v2895 = vsel %vm2635, %v2819, 0.0
        %2896 = vadd.xlane.f32.xlu0 %v2895
        %v2897 = vpop.xlane.xlu0 %2896
        %v2898 = vsel %vm2635, %v2820, 0.0
        %2899 = vadd.xlane.f32.xlu0 %v2898
        %v2900 = vpop.xlane.xlu0 %2899
        %v2901 = vsel %vm2635, %v2821, 0.0
        %2902 = vadd.xlane.f32.xlu0 %v2901
        %v2903 = vpop.xlane.xlu0 %2902
        %v2904 = vsel %vm2635, %v2822, 0.0
        %2905 = vadd.xlane.f32.xlu0 %v2904
        %v2906 = vpop.xlane.xlu0 %2905
        %v2907 = vsel %vm2635, %v2823, 0.0
        %2908 = vadd.xlane.f32.xlu0 %v2907
        %v2909 = vpop.xlane.xlu0 %2908
        %v2910 = vsel %vm2635, %v2824, 0.0
        %2911 = vadd.xlane.f32.xlu0 %v2910
        %v2912 = vpop.xlane.xlu0 %2911
        %v2913 = vsel %vm2635, %v2825, 0.0
        %2914 = vadd.xlane.f32.xlu0 %v2913
        %v2915 = vpop.xlane.xlu0 %2914
        %v2916 = vsel %vm2635, %v2826, 0.0
        %2917 = vadd.xlane.f32.xlu0 %v2916
        %v2918 = vpop.xlane.xlu0 %2917
        %v2919 = vsel %vm2635, %v2827, 0.0
        %2920 = vadd.xlane.f32.xlu0 %v2919
        %v2921 = vpop.xlane.xlu0 %2920
        %v2922 = vsel %vm2635, %v2828, 0.0
        %2923 = vadd.xlane.f32.xlu0 %v2922
        %v2924 = vpop.xlane.xlu0 %2923
        %v2925 = vmul.f32 %v2831, %v2732
        %v2926 = vmul.f32 %v2834, %v2732
        %v2927 = vmul.f32 %v2837, %v2732
        %v2928 = vmul.f32 %v2840, %v2732
        %v2929 = vmul.f32 %v2843, %v2732
        %v2930 = vmul.f32 %v2846, %v2732
        %v2931 = vmul.f32 %v2849, %v2732
        %v2932 = vmul.f32 %v2852, %v2732
        %v2933 = vmul.f32 %v2855, %v2732
        %v2934 = vmul.f32 %v2858, %v2732
        %v2935 = vmul.f32 %v2861, %v2732
        %v2936 = vmul.f32 %v2864, %v2732
        %v2937 = vmul.f32 %v2867, %v2732
        %v2938 = vmul.f32 %v2870, %v2732
        %v2939 = vmul.f32 %v2873, %v2732
        %v2940 = vmul.f32 %v2876, %v2732
        %v2941 = vmul.f32 %v2879, %v2732
        %v2942 = vmul.f32 %v2882, %v2732
        %v2943 = vmul.f32 %v2885, %v2732
        %v2944 = vmul.f32 %v2888, %v2732
        %v2945 = vmul.f32 %v2891, %v2732
        %v2946 = vmul.f32 %v2894, %v2732
        %v2947 = vmul.f32 %v2897, %v2732
        %v2948 = vmul.f32 %v2900, %v2732
        %v2949 = vmul.f32 %v2903, %v2732
        %v2950 = vmul.f32 %v2906, %v2732
        %v2951 = vmul.f32 %v2909, %v2732
        %v2952 = vmul.f32 %v2912, %v2732
        %v2953 = vmul.f32 %v2915, %v2732
        %v2954 = vmul.f32 %v2918, %v2732
        %v2955 = vmul.f32 %v2921, %v2732
        %v2956 = vmul.f32 %v2924, %v2732
        %v2957 = vmax.f32 %v2925, 0.0
        %v2958 = vmax.f32 %v2926, 0.0
        %v2959 = vmax.f32 %v2927, 0.0
        %v2960 = vmax.f32 %v2928, 0.0
        %v2961 = vmax.f32 %v2929, 0.0
        %v2962 = vmax.f32 %v2930, 0.0
        %v2963 = vmax.f32 %v2931, 0.0
        %v2964 = vmax.f32 %v2932, 0.0
        %v2965 = vmax.f32 %v2933, 0.0
        %v2966 = vmax.f32 %v2934, 0.0
        %v2967 = vmax.f32 %v2935, 0.0
        %v2968 = vmax.f32 %v2936, 0.0
        %v2969 = vmax.f32 %v2937, 0.0
        %v2970 = vmax.f32 %v2938, 0.0
        %v2971 = vmax.f32 %v2939, 0.0
        %v2972 = vmax.f32 %v2940, 0.0
        %v2973 = vmax.f32 %v2941, 0.0
        %v2974 = vmax.f32 %v2942, 0.0
        %v2975 = vmax.f32 %v2943, 0.0
        %v2976 = vmax.f32 %v2944, 0.0
        %v2977 = vmax.f32 %v2945, 0.0
        %v2978 = vmax.f32 %v2946, 0.0
        %v2979 = vmax.f32 %v2947, 0.0
        %v2980 = vmax.f32 %v2948, 0.0
        %v2981 = vmax.f32 %v2949, 0.0
        %v2982 = vmax.f32 %v2950, 0.0
        %v2983 = vmax.f32 %v2951, 0.0
        %v2984 = vmax.f32 %v2952, 0.0
        %v2985 = vmax.f32 %v2953, 0.0
        %v2986 = vmax.f32 %v2954, 0.0
        %v2987 = vmax.f32 %v2955, 0.0
        %v2988 = vmax.f32 %v2956, 0.0
        %v2989 = vadd.f32 %v2957, 1e-05
        %v2990 = vadd.f32 %v2958, 1e-05
        %v2991 = vadd.f32 %v2959, 1e-05
        %v2992 = vadd.f32 %v2960, 1e-05
        %v2993 = vadd.f32 %v2961, 1e-05
        %v2994 = vadd.f32 %v2962, 1e-05
        %v2995 = vadd.f32 %v2963, 1e-05
        %v2996 = vadd.f32 %v2964, 1e-05
        %v2997 = vadd.f32 %v2965, 1e-05
        %v2998 = vadd.f32 %v2966, 1e-05
        %v2999 = vadd.f32 %v2967, 1e-05
        %v3000 = vadd.f32 %v2968, 1e-05
        %v3001 = vadd.f32 %v2969, 1e-05
        %v3002 = vadd.f32 %v2970, 1e-05
        %v3003 = vadd.f32 %v2971, 1e-05
        %v3004 = vadd.f32 %v2972, 1e-05
        %v3005 = vadd.f32 %v2973, 1e-05
        %v3006 = vadd.f32 %v2974, 1e-05
        %v3007 = vadd.f32 %v2975, 1e-05
        %v3008 = vadd.f32 %v2976, 1e-05
        %v3009 = vadd.f32 %v2977, 1e-05
        %v3010 = vadd.f32 %v2978, 1e-05
        %v3011 = vadd.f32 %v2979, 1e-05
        %v3012 = vadd.f32 %v2980, 1e-05
        %v3013 = vadd.f32 %v2981, 1e-05
        %v3014 = vadd.f32 %v2982, 1e-05
        %v3015 = vadd.f32 %v2983, 1e-05
        %v3016 = vadd.f32 %v2984, 1e-05
        %v3017 = vadd.f32 %v2985, 1e-05
        %v3018 = vadd.f32 %v2986, 1e-05
        %v3019 = vadd.f32 %v2987, 1e-05
        %v3020 = vadd.f32 %v2988, 1e-05
        %v3021 = vrsqrt.pop %v2989
        %v3022 = vrsqrt.pop %v2990
        %v3023 = vrsqrt.pop %v2991
        %v3024 = vrsqrt.pop %v2992
        %v3025 = vrsqrt.pop %v2993
        %v3026 = vrsqrt.pop %v2994
        %v3027 = vrsqrt.pop %v2995
        %v3028 = vrsqrt.pop %v2996
        %v3029 = vrsqrt.pop %v2997
        %v3030 = vrsqrt.pop %v2998
        %v3031 = vrsqrt.pop %v2999
        %v3032 = vrsqrt.pop %v3000
        %v3033 = vrsqrt.pop %v3001
        %v3034 = vrsqrt.pop %v3002
        %v3035 = vrsqrt.pop %v3003
        %v3036 = vrsqrt.pop %v3004
        %v3037 = vrsqrt.pop %v3005
        %v3038 = vrsqrt.pop %v3006
        %v3039 = vrsqrt.pop %v3007
        %v3040 = vrsqrt.pop %v3008
        %v3041 = vrsqrt.pop %v3009
        %v3042 = vrsqrt.pop %v3010
        %v3043 = vrsqrt.pop %v3011
        %v3044 = vrsqrt.pop %v3012
        %v3045 = vrsqrt.pop %v3013
        %v3046 = vrsqrt.pop %v3014
        %v3047 = vrsqrt.pop %v3015
        %v3048 = vrsqrt.pop %v3016
        %v3049 = vrsqrt.pop %v3017
        %v3050 = vrsqrt.pop %v3018
        %v3051 = vrsqrt.pop %v3019
        %v3052 = vrsqrt.pop %v3020
        %s3053 = smul.u32 %s17, 256
        %s3054 = scalar_lea.vmem %s2, %s3053
        %v3055 = vld [vmem:[%s3054] sm:$0xff]
        %v3056 = vld [vmem:[%s3054 + $0x8] sm:$0xff]
        %v3057 = vld [vmem:[%s3054 + $0x10] sm:$0xff]
        %v3058 = vld [vmem:[%s3054 + $0x18] sm:$0xff]
        %v3059 = vld [vmem:[%s3054 + $0x20] sm:$0xff]
        %v3060 = vld [vmem:[%s3054 + $0x28] sm:$0xff]
        %v3061 = vld [vmem:[%s3054 + $0x30] sm:$0xff]
        %v3062 = vld [vmem:[%s3054 + $0x38] sm:$0xff]
        %v3063 = vld [vmem:[%s3054 + $0x40] sm:$0xff]
        %v3064 = vld [vmem:[%s3054 + $0x48] sm:$0xff]
        %v3065 = vld [vmem:[%s3054 + $0x50] sm:$0xff]
        %v3066 = vld [vmem:[%s3054 + $0x58] sm:$0xff]
        %v3067 = vld [vmem:[%s3054 + $0x60] sm:$0xff]
        %v3068 = vld [vmem:[%s3054 + $0x68] sm:$0xff]
        %v3069 = vld [vmem:[%s3054 + $0x70] sm:$0xff]
        %v3070 = vld [vmem:[%s3054 + $0x78] sm:$0xff]
        %v3071 = vld [vmem:[%s3054 + $0x80] sm:$0xff]
        %v3072 = vld [vmem:[%s3054 + $0x88] sm:$0xff]
        %v3073 = vld [vmem:[%s3054 + $0x90] sm:$0xff]
        %v3074 = vld [vmem:[%s3054 + $0x98] sm:$0xff]
        %v3075 = vld [vmem:[%s3054 + $0xa0] sm:$0xff]
        %v3076 = vld [vmem:[%s3054 + $0xa8] sm:$0xff]
        %v3077 = vld [vmem:[%s3054 + $0xb0] sm:$0xff]
        %v3078 = vld [vmem:[%s3054 + $0xb8] sm:$0xff]
        %v3079 = vld [vmem:[%s3054 + $0xc0] sm:$0xff]
        %v3080 = vld [vmem:[%s3054 + $0xc8] sm:$0xff]
        %v3081 = vld [vmem:[%s3054 + $0xd0] sm:$0xff]
        %v3082 = vld [vmem:[%s3054 + $0xd8] sm:$0xff]
        %v3083 = vld [vmem:[%s3054 + $0xe0] sm:$0xff]
        %v3084 = vld [vmem:[%s3054 + $0xe8] sm:$0xff]
        %v3085 = vld [vmem:[%s3054 + $0xf0] sm:$0xff]
        %v3086 = vld [vmem:[%s3054 + $0xf8] sm:$0xff]
        %v3087 = vmul.f32 %v3055, %v3021
        %v3088 = vmul.f32 %v3056, %v3022
        %v3089 = vmul.f32 %v3057, %v3023
        %v3090 = vmul.f32 %v3058, %v3024
        %v3091 = vmul.f32 %v3059, %v3025
        %v3092 = vmul.f32 %v3060, %v3026
        %v3093 = vmul.f32 %v3061, %v3027
        %v3094 = vmul.f32 %v3062, %v3028
        %v3095 = vmul.f32 %v3063, %v3029
        %v3096 = vmul.f32 %v3064, %v3030
        %v3097 = vmul.f32 %v3065, %v3031
        %v3098 = vmul.f32 %v3066, %v3032
        %v3099 = vmul.f32 %v3067, %v3033
        %v3100 = vmul.f32 %v3068, %v3034
        %v3101 = vmul.f32 %v3069, %v3035
        %v3102 = vmul.f32 %v3070, %v3036
        %v3103 = vmul.f32 %v3071, %v3037
        %v3104 = vmul.f32 %v3072, %v3038
        %v3105 = vmul.f32 %v3073, %v3039
        %v3106 = vmul.f32 %v3074, %v3040
        %v3107 = vmul.f32 %v3075, %v3041
        %v3108 = vmul.f32 %v3076, %v3042
        %v3109 = vmul.f32 %v3077, %v3043
        %v3110 = vmul.f32 %v3078, %v3044
        %v3111 = vmul.f32 %v3079, %v3045
        %v3112 = vmul.f32 %v3080, %v3046
        %v3113 = vmul.f32 %v3081, %v3047
        %v3114 = vmul.f32 %v3082, %v3048
        %v3115 = vmul.f32 %v3083, %v3049
        %v3116 = vmul.f32 %v3084, %v3050
        %v3117 = vmul.f32 %v3085, %v3051
        %v3118 = vmul.f32 %v3086, %v3052
        %3120 = vset.pattern.permute.xlu0 0
        %3121 = vperm.xlu0 %3120, %v3087
        %v3122 = vpop.permute.xlu0 %3121
        %3125 = vset.pattern.permute.xlu0 0
        %3126 = vperm.xlu0 %3125, %v3088
        %v3127 = vpop.permute.xlu0 %3126
        %3130 = vset.pattern.permute.xlu0 0
        %3131 = vperm.xlu0 %3130, %v3089
        %v3132 = vpop.permute.xlu0 %3131
        %3135 = vset.pattern.permute.xlu0 0
        %3136 = vperm.xlu0 %3135, %v3090
        %v3137 = vpop.permute.xlu0 %3136
        %3140 = vset.pattern.permute.xlu0 0
        %3141 = vperm.xlu0 %3140, %v3091
        %v3142 = vpop.permute.xlu0 %3141
        %3145 = vset.pattern.permute.xlu0 0
        %3146 = vperm.xlu0 %3145, %v3092
        %v3147 = vpop.permute.xlu0 %3146
        %3150 = vset.pattern.permute.xlu0 0
        %3151 = vperm.xlu0 %3150, %v3093
        %v3152 = vpop.permute.xlu0 %3151
        %3155 = vset.pattern.permute.xlu0 0
        %3156 = vperm.xlu0 %3155, %v3094
        %v3157 = vpop.permute.xlu0 %3156
        %3160 = vset.pattern.permute.xlu0 0
        %3161 = vperm.xlu0 %3160, %v3095
        %v3162 = vpop.permute.xlu0 %3161
        %3165 = vset.pattern.permute.xlu0 0
        %3166 = vperm.xlu0 %3165, %v3096
        %v3167 = vpop.permute.xlu0 %3166
        %3170 = vset.pattern.permute.xlu0 0
        %3171 = vperm.xlu0 %3170, %v3097
        %v3172 = vpop.permute.xlu0 %3171
        %3175 = vset.pattern.permute.xlu0 0
        %3176 = vperm.xlu0 %3175, %v3098
        %v3177 = vpop.permute.xlu0 %3176
        %3180 = vset.pattern.permute.xlu0 0
        %3181 = vperm.xlu0 %3180, %v3099
        %v3182 = vpop.permute.xlu0 %3181
        %3185 = vset.pattern.permute.xlu0 0
        %3186 = vperm.xlu0 %3185, %v3100
        %v3187 = vpop.permute.xlu0 %3186
        %3190 = vset.pattern.permute.xlu0 0
        %3191 = vperm.xlu0 %3190, %v3101
        %v3192 = vpop.permute.xlu0 %3191
        %3195 = vset.pattern.permute.xlu0 0
        %3196 = vperm.xlu0 %3195, %v3102
        %v3197 = vpop.permute.xlu0 %3196
        %3200 = vset.pattern.permute.xlu0 0
        %3201 = vperm.xlu0 %3200, %v3103
        %v3202 = vpop.permute.xlu0 %3201
        %3205 = vset.pattern.permute.xlu0 0
        %3206 = vperm.xlu0 %3205, %v3104
        %v3207 = vpop.permute.xlu0 %3206
        %3210 = vset.pattern.permute.xlu0 0
        %3211 = vperm.xlu0 %3210, %v3105
        %v3212 = vpop.permute.xlu0 %3211
        %3215 = vset.pattern.permute.xlu0 0
        %3216 = vperm.xlu0 %3215, %v3106
        %v3217 = vpop.permute.xlu0 %3216
        %3220 = vset.pattern.permute.xlu0 0
        %3221 = vperm.xlu0 %3220, %v3107
        %v3222 = vpop.permute.xlu0 %3221
        %3225 = vset.pattern.permute.xlu0 0
        %3226 = vperm.xlu0 %3225, %v3108
        %v3227 = vpop.permute.xlu0 %3226
        %3230 = vset.pattern.permute.xlu0 0
        %3231 = vperm.xlu0 %3230, %v3109
        %v3232 = vpop.permute.xlu0 %3231
        %3235 = vset.pattern.permute.xlu0 0
        %3236 = vperm.xlu0 %3235, %v3110
        %v3237 = vpop.permute.xlu0 %3236
        %3240 = vset.pattern.permute.xlu0 0
        %3241 = vperm.xlu0 %3240, %v3111
        %v3242 = vpop.permute.xlu0 %3241
        %3245 = vset.pattern.permute.xlu0 0
        %3246 = vperm.xlu0 %3245, %v3112
        %v3247 = vpop.permute.xlu0 %3246
        %3250 = vset.pattern.permute.xlu0 0
        %3251 = vperm.xlu0 %3250, %v3113
        %v3252 = vpop.permute.xlu0 %3251
        %3255 = vset.pattern.permute.xlu0 0
        %3256 = vperm.xlu0 %3255, %v3114
        %v3257 = vpop.permute.xlu0 %3256
        %3260 = vset.pattern.permute.xlu0 0
        %3261 = vperm.xlu0 %3260, %v3115
        %v3262 = vpop.permute.xlu0 %3261
        %3265 = vset.pattern.permute.xlu0 0
        %3266 = vperm.xlu0 %3265, %v3116
        %v3267 = vpop.permute.xlu0 %3266
        %3270 = vset.pattern.permute.xlu0 0
        %3271 = vperm.xlu0 %3270, %v3117
        %v3272 = vpop.permute.xlu0 %3271
        %3275 = vset.pattern.permute.xlu0 0
        %3276 = vperm.xlu0 %3275, %v3118
        %v3277 = vpop.permute.xlu0 %3276
        %v3279 = vmul.f32 %v2765, %v3122
        %v3280 = vmul.f32 %v2766, %v3127
        %v3281 = vmul.f32 %v2767, %v3132
        %v3282 = vmul.f32 %v2768, %v3137
        %v3283 = vmul.f32 %v2769, %v3142
        %v3284 = vmul.f32 %v2770, %v3147
        %v3285 = vmul.f32 %v2771, %v3152
        %v3286 = vmul.f32 %v2772, %v3157
        %v3287 = vmul.f32 %v2773, %v3162
        %v3288 = vmul.f32 %v2774, %v3167
        %v3289 = vmul.f32 %v2775, %v3172
        %v3290 = vmul.f32 %v2776, %v3177
        %v3291 = vmul.f32 %v2777, %v3182
        %v3292 = vmul.f32 %v2778, %v3187
        %v3293 = vmul.f32 %v2779, %v3192
        %v3294 = vmul.f32 %v2780, %v3197
        %v3295 = vmul.f32 %v2781, %v3202
        %v3296 = vmul.f32 %v2782, %v3207
        %v3297 = vmul.f32 %v2783, %v3212
        %v3298 = vmul.f32 %v2784, %v3217
        %v3299 = vmul.f32 %v2785, %v3222
        %v3300 = vmul.f32 %v2786, %v3227
        %v3301 = vmul.f32 %v2787, %v3232
        %v3302 = vmul.f32 %v2788, %v3237
        %v3303 = vmul.f32 %v2789, %v3242
        %v3304 = vmul.f32 %v2790, %v3247
        %v3305 = vmul.f32 %v2791, %v3252
        %v3306 = vmul.f32 %v2792, %v3257
        %v3307 = vmul.f32 %v2793, %v3262
        %v3308 = vmul.f32 %v2794, %v3267
        %v3309 = vmul.f32 %v2795, %v3272
        %v3310 = vmul.f32 %v2796, %v3277
        %3312 = vset.pattern.permute.xlu0 1
        %3313 = vperm.xlu0 %3312, %v3055
        %v3314 = vpop.permute.xlu0 %3313
        %3317 = vset.pattern.permute.xlu0 1
        %3318 = vperm.xlu0 %3317, %v3056
        %v3319 = vpop.permute.xlu0 %3318
        %3322 = vset.pattern.permute.xlu0 1
        %3323 = vperm.xlu0 %3322, %v3057
        %v3324 = vpop.permute.xlu0 %3323
        %3327 = vset.pattern.permute.xlu0 1
        %3328 = vperm.xlu0 %3327, %v3058
        %v3329 = vpop.permute.xlu0 %3328
        %3332 = vset.pattern.permute.xlu0 1
        %3333 = vperm.xlu0 %3332, %v3059
        %v3334 = vpop.permute.xlu0 %3333
        %3337 = vset.pattern.permute.xlu0 1
        %3338 = vperm.xlu0 %3337, %v3060
        %v3339 = vpop.permute.xlu0 %3338
        %3342 = vset.pattern.permute.xlu0 1
        %3343 = vperm.xlu0 %3342, %v3061
        %v3344 = vpop.permute.xlu0 %3343
        %3347 = vset.pattern.permute.xlu0 1
        %3348 = vperm.xlu0 %3347, %v3062
        %v3349 = vpop.permute.xlu0 %3348
        %3352 = vset.pattern.permute.xlu0 1
        %3353 = vperm.xlu0 %3352, %v3063
        %v3354 = vpop.permute.xlu0 %3353
        %3357 = vset.pattern.permute.xlu0 1
        %3358 = vperm.xlu0 %3357, %v3064
        %v3359 = vpop.permute.xlu0 %3358
        %3362 = vset.pattern.permute.xlu0 1
        %3363 = vperm.xlu0 %3362, %v3065
        %v3364 = vpop.permute.xlu0 %3363
        %3367 = vset.pattern.permute.xlu0 1
        %3368 = vperm.xlu0 %3367, %v3066
        %v3369 = vpop.permute.xlu0 %3368
        %3372 = vset.pattern.permute.xlu0 1
        %3373 = vperm.xlu0 %3372, %v3067
        %v3374 = vpop.permute.xlu0 %3373
        %3377 = vset.pattern.permute.xlu0 1
        %3378 = vperm.xlu0 %3377, %v3068
        %v3379 = vpop.permute.xlu0 %3378
        %3382 = vset.pattern.permute.xlu0 1
        %3383 = vperm.xlu0 %3382, %v3069
        %v3384 = vpop.permute.xlu0 %3383
        %3387 = vset.pattern.permute.xlu0 1
        %3388 = vperm.xlu0 %3387, %v3070
        %v3389 = vpop.permute.xlu0 %3388
        %3392 = vset.pattern.permute.xlu0 1
        %3393 = vperm.xlu0 %3392, %v3071
        %v3394 = vpop.permute.xlu0 %3393
        %3397 = vset.pattern.permute.xlu0 1
        %3398 = vperm.xlu0 %3397, %v3072
        %v3399 = vpop.permute.xlu0 %3398
        %3402 = vset.pattern.permute.xlu0 1
        %3403 = vperm.xlu0 %3402, %v3073
        %v3404 = vpop.permute.xlu0 %3403
        %3407 = vset.pattern.permute.xlu0 1
        %3408 = vperm.xlu0 %3407, %v3074
        %v3409 = vpop.permute.xlu0 %3408
        %3412 = vset.pattern.permute.xlu0 1
        %3413 = vperm.xlu0 %3412, %v3075
        %v3414 = vpop.permute.xlu0 %3413
        %3417 = vset.pattern.permute.xlu0 1
        %3418 = vperm.xlu0 %3417, %v3076
        %v3419 = vpop.permute.xlu0 %3418
        %3422 = vset.pattern.permute.xlu0 1
        %3423 = vperm.xlu0 %3422, %v3077
        %v3424 = vpop.permute.xlu0 %3423
        %3427 = vset.pattern.permute.xlu0 1
        %3428 = vperm.xlu0 %3427, %v3078
        %v3429 = vpop.permute.xlu0 %3428
        %3432 = vset.pattern.permute.xlu0 1
        %3433 = vperm.xlu0 %3432, %v3079
        %v3434 = vpop.permute.xlu0 %3433
        %3437 = vset.pattern.permute.xlu0 1
        %3438 = vperm.xlu0 %3437, %v3080
        %v3439 = vpop.permute.xlu0 %3438
        %3442 = vset.pattern.permute.xlu0 1
        %3443 = vperm.xlu0 %3442, %v3081
        %v3444 = vpop.permute.xlu0 %3443
        %3447 = vset.pattern.permute.xlu0 1
        %3448 = vperm.xlu0 %3447, %v3082
        %v3449 = vpop.permute.xlu0 %3448
        %3452 = vset.pattern.permute.xlu0 1
        %3453 = vperm.xlu0 %3452, %v3083
        %v3454 = vpop.permute.xlu0 %3453
        %3457 = vset.pattern.permute.xlu0 1
        %3458 = vperm.xlu0 %3457, %v3084
        %v3459 = vpop.permute.xlu0 %3458
        %3462 = vset.pattern.permute.xlu0 1
        %3463 = vperm.xlu0 %3462, %v3085
        %v3464 = vpop.permute.xlu0 %3463
        %3467 = vset.pattern.permute.xlu0 1
        %3468 = vperm.xlu0 %3467, %v3086
        %v3469 = vpop.permute.xlu0 %3468
        %v3471 = vadd.f32 %v3279, %v3314
        %v3472 = vadd.f32 %v3280, %v3319
        %v3473 = vadd.f32 %v3281, %v3324
        %v3474 = vadd.f32 %v3282, %v3329
        %v3475 = vadd.f32 %v3283, %v3334
        %v3476 = vadd.f32 %v3284, %v3339
        %v3477 = vadd.f32 %v3285, %v3344
        %v3478 = vadd.f32 %v3286, %v3349
        %v3479 = vadd.f32 %v3287, %v3354
        %v3480 = vadd.f32 %v3288, %v3359
        %v3481 = vadd.f32 %v3289, %v3364
        %v3482 = vadd.f32 %v3290, %v3369
        %v3483 = vadd.f32 %v3291, %v3374
        %v3484 = vadd.f32 %v3292, %v3379
        %v3485 = vadd.f32 %v3293, %v3384
        %v3486 = vadd.f32 %v3294, %v3389
        %v3487 = vadd.f32 %v3295, %v3394
        %v3488 = vadd.f32 %v3296, %v3399
        %v3489 = vadd.f32 %v3297, %v3404
        %v3490 = vadd.f32 %v3298, %v3409
        %v3491 = vadd.f32 %v3299, %v3414
        %v3492 = vadd.f32 %v3300, %v3419
        %v3493 = vadd.f32 %v3301, %v3424
        %v3494 = vadd.f32 %v3302, %v3429
        %v3495 = vadd.f32 %v3303, %v3434
        %v3496 = vadd.f32 %v3304, %v3439
        %v3497 = vadd.f32 %v3305, %v3444
        %v3498 = vadd.f32 %v3306, %v3449
        %v3499 = vadd.f32 %v3307, %v3454
        %v3500 = vadd.f32 %v3308, %v3459
        %v3501 = vadd.f32 %v3309, %v3464
        %v3502 = vadd.f32 %v3310, %v3469
        %3503 = vst.msk [vmem:[%s192] sm:$0xff] %vm2635, %v3471
        %3504 = vst.msk [vmem:[%s192 + $0x8] sm:$0xff] %vm2635, %v3472
        %3505 = vst.msk [vmem:[%s192 + $0x10] sm:$0xff] %vm2635, %v3473
        %3506 = vst.msk [vmem:[%s192 + $0x18] sm:$0xff] %vm2635, %v3474
        %3507 = vst.msk [vmem:[%s192 + $0x20] sm:$0xff] %vm2635, %v3475
        %3508 = vst.msk [vmem:[%s192 + $0x28] sm:$0xff] %vm2635, %v3476
        %3509 = vst.msk [vmem:[%s192 + $0x30] sm:$0xff] %vm2635, %v3477
        %3510 = vst.msk [vmem:[%s192 + $0x38] sm:$0xff] %vm2635, %v3478
        %3511 = vst.msk [vmem:[%s192 + $0x40] sm:$0xff] %vm2635, %v3479
        %3512 = vst.msk [vmem:[%s192 + $0x48] sm:$0xff] %vm2635, %v3480
        %3513 = vst.msk [vmem:[%s192 + $0x50] sm:$0xff] %vm2635, %v3481
        %3514 = vst.msk [vmem:[%s192 + $0x58] sm:$0xff] %vm2635, %v3482
        %3515 = vst.msk [vmem:[%s192 + $0x60] sm:$0xff] %vm2635, %v3483
        %3516 = vst.msk [vmem:[%s192 + $0x68] sm:$0xff] %vm2635, %v3484
        %3517 = vst.msk [vmem:[%s192 + $0x70] sm:$0xff] %vm2635, %v3485
        %3518 = vst.msk [vmem:[%s192 + $0x78] sm:$0xff] %vm2635, %v3486
        %3519 = vst.msk [vmem:[%s192 + $0x80] sm:$0xff] %vm2635, %v3487
        %3520 = vst.msk [vmem:[%s192 + $0x88] sm:$0xff] %vm2635, %v3488
        %3521 = vst.msk [vmem:[%s192 + $0x90] sm:$0xff] %vm2635, %v3489
        %3522 = vst.msk [vmem:[%s192 + $0x98] sm:$0xff] %vm2635, %v3490
        %3523 = vst.msk [vmem:[%s192 + $0xa0] sm:$0xff] %vm2635, %v3491
        %3524 = vst.msk [vmem:[%s192 + $0xa8] sm:$0xff] %vm2635, %v3492
        %3525 = vst.msk [vmem:[%s192 + $0xb0] sm:$0xff] %vm2635, %v3493
        %3526 = vst.msk [vmem:[%s192 + $0xb8] sm:$0xff] %vm2635, %v3494
        %3527 = vst.msk [vmem:[%s192 + $0xc0] sm:$0xff] %vm2635, %v3495
        %3528 = vst.msk [vmem:[%s192 + $0xc8] sm:$0xff] %vm2635, %v3496
        %3529 = vst.msk [vmem:[%s192 + $0xd0] sm:$0xff] %vm2635, %v3497
        %3530 = vst.msk [vmem:[%s192 + $0xd8] sm:$0xff] %vm2635, %v3498
        %3531 = vst.msk [vmem:[%s192 + $0xe0] sm:$0xff] %vm2635, %v3499
        %3532 = vst.msk [vmem:[%s192 + $0xe8] sm:$0xff] %vm2635, %v3500
        %3533 = vst.msk [vmem:[%s192 + $0xf0] sm:$0xff] %vm2635, %v3501
        %3534 = vst.msk [vmem:[%s192 + $0xf8] sm:$0xff] %vm2635, %v3502
        %s3535 = smul.u32 32, %s17
        %p3536 = scmp.lt.s32.totalorder %s3535, 63
        %s3537 = scalar_select %p3536, %s3535, 63
        %s3538 = smul.addr %s3537, 8
        %s3539 = scalar_lea.vmem %s3, %s3538
        // Predicated region
        $region37: #{tpu_custom_call.1} parent=31 // pred_check
          %p3540 = pneg %p103
        $region38: #{tpu_custom_call.1} parent=31 // pred_check_branch
          %3542 = sbr.rel (%p3540) target = $region40
        $region39: #{tpu_custom_call.1} parent=31 // pred_region
          %s3543 = smul.u32 32, %s17
        $region40: #{tpu_custom_call.1} parent=31 // pred_fallthru
          _
      $region32: #{tpu_custom_call.1} parent=5 // pred_fallthru
        _
      %p3544 = scmp.le.s32.totalorder 2, %s12
      // Predicated region
      $region41: #{tpu_custom_call.1} parent=5 // pred_check
        %p3545 = pneg %p3544
      $region42: #{tpu_custom_call.1} parent=5 // pred_check_branch
        %3547 = sbr.rel (%p3545) target = $region44
      $region43: #{tpu_custom_call.1} parent=5 // pred_region
        %s3548 = ssub.s32 %s12, 2
        // Predicated region
        $region45: #{tpu_custom_call.1} parent=43 // pred_check
          %p3549 = pneg %p109
        $region46: #{tpu_custom_call.1} parent=43 // pred_check_branch
          %3551 = sbr.rel (%p3549) target = $region48
        $region47: #{tpu_custom_call.1} parent=43 // pred_region
          %s3552 = smul.u32 32, %s18
          %p3553 = scmp.lt.s32.totalorder %s3552, 63
          %s3554 = scalar_select %p3553, %s3552, 63
          %s3555 = smul.addr %s3554, 8
          %s3556 = scalar_lea.vmem %s3, %s3555
        $region48: #{tpu_custom_call.1} parent=43 // pred_fallthru
          _
      $region44: #{tpu_custom_call.1} parent=5 // pred_fallthru
        _
    $region6: #{tpu_custom_call.1} parent=1 // loop_footer
      %s16 = sadd.s32 1, %s12
    $region7: #{tpu_custom_call.1} parent=1 // loop_footer_branch
      %11 = sbr.rel target = $region3
    $region8: #{tpu_custom_call.1} parent=1 // loop_exit
      _
    %3557 = vsyncpa [#allocation3], 1
    %s3558 = scalar_lea.sflag [#allocation3], 1
    %3559 = vsyncpa %s3558, 1

</llo_original>
